<compile_context>
chip_gen: v5e
topology: v5e:2x2
jax: 0.10.0
libtpu: 0.0.40
codegen_flags: <defaults>
</compile_context>

<pallas_src>
import functools
import math

import jax
import jax.numpy as jnp
from jax.experimental import pallas as pl
from jax.experimental.pallas import tpu as pltpu


def _round_up(x, m):
    return ((x + m - 1) // m) * m


# ----------------------------------------------------------------------------
# Weight packing: torch (N, K) layout -> pre-transposed, padded, bf16
# ----------------------------------------------------------------------------

def pack_linear(w_out_in, bias):
    N, K = w_out_in.shape
    Kp = _round_up(K, 16)
    tk = min(Kp, 512)
    Kp = _round_up(Kp, tk)
    Np = _round_up(N, 128)
    tn = min(Np, 512)
    Np = _round_up(Np, tn)
    w = jnp.zeros((Kp, Np), jnp.bfloat16).at[:K, :N].set(
        w_out_in.T.astype(jnp.bfloat16))
    b = jnp.zeros((1, Np), jnp.float32).at[:, :N].set(
        bias.reshape(1, N).astype(jnp.float32))
    return {"w": w, "b": b, "n": N, "k": K}


# ----------------------------------------------------------------------------
# Tiled matmul kernels: plain (+bias, +relu) and fused (+bias +residual +LN)
# ----------------------------------------------------------------------------

def _matmul_kernel(x_ref, w_ref, b_ref, o_ref, acc_ref, *, relu):
    @pl.when(pl.program_id(2) == 0)
    def _():
        acc_ref[...] = jnp.zeros_like(acc_ref)

    acc_ref[...] += jnp.dot(x_ref[...], w_ref[...],
                            preferred_element_type=jnp.float32)

    @pl.when(pl.program_id(2) == pl.num_programs(2) - 1)
    def _():
        y = acc_ref[...] + b_ref[...]
        if relu:
            y = jnp.maximum(y, 0.0)
        o_ref[...] = y.astype(o_ref.dtype)


def _matmul_ln_kernel(x_ref, w_ref, b_ref, r_ref, g_ref, beta_ref, o_ref,
                      acc_ref, *, n_valid, eps):
    """y = LayerNorm((x @ W + b) + residual); whole feature dim in one tile."""
    @pl.when(pl.program_id(1) == 0)
    def _():
        acc_ref[...] = jnp.zeros_like(acc_ref)

    acc_ref[...] += jnp.dot(x_ref[...], w_ref[...],
                            preferred_element_type=jnp.float32)

    @pl.when(pl.program_id(1) == pl.num_programs(1) - 1)
    def _():
        acc = acc_ref[...]
        bias = b_ref[...]
        if n_valid < acc.shape[1]:           # drop zero-padded output columns
            acc = acc[:, :n_valid]
            bias = bias[:, :n_valid]
        x = acc + bias + r_ref[...].astype(jnp.float32)
        mu = jnp.mean(x, axis=-1, keepdims=True)
        var = jnp.mean(jnp.square(x - mu), axis=-1, keepdims=True)
        y = (x - mu) * jax.lax.rsqrt(var + eps) * g_ref[...] + beta_ref[...]
        o_ref[...] = y.astype(o_ref.dtype)


def pallas_linear(x2d, lin, *, relu=False, ln=None,
                  out_dtype=jnp.bfloat16, eps=1e-5):
    """x2d: (M, K) -> (M, N). ln=(residual2d, gamma, beta) fuses add+LayerNorm
    into the matmul epilogue (requires the full output dim in one tile)."""
    M, K = x2d.shape
    w, b, N = lin["w"], lin["b"], lin["n"]
    Kp, Np = w.shape

    Mp = _round_up(M, 8)
    if Mp <= 512:
        tm = Mp
    else:
        tm = 512
        Mp = _round_up(Mp, tm)
    tk = Kp if Kp <= 512 else 512
    tn = Np if Np <= 512 else 512

    x = x2d if x2d.dtype == jnp.bfloat16 else x2d.astype(jnp.bfloat16)
    if (Mp, Kp) != (M, K):
        x = jnp.pad(x, ((0, Mp - M), (0, Kp - K)))

    if ln is not None and Np == tn:
        res2d, g, beta = ln
        res = res2d if res2d.dtype == jnp.bfloat16 else res2d.astype(jnp.bfloat16)
        if Mp != M:
            res = jnp.pad(res, ((0, Mp - M), (0, 0)))
        g2 = g.reshape(1, N).astype(jnp.float32)
        be2 = beta.reshape(1, N).astype(jnp.float32)
        out = pl.pallas_call(
            functools.partial(_matmul_ln_kernel, n_valid=N, eps=eps),
            out_shape=jax.ShapeDtypeStruct((Mp, N), out_dtype),
            grid=(Mp // tm, Kp // tk),
            in_specs=[
                pl.BlockSpec((tm, tk), lambda i, k: (i, k)),
                pl.BlockSpec((tk, tn), lambda i, k: (k, 0)),
                pl.BlockSpec((1, tn), lambda i, k: (0, 0)),
                pl.BlockSpec((tm, N), lambda i, k: (i, 0)),
                pl.BlockSpec((1, N), lambda i, k: (0, 0)),
                pl.BlockSpec((1, N), lambda i, k: (0, 0)),
            ],
            out_specs=pl.BlockSpec((tm, N), lambda i, k: (i, 0)),
            scratch_shapes=[pltpu.VMEM((tm, tn), jnp.float32)],
            compiler_params=pltpu.CompilerParams(
                dimension_semantics=("parallel", "arbitrary"),
                vmem_limit_bytes=32 * 1024 * 1024),
        )(x, w, b, res, g2, be2)
        return out[:M] if Mp != M else out

    out = pl.pallas_call(
        functools.partial(_matmul_kernel, relu=relu),
        out_shape=jax.ShapeDtypeStruct((Mp, Np), out_dtype),
        grid=(Mp // tm, Np // tn, Kp // tk),
        in_specs=[
            pl.BlockSpec((tm, tk), lambda i, j, k: (i, k)),
            pl.BlockSpec((tk, tn), lambda i, j, k: (k, j)),
            pl.BlockSpec((1, tn), lambda i, j, k: (0, j)),
        ],
        out_specs=pl.BlockSpec((tm, tn), lambda i, j, k: (i, j)),
        scratch_shapes=[pltpu.VMEM((tm, tn), jnp.float32)],
        compiler_params=pltpu.CompilerParams(
            dimension_semantics=("parallel", "parallel", "arbitrary"),
            vmem_limit_bytes=32 * 1024 * 1024),
    )(x, w, b)
    if (Mp, Np) != (M, N):
        out = out[:M, :N]
    if ln is not None:  # fallback when the output dim spans several tiles
        res2d, g, beta = ln
        out = pallas_layernorm(out, res2d, g, beta, eps=eps, out_dtype=out_dtype)
    return out


# ----------------------------------------------------------------------------
# Standalone (residual +) LayerNorm kernel (final encoder/decoder norms)
# ----------------------------------------------------------------------------

def _ln_kernel(*refs, eps, has_res):
    if has_res:
        x_ref, r_ref, w_ref, b_ref, o_ref = refs
        x = x_ref[...].astype(jnp.float32) + r_ref[...].astype(jnp.float32)
    else:
        x_ref, w_ref, b_ref, o_ref = refs
        x = x_ref[...].astype(jnp.float32)
    mu = jnp.mean(x, axis=-1, keepdims=True)
    var = jnp.mean(jnp.square(x - mu), axis=-1, keepdims=True)
    o_ref[...] = ((x - mu) * jax.lax.rsqrt(var + eps) * w_ref[...]
                  + b_ref[...]).astype(o_ref.dtype)


def pallas_layernorm(x2d, res2d, weight, bias, eps=1e-5, out_dtype=jnp.bfloat16):
    M, E = x2d.shape
    Mp = _round_up(M, 8)
    if Mp <= 512:
        tm = Mp
    else:
        tm = 512
        Mp = _round_up(Mp, tm)
    has_res = res2d is not None

    def _pad_rows(a):
        return jnp.pad(a, ((0, Mp - M), (0, 0))) if Mp != M else a

    args = [_pad_rows(x2d)]
    in_specs = [pl.BlockSpec((tm, E), lambda i: (i, 0))]
    if has_res:
        args.append(_pad_rows(res2d))
        in_specs.append(pl.BlockSpec((tm, E), lambda i: (i, 0)))
    args.append(weight.reshape(1, E).astype(jnp.float32))
    args.append(bias.reshape(1, E).astype(jnp.float32))
    in_specs += [pl.BlockSpec((1, E), lambda i: (0, 0))] * 2

    out = pl.pallas_call(
        functools.partial(_ln_kernel, eps=eps, has_res=has_res),
        out_shape=jax.ShapeDtypeStruct((Mp, E), out_dtype),
        grid=(Mp // tm,),
        in_specs=in_specs,
        out_specs=pl.BlockSpec((tm, E), lambda i: (i, 0)),
        compiler_params=pltpu.CompilerParams(
            dimension_semantics=("parallel",)),
    )(*args)
    return out[:M] if Mp != M else out


# ----------------------------------------------------------------------------
# Fused attention: grid over batch, heads split in-kernel, lane-dense output
# ----------------------------------------------------------------------------

def _attention_kernel(*refs, num_heads, mask_type):
    if mask_type == "padding":
        q_ref, k_ref, v_ref, pad_ref, o_ref = refs
        pad_bias = pad_ref[0]                      # (1, Tk) f32
    else:
        q_ref, k_ref, v_ref, o_ref = refs
        pad_bias = None
    q = q_ref[0]                                   # (Tq, E) bf16
    k = k_ref[0]                                   # (Tk, E) bf16
    v = v_ref[0]                                   # (Tk, E) bf16
    Tq, E = q.shape
    Tk = k.shape[0]
    dh = E // num_heads

    if mask_type == "causal":
        row = jax.lax.broadcasted_iota(jnp.int32, (Tq, Tk), 0)
        col = jax.lax.broadcasted_iota(jnp.int32, (Tq, Tk), 1)
        causal = jnp.where(col > row, -1e9, 0.0).astype(jnp.float32)

    outs = []
    for h in range(num_heads):                     # static unroll over heads
        sl = slice(h * dh, (h + 1) * dh)
        qh, kh, vh = q[:, sl], k[:, sl], v[:, sl]
        # scale 1/sqrt(dh) is pre-folded into the packed Q weights
        s = jnp.einsum("qd,kd->qk", qh, kh,
                       preferred_element_type=jnp.float32)
        if mask_type == "padding":
            s = s + pad_bias
        elif mask_type == "causal":
            s = s + causal
        m = jnp.max(s, axis=-1, keepdims=True)
        p = jnp.exp(s - m)
        denom = jnp.sum(p, axis=-1, keepdims=True)
        oh = jnp.einsum("qk,kd->qd", p.astype(v.dtype), vh,
                        preferred_element_type=jnp.float32)
        outs.append(oh * pl.reciprocal(denom, approx=True))
    o_ref[0] = jnp.concatenate(outs, axis=-1).astype(o_ref.dtype)


def pallas_attention(q, k, v, *, num_heads, mask_type, pad_bias=None):
    """q: (N, Tq, E), k/v: (N, Tk, E) bf16; pad_bias: (N, 1, Tk) f32 or None."""
    Nb, Tq, E = q.shape
    Tk = k.shape[1]
    in_specs = [
        pl.BlockSpec((1, Tq, E), lambda b: (b, 0, 0)),
        pl.BlockSpec((1, Tk, E), lambda b: (b, 0, 0)),
        pl.BlockSpec((1, Tk, E), lambda b: (b, 0, 0)),
    ]
    args = [q, k, v]
    if mask_type == "padding":
        in_specs.append(pl.BlockSpec((1, 1, Tk), lambda b: (b, 0, 0)))
        args.append(pad_bias)
    return pl.pallas_call(
        functools.partial(_attention_kernel, num_heads=num_heads,
                          mask_type=mask_type),
        out_shape=jax.ShapeDtypeStruct((Nb, Tq, E), jnp.bfloat16),
        grid=(Nb,),
        in_specs=in_specs,
        out_specs=pl.BlockSpec((1, Tq, E), lambda b: (b, 0, 0)),
        compiler_params=pltpu.CompilerParams(
            dimension_semantics=("parallel",)),
    )(*args)


# ----------------------------------------------------------------------------
# Model pieces (batch-first internally; glue in JAX, compute in Pallas)
# ----------------------------------------------------------------------------

def mha_block(x, kv, p, num_heads, mask_type, pad_bias, ln_w, ln_b):
    """nn.MultiheadAttention + residual + LayerNorm. x: (N, Tq, E);
    kv=None -> self-attention (fused QKV); else cross-attention (fused KV)."""
    Nb, Tq, E = x.shape
    x2d = x.reshape(Nb * Tq, E)
    if kv is None:
        Tk = Tq
        qkv = pallas_linear(x2d, p["qkv"])                     # (M, 3E) bf16
        q3 = qkv[:, :E].reshape(Nb, Tq, E)
        k3 = qkv[:, E:2 * E].reshape(Nb, Tk, E)
        v3 = qkv[:, 2 * E:].reshape(Nb, Tk, E)
    else:
        Tk = kv.shape[1]
        q3 = pallas_linear(x2d, p["q"]).reshape(Nb, Tq, E)
        kvp = pallas_linear(kv.reshape(Nb * Tk, E), p["kv"])   # (M, 2E) bf16
        k3 = kvp[:, :E].reshape(Nb, Tk, E)
        v3 = kvp[:, E:].reshape(Nb, Tk, E)

    o = pallas_attention(q3, k3, v3, num_heads=num_heads,
                         mask_type=mask_type, pad_bias=pad_bias)
    # out-projection with residual + LayerNorm fused into the matmul epilogue
    y = pallas_linear(o.reshape(Nb * Tq, E), p["out"], ln=(x2d, ln_w, ln_b))
    return y.reshape(Nb, Tq, E)


def ffn_block(x, p, ln_w, ln_b):
    Nb, T, E = x.shape
    x2d = x.reshape(Nb * T, E)
    h = pallas_linear(x2d, p["lin1"], relu=True)
    y = pallas_linear(h, p["lin2"], ln=(x2d, ln_w, ln_b))
    return y.reshape(Nb, T, E)


def encoder_layer(x, p, num_heads, pad_bias):
    x = mha_block(x, None, p["sa"], num_heads, "padding", pad_bias,
                  p["ln1_w"], p["ln1_b"])
    x = ffn_block(x, p, p["ln2_w"], p["ln2_b"])
    return x


def decoder_layer(x, memory, p, num_heads):
    x = mha_block(x, None, p["sa"], num_heads, "causal", None,
                  p["ln1_w"], p["ln1_b"])
    # memory_key_padding_mask is None in the reference forward -> no mask here
    x = mha_block(x, memory, p["ca"], num_heads, "none", None,
                  p["ln2_w"], p["ln2_b"])
    x = ffn_block(x, p, p["ln3_w"], p["ln3_b"])
    return x


def transformer_forward(params, src, trg, *, num_heads, src_pad_idx):
    """src: (S, N) int32, trg: (T, N) int32 -> (T, N, trg_vocab) f32."""
    S, N = src.shape
    T, _ = trg.shape
    E = params["src_word_emb"].shape[1]

    # batch-first token tensors (no per-layer transposes needed afterwards)
    srcb, trgb = src.T, trg.T                                  # (N, S), (N, T)
    spos = jnp.broadcast_to(jnp.arange(S)[None, :], (N, S))
    tpos = jnp.broadcast_to(jnp.arange(T)[None, :], (N, T))
    x = (jnp.take(params["src_word_emb"], srcb, axis=0)
         + jnp.take(params["src_pos_emb"], spos, axis=0)).astype(jnp.bfloat16)
    y = (jnp.take(params["trg_word_emb"], trgb, axis=0)
         + jnp.take(params["trg_pos_emb"], tpos, axis=0)).astype(jnp.bfloat16)
    # dropout == identity (eval mode)

    # additive key-padding bias, one row per batch: (N, 1, S); -1e9 avoids NaN
    pad_bias = jnp.where(srcb == src_pad_idx, -1e9, 0.0).astype(
        jnp.float32)[:, None, :]

    for lp in params["enc_layers"]:
        x = encoder_layer(x, lp, num_heads, pad_bias)
    memory = pallas_layernorm(x.reshape(N * S, E), None,
                              params["enc_norm_w"],
                              params["enc_norm_b"]).reshape(N, S, E)

    for lp in params["dec_layers"]:
        y = decoder_layer(y, memory, lp, num_heads)
    y2d = pallas_layernorm(y.reshape(N * T, E), None,
                           params["dec_norm_w"], params["dec_norm_b"])

    out = pallas_linear(y2d, params["fc_out"], out_dtype=jnp.float32)
    V = params["fc_out"]["n"]
    return out.reshape(N, T, V).transpose(1, 0, 2)              # (T, N, V)


# ----------------------------------------------------------------------------
# Deterministic parameter init (shapes follow nn.Transformer / nn.Linear)
# ----------------------------------------------------------------------------

class _KeyGen:
    def __init__(self, key):
        self._key = key

    def __call__(self):
        self._key, sub = jax.random.split(self._key)
        return sub


def _mha_params(kg, E, num_heads, self_attn):
    scale = 1.0 / math.sqrt(E // num_heads)
    in_w = 0.05 * jax.random.normal(kg(), (3 * E, E), jnp.float32)
    in_b = jnp.zeros((3 * E,), jnp.float32)
    in_w = in_w.at[:E].multiply(scale)      # fold 1/sqrt(dh) into Q projection
    in_b = in_b.at[:E].multiply(scale)
    out_w = 0.05 * jax.random.normal(kg(), (E, E), jnp.float32)
    out_b = jnp.zeros((E,), jnp.float32)
    p = {"out": pack_linear(out_w, out_b)}
    if self_attn:
        p["qkv"] = pack_linear(in_w, in_b)
    else:
        p["q"] = pack_linear(in_w[:E], in_b[:E])
        p["kv"] = pack_linear(in_w[E:], in_b[E:])
    return p


def _enc_layer_params(kg, E, H, FF):
    return {
        "sa": _mha_params(kg, E, H, True),
        "lin1": pack_linear(0.05 * jax.random.normal(kg(), (FF, E), jnp.float32),
                            jnp.zeros((FF,), jnp.float32)),
        "lin2": pack_linear(0.05 * jax.random.normal(kg(), (E, FF), jnp.float32),
                            jnp.zeros((E,), jnp.float32)),
        "ln1_w": jnp.ones((E,), jnp.float32), "ln1_b": jnp.zeros((E,), jnp.float32),
        "ln2_w": jnp.ones((E,), jnp.float32), "ln2_b": jnp.zeros((E,), jnp.float32),
    }


def _dec_layer_params(kg, E, H, FF):
    p = _enc_layer_params(kg, E, H, FF)
    p["ca"] = _mha_params(kg, E, H, False)
    p["ln3_w"] = jnp.ones((E,), jnp.float32)
    p["ln3_b"] = jnp.zeros((E,), jnp.float32)
    return p


def init_params(key, *, E, H, num_enc, num_dec, FF, src_vocab, trg_vocab, max_len):
    kg = _KeyGen(key)
    return {
        "src_word_emb": 0.1 * jax.random.normal(kg(), (src_vocab, E), jnp.float32),
        "src_pos_emb": 0.1 * jax.random.normal(kg(), (max_len, E), jnp.float32),
        "trg_word_emb": 0.1 * jax.random.normal(kg(), (trg_vocab, E), jnp.float32),
        "trg_pos_emb": 0.1 * jax.random.normal(kg(), (max_len, E), jnp.float32),
        "enc_layers": [_enc_layer_params(kg, E, H, FF) for _ in range(num_enc)],
        "dec_layers": [_dec_layer_params(kg, E, H, FF) for _ in range(num_dec)],
        "enc_norm_w": jnp.ones((E,), jnp.float32), "enc_norm_b": jnp.zeros((E,), jnp.float32),
        "dec_norm_w": jnp.ones((E,), jnp.float32), "dec_norm_b": jnp.zeros((E,), jnp.float32),
        "fc_out": pack_linear(0.05 * jax.random.normal(kg(), (trg_vocab, E), jnp.float32),
                              jnp.zeros((trg_vocab,), jnp.float32)),
    }


# ----------------------------------------------------------------------------
# Main
# ----------------------------------------------------------------------------

if __name__ == "__main__":
    EMBED, HEADS, N_ENC, N_DEC, FFN = 32, 4, 2, 2, 64
    SRC_VOCAB, TRG_VOCAB, MAX_LEN, SRC_PAD_IDX = 13, 11, 16, 0
    S, T, N = 8, 6, 2  # src seq len, trg seq len, batch

    root = jax.random.PRNGKey(0)
    k_params, k_src, k_trg = jax.random.split(root, 3)

    params = init_params(k_params, E=EMBED, H=HEADS, num_enc=N_ENC,
                         num_dec=N_DEC, FF=FFN, src_vocab=SRC_VOCAB,
                         trg_vocab=TRG_VOCAB, max_len=MAX_LEN)

    src = jax.random.randint(k_src, (S, N), 1, SRC_VOCAB, dtype=jnp.int32)
    src = src.at[-2:, 0].set(SRC_PAD_IDX)  # some padding in batch 0
    trg = jax.random.randint(k_trg, (T, N), 0, TRG_VOCAB, dtype=jnp.int32)

    fwd = jax.jit(lambda s, t: transformer_forward(
        params, s, t, num_heads=HEADS, src_pad_idx=SRC_PAD_IDX))

    out = jax.block_until_ready(fwd(src, trg))

    assert out.shape == (T, N, TRG_VOCAB), out.shape
    assert bool(jnp.all(jnp.isfinite(out)))
    print("KERNEL_OK")
</pallas_src>

<mosaic_0001>
module attributes {stable_mosaic.version = 11 : i64} {
  func.func @_matmul_kernel(%arg0: i32, %arg1: i32, %arg2: i32, %arg3: memref<16x32xbf16, #tpu.memory_space<vmem>>, %arg4: memref<32x128xbf16, #tpu.memory_space<vmem>>, %arg5: memref<1x128xf32, #tpu.memory_space<vmem>>, %arg6: memref<16x128xbf16, #tpu.memory_space<vmem>>, %arg7: memref<16x128xf32, #tpu.memory_space<vmem>>) attributes {dimension_semantics = [#tpu.dimension_semantics<parallel>, #tpu.dimension_semantics<parallel>, #tpu.dimension_semantics<arbitrary>], iteration_bounds = array<i64: 1, 1, 1>, scalar_prefetch = 0 : i64, scratch_operands = 1 : i64, tpu.core_type = #tpu.core_type<tc>, window_params = [{transform_indices = @transform_0, window_bounds = array<i64: 16, 32>}, {transform_indices = @transform_1, window_bounds = array<i64: 32, 128>}, {transform_indices = @transform_2, window_bounds = array<i64: 1, 128>}, {transform_indices = @transform_3, window_bounds = array<i64: 16, 128>}]} {
    %c0_i32 = arith.constant 0 : i32
    %0 = arith.cmpi eq, %arg2, %c0_i32 : i32
    %1 = arith.extui %0 : i1 to i32
    %c0_i32_0 = arith.constant 0 : i32
    %2 = arith.cmpi ne, %1, %c0_i32_0 : i32
    scf.if %2 {
      %cst_10 = arith.constant 0.000000e+00 : f32
      %12 = vector.broadcast %cst_10 : f32 to vector<16x128xf32>
      %c0_11 = arith.constant 0 : index
      %c0_12 = arith.constant 0 : index
      %13 = vector.load %arg7[%c0_11, %c0_12] : memref<16x128xf32, #tpu.memory_space<vmem>>, vector<16x128xf32>
      tpu.vector_store %arg7[%c0_11, %c0_12], %12 {strides = array<i32>} : memref<16x128xf32, #tpu.memory_space<vmem>>, vector<16x128xf32>,
    } else {
    }
    %c0 = arith.constant 0 : index
    %c0_1 = arith.constant 0 : index
    %3 = vector.load %arg7[%c0, %c0_1] : memref<16x128xf32, #tpu.memory_space<vmem>>, vector<16x128xf32>
    %c0_2 = arith.constant 0 : index
    %c0_3 = arith.constant 0 : index
    %4 = vector.load %arg3[%c0_2, %c0_3] : memref<16x32xbf16, #tpu.memory_space<vmem>>, vector<16x32xbf16>
    %c0_4 = arith.constant 0 : index
    %c0_5 = arith.constant 0 : index
    %5 = vector.load %arg4[%c0_4, %c0_5] : memref<32x128xbf16, #tpu.memory_space<vmem>>, vector<32x128xbf16>
    %cst = arith.constant dense<0.000000e+00> : vector<16x128xf32>
    %6 = tpu.matmul %4, %5, %cst {dimension_numbers = #tpu.dot_dimension_numbers<[1], [0], [0], [1], [0, 0, 1, 1], [], []>} : vector<16x32xbf16>, vector<32x128xbf16>, vector<16x128xf32> -> vector<16x128xf32>
    %7 = arith.addf %3, %6 : vector<16x128xf32>
    %c0_6 = arith.constant 0 : index
    %c0_7 = arith.constant 0 : index
    %8 = vector.load %arg7[%c0_6, %c0_7] : memref<16x128xf32, #tpu.memory_space<vmem>>, vector<16x128xf32>
    tpu.vector_store %arg7[%c0_6, %c0_7], %7 {strides = array<i32>} : memref<16x128xf32, #tpu.memory_space<vmem>>, vector<16x128xf32>,
    %c0_i32_8 = arith.constant 0 : i32
    %9 = arith.cmpi eq, %arg2, %c0_i32_8 : i32
    %10 = arith.extui %9 : i1 to i32
    %c0_i32_9 = arith.constant 0 : i32
    %11 = arith.cmpi ne, %10, %c0_i32_9 : i32
    scf.if %11 {
      %c0_10 = arith.constant 0 : index
      %c0_11 = arith.constant 0 : index
      %12 = vector.load %arg7[%c0_10, %c0_11] : memref<16x128xf32, #tpu.memory_space<vmem>>, vector<16x128xf32>
      %c0_12 = arith.constant 0 : index
      %c0_13 = arith.constant 0 : index
      %13 = vector.load %arg5[%c0_12, %c0_13] : memref<1x128xf32, #tpu.memory_space<vmem>>, vector<1x128xf32>
      %14 = vector.broadcast %13 : vector<1x128xf32> to vector<16x128xf32>
      %15 = arith.addf %12, %14 : vector<16x128xf32>
      %16 = arith.truncf %15 : vector<16x128xf32> to vector<16x128xbf16>
      %c0_14 = arith.constant 0 : index
      %c0_15 = arith.constant 0 : index
      %17 = vector.load %arg6[%c0_14, %c0_15] : memref<16x128xbf16, #tpu.memory_space<vmem>>, vector<16x128xbf16>
      tpu.vector_store %arg6[%c0_14, %c0_15], %16 {strides = array<i32>} : memref<16x128xbf16, #tpu.memory_space<vmem>>, vector<16x128xbf16>,
    } else {
    }
    return
  }
  func.func @transform_0(%arg0: i32, %arg1: i32, %arg2: i32) -> (i32, i32) {
    %c0_i32 = arith.constant 0 : i32
    return %arg0, %arg2 : i32, i32
  }
  func.func @transform_1(%arg0: i32, %arg1: i32, %arg2: i32) -> (i32, i32) {
    %c0_i32 = arith.constant 0 : i32
    return %arg2, %arg1 : i32, i32
  }
  func.func @transform_2(%arg0: i32, %arg1: i32, %arg2: i32) -> (i32, i32) {
    %c0_i32 = arith.constant 0 : i32
    %c0_i32_0 = arith.constant 0 : i32
    return %c0_i32, %arg1 : i32, i32
  }
  func.func @transform_3(%arg0: i32, %arg1: i32, %arg2: i32) -> (i32, i32) {
    %c0_i32 = arith.constant 0 : i32
    return %arg0, %arg1 : i32, i32
  }
}

module attributes {stable_mosaic.version = 11 : i64} {
  func.func @_attention_kernel(%arg0: i32, %arg1: memref<1x6x32xbf16, #tpu.memory_space<vmem>>, %arg2: memref<1x6x32xbf16, #tpu.memory_space<vmem>>, %arg3: memref<1x6x32xbf16, #tpu.memory_space<vmem>>, %arg4: memref<1x6x32xbf16, #tpu.memory_space<vmem>>) attributes {dimension_semantics = [#tpu.dimension_semantics<parallel>], iteration_bounds = array<i64: 2>, scalar_prefetch = 0 : i64, scratch_operands = 0 : i64, tpu.core_type = #tpu.core_type<tc>, window_params = [{transform_indices = @transform_0, window_bounds = array<i64: 1, 6, 32>}, {transform_indices = @transform_1, window_bounds = array<i64: 1, 6, 32>}, {transform_indices = @transform_2, window_bounds = array<i64: 1, 6, 32>}, {transform_indices = @transform_3, window_bounds = array<i64: 1, 6, 32>}]} {
    %c0 = arith.constant 0 : index
    %c0_0 = arith.constant 0 : index
    %c0_1 = arith.constant 0 : index
    %0 = vector.load %arg1[%c0, %c0_0, %c0_1] : memref<1x6x32xbf16, #tpu.memory_space<vmem>>, vector<1x6x32xbf16>
    %1 = vector.shape_cast %0 : vector<1x6x32xbf16> to vector<6x32xbf16>
    %c0_2 = arith.constant 0 : index
    %c0_3 = arith.constant 0 : index
    %c0_4 = arith.constant 0 : index
    %2 = vector.load %arg2[%c0_2, %c0_3, %c0_4] : memref<1x6x32xbf16, #tpu.memory_space<vmem>>, vector<1x6x32xbf16>
    %3 = vector.shape_cast %2 : vector<1x6x32xbf16> to vector<6x32xbf16>
    %c0_5 = arith.constant 0 : index
    %c0_6 = arith.constant 0 : index
    %c0_7 = arith.constant 0 : index
    %4 = vector.load %arg3[%c0_5, %c0_6, %c0_7] : memref<1x6x32xbf16, #tpu.memory_space<vmem>>, vector<1x6x32xbf16>
    %5 = vector.shape_cast %4 : vector<1x6x32xbf16> to vector<6x32xbf16>
    %6 = tpu.iota {dimensions = array<i32: 0>} : vector<6x6xi32>
    %7 = tpu.iota {dimensions = array<i32: 1>} : vector<6x6xi32>
    %8 = arith.cmpi sgt, %7, %6 : vector<6x6xi32>
    %cst = arith.constant -1.000000e+09 : f32
    %cst_8 = arith.constant 0.000000e+00 : f32
    %9 = vector.broadcast %cst : f32 to vector<6x6xf32>
    %10 = vector.broadcast %cst_8 : f32 to vector<6x6xf32>
    %11 = arith.select %8, %9, %10 : vector<6x6xi1>, vector<6x6xf32>
    %12 = vector.extract_strided_slice %1 {offsets = [0, 0], sizes = [6, 8], strides = [1, 1]} : vector<6x32xbf16> to vector<6x8xbf16>
    %13 = vector.extract_strided_slice %3 {offsets = [0, 0], sizes = [6, 8], strides = [1, 1]} : vector<6x32xbf16> to vector<6x8xbf16>
    %14 = vector.extract_strided_slice %5 {offsets = [0, 0], sizes = [6, 8], strides = [1, 1]} : vector<6x32xbf16> to vector<6x8xbf16>
    "tpu.trace_start"() <{level = 10 : i32, message = "qd,kd->qk"}> : () -> ()
    %cst_9 = arith.constant dense<0.000000e+00> : vector<6x6xf32>
    %15 = tpu.matmul %12, %13, %cst_9 {dimension_numbers = #tpu.dot_dimension_numbers<[1], [1], [0], [0], [0, 0, 1, 0], [], []>} : vector<6x8xbf16>, vector<6x8xbf16>, vector<6x6xf32> -> vector<6x6xf32>
    "tpu.trace_stop"() : () -> ()
    %16 = arith.addf %15, %11 : vector<6x6xf32>
    %cst_10 = arith.constant dense<0xFF800000> : vector<6xf32>
    %17 = vector.multi_reduction <maximumf>, %16, %cst_10 [1] : vector<6x6xf32> to vector<6xf32>
    %18 = vector.shape_cast %17 : vector<6xf32> to vector<6x1xf32>
    %19 = vector.broadcast %18 : vector<6x1xf32> to vector<6x6xf32>
    %20 = arith.subf %16, %19 : vector<6x6xf32>
    %21 = math.exp %20 : vector<6x6xf32>
    %cst_11 = arith.constant dense<0.000000e+00> : vector<6xf32>
    %22 = vector.multi_reduction <add>, %21, %cst_11 [1] : vector<6x6xf32> to vector<6xf32>
    %23 = vector.shape_cast %22 : vector<6xf32> to vector<6x1xf32>
    %24 = arith.truncf %21 : vector<6x6xf32> to vector<6x6xbf16>
    "tpu.trace_start"() <{level = 10 : i32, message = "qk,kd->qd"}> : () -> ()
    %cst_12 = arith.constant dense<0.000000e+00> : vector<6x8xf32>
    %25 = tpu.matmul %24, %14, %cst_12 {dimension_numbers = #tpu.dot_dimension_numbers<[1], [0], [0], [1], [0, 0, 1, 1], [], []>} : vector<6x6xbf16>, vector<6x8xbf16>, vector<6x8xf32> -> vector<6x8xf32>
    "tpu.trace_stop"() : () -> ()
    %26 = tpu.reciprocal %23 {approx = true} : vector<6x1xf32> -> vector<6x1xf32>
    %27 = vector.broadcast %26 : vector<6x1xf32> to vector<6x8xf32>
    %28 = arith.mulf %25, %27 : vector<6x8xf32>
    %29 = vector.extract_strided_slice %1 {offsets = [0, 8], sizes = [6, 8], strides = [1, 1]} : vector<6x32xbf16> to vector<6x8xbf16>
    %30 = vector.extract_strided_slice %3 {offsets = [0, 8], sizes = [6, 8], strides = [1, 1]} : vector<6x32xbf16> to vector<6x8xbf16>
    %31 = vector.extract_strided_slice %5 {offsets = [0, 8], sizes = [6, 8], strides = [1, 1]} : vector<6x32xbf16> to vector<6x8xbf16>
    "tpu.trace_start"() <{level = 10 : i32, message = "qd,kd->qk"}> : () -> ()
    %cst_13 = arith.constant dense<0.000000e+00> : vector<6x6xf32>
    %32 = tpu.matmul %29, %30, %cst_13 {dimension_numbers = #tpu.dot_dimension_numbers<[1], [1], [0], [0], [0, 0, 1, 0], [], []>} : vector<6x8xbf16>, vector<6x8xbf16>, vector<6x6xf32> -> vector<6x6xf32>
    "tpu.trace_stop"() : () -> ()
    %33 = arith.addf %32, %11 : vector<6x6xf32>
    %cst_14 = arith.constant dense<0xFF800000> : vector<6xf32>
    %34 = vector.multi_reduction <maximumf>, %33, %cst_14 [1] : vector<6x6xf32> to vector<6xf32>
    %35 = vector.shape_cast %34 : vector<6xf32> to vector<6x1xf32>
    %36 = vector.broadcast %35 : vector<6x1xf32> to vector<6x6xf32>
    %37 = arith.subf %33, %36 : vector<6x6xf32>
    %38 = math.exp %37 : vector<6x6xf32>
    %cst_15 = arith.constant dense<0.000000e+00> : vector<6xf32>
    %39 = vector.multi_reduction <add>, %38, %cst_15 [1] : vector<6x6xf32> to vector<6xf32>
    %40 = vector.shape_cast %39 : vector<6xf32> to vector<6x1xf32>
    %41 = arith.truncf %38 : vector<6x6xf32> to vector<6x6xbf16>
    "tpu.trace_start"() <{level = 10 : i32, message = "qk,kd->qd"}> : () -> ()
    %cst_16 = arith.constant dense<0.000000e+00> : vector<6x8xf32>
    %42 = tpu.matmul %41, %31, %cst_16 {dimension_numbers = #tpu.dot_dimension_numbers<[1], [0], [0], [1], [0, 0, 1, 1], [], []>} : vector<6x6xbf16>, vector<6x8xbf16>, vector<6x8xf32> -> vector<6x8xf32>
    "tpu.trace_stop"() : () -> ()
    %43 = tpu.reciprocal %40 {approx = true} : vector<6x1xf32> -> vector<6x1xf32>
    %44 = vector.broadcast %43 : vector<6x1xf32> to vector<6x8xf32>
    %45 = arith.mulf %42, %44 : vector<6x8xf32>
    %46 = vector.extract_strided_slice %1 {offsets = [0, 16], sizes = [6, 8], strides = [1, 1]} : vector<6x32xbf16> to vector<6x8xbf16>
    %47 = vector.extract_strided_slice %3 {offsets = [0, 16], sizes = [6, 8], strides = [1, 1]} : vector<6x32xbf16> to vector<6x8xbf16>
    %48 = vector.extract_strided_slice %5 {offsets = [0, 16], sizes = [6, 8], strides = [1, 1]} : vector<6x32xbf16> to vector<6x8xbf16>
    "tpu.trace_start"() <{level = 10 : i32, message = "qd,kd->qk"}> : () -> ()
    %cst_17 = arith.constant dense<0.000000e+00> : vector<6x6xf32>
    %49 = tpu.matmul %46, %47, %cst_17 {dimension_numbers = #tpu.dot_dimension_numbers<[1], [1], [0], [0], [0, 0, 1, 0], [], []>} : vector<6x8xbf16>, vector<6x8xbf16>, vector<6x6xf32> -> vector<6x6xf32>
    "tpu.trace_stop"() : () -> ()
    %50 = arith.addf %49, %11 : vector<6x6xf32>
    %cst_18 = arith.constant dense<0xFF800000> : vector<6xf32>
    %51 = vector.multi_reduction <maximumf>, %50, %cst_18 [1] : vector<6x6xf32> to vector<6xf32>
    %52 = vector.shape_cast %51 : vector<6xf32> to vector<6x1xf32>
    %53 = vector.broadcast %52 : vector<6x1xf32> to vector<6x6xf32>
    %54 = arith.subf %50, %53 : vector<6x6xf32>
    %55 = math.exp %54 : vector<6x6xf32>
    %cst_19 = arith.constant dense<0.000000e+00> : vector<6xf32>
    %56 = vector.multi_reduction <add>, %55, %cst_19 [1] : vector<6x6xf32> to vector<6xf32>
    %57 = vector.shape_cast %56 : vector<6xf32> to vector<6x1xf32>
    %58 = arith.truncf %55 : vector<6x6xf32> to vector<6x6xbf16>
    "tpu.trace_start"() <{level = 10 : i32, message = "qk,kd->qd"}> : () -> ()
    %cst_20 = arith.constant dense<0.000000e+00> : vector<6x8xf32>
    %59 = tpu.matmul %58, %48, %cst_20 {dimension_numbers = #tpu.dot_dimension_numbers<[1], [0], [0], [1], [0, 0, 1, 1], [], []>} : vector<6x6xbf16>, vector<6x8xbf16>, vector<6x8xf32> -> vector<6x8xf32>
    "tpu.trace_stop"() : () -> ()
    %60 = tpu.reciprocal %57 {approx = true} : vector<6x1xf32> -> vector<6x1xf32>
    %61 = vector.broadcast %60 : vector<6x1xf32> to vector<6x8xf32>
    %62 = arith.mulf %59, %61 : vector<6x8xf32>
    %63 = vector.extract_strided_slice %1 {offsets = [0, 24], sizes = [6, 8], strides = [1, 1]} : vector<6x32xbf16> to vector<6x8xbf16>
    %64 = vector.extract_strided_slice %3 {offsets = [0, 24], sizes = [6, 8], strides = [1, 1]} : vector<6x32xbf16> to vector<6x8xbf16>
    %65 = vector.extract_strided_slice %5 {offsets = [0, 24], sizes = [6, 8], strides = [1, 1]} : vector<6x32xbf16> to vector<6x8xbf16>
    "tpu.trace_start"() <{level = 10 : i32, message = "qd,kd->qk"}> : () -> ()
    %cst_21 = arith.constant dense<0.000000e+00> : vector<6x6xf32>
    %66 = tpu.matmul %63, %64, %cst_21 {dimension_numbers = #tpu.dot_dimension_numbers<[1], [1], [0], [0], [0, 0, 1, 0], [], []>} : vector<6x8xbf16>, vector<6x8xbf16>, vector<6x6xf32> -> vector<6x6xf32>
    "tpu.trace_stop"() : () -> ()
    %67 = arith.addf %66, %11 : vector<6x6xf32>
    %cst_22 = arith.constant dense<0xFF800000> : vector<6xf32>
    %68 = vector.multi_reduction <maximumf>, %67, %cst_22 [1] : vector<6x6xf32> to vector<6xf32>
    %69 = vector.shape_cast %68 : vector<6xf32> to vector<6x1xf32>
    %70 = vector.broadcast %69 : vector<6x1xf32> to vector<6x6xf32>
    %71 = arith.subf %67, %70 : vector<6x6xf32>
    %72 = math.exp %71 : vector<6x6xf32>
    %cst_23 = arith.constant dense<0.000000e+00> : vector<6xf32>
    %73 = vector.multi_reduction <add>, %72, %cst_23 [1] : vector<6x6xf32> to vector<6xf32>
    %74 = vector.shape_cast %73 : vector<6xf32> to vector<6x1xf32>
    %75 = arith.truncf %72 : vector<6x6xf32> to vector<6x6xbf16>
    "tpu.trace_start"() <{level = 10 : i32, message = "qk,kd->qd"}> : () -> ()
    %cst_24 = arith.constant dense<0.000000e+00> : vector<6x8xf32>
    %76 = tpu.matmul %75, %65, %cst_24 {dimension_numbers = #tpu.dot_dimension_numbers<[1], [0], [0], [1], [0, 0, 1, 1], [], []>} : vector<6x6xbf16>, vector<6x8xbf16>, vector<6x8xf32> -> vector<6x8xf32>
    "tpu.trace_stop"() : () -> ()
    %77 = tpu.reciprocal %74 {approx = true} : vector<6x1xf32> -> vector<6x1xf32>
    %78 = vector.broadcast %77 : vector<6x1xf32> to vector<6x8xf32>
    %79 = arith.mulf %76, %78 : vector<6x8xf32>
    %80 = tpu.concatenate %28, %45, %62, %79 in 1 : vector<6x8xf32>, vector<6x8xf32>, vector<6x8xf32>, vector<6x8xf32> -> vector<6x32xf32>
    %81 = arith.truncf %80 : vector<6x32xf32> to vector<6x32xbf16>
    %c0_25 = arith.constant 0 : index
    %c0_26 = arith.constant 0 : index
    %c0_27 = arith.constant 0 : index
    %82 = vector.load %arg4[%c0_25, %c0_26, %c0_27] : memref<1x6x32xbf16, #tpu.memory_space<vmem>>, vector<1x6x32xbf16>
    %83 = vector.shape_cast %82 : vector<1x6x32xbf16> to vector<6x32xbf16>
    %84 = vector.shape_cast %81 : vector<6x32xbf16> to vector<1x6x32xbf16>
    tpu.vector_store %arg4[%c0_25, %c0_26, %c0_27], %84 {strides = array<i32>} : memref<1x6x32xbf16, #tpu.memory_space<vmem>>, vector<1x6x32xbf16>,
    return
  }
  func.func @transform_0(%arg0: i32) -> (i32, i32, i32) {
    %c0_i32 = arith.constant 0 : i32
    %c0_i32_0 = arith.constant 0 : i32
    %c0_i32_1 = arith.constant 0 : i32
    return %arg0, %c0_i32, %c0_i32_0 : i32, i32, i32
  }
  func.func @transform_1(%arg0: i32) -> (i32, i32, i32) {
    %c0_i32 = arith.constant 0 : i32
    %c0_i32_0 = arith.constant 0 : i32
    %c0_i32_1 = arith.constant 0 : i32
    return %arg0, %c0_i32, %c0_i32_0 : i32, i32, i32
  }
  func.func @transform_2(%arg0: i32) -> (i32, i32, i32) {
    %c0_i32 = arith.constant 0 : i32
    %c0_i32_0 = arith.constant 0 : i32
    %c0_i32_1 = arith.constant 0 : i32
    return %arg0, %c0_i32, %c0_i32_0 : i32, i32, i32
  }
  func.func @transform_3(%arg0: i32) -> (i32, i32, i32) {
    %c0_i32 = arith.constant 0 : i32
    %c0_i32_0 = arith.constant 0 : i32
    %c0_i32_1 = arith.constant 0 : i32
    return %arg0, %c0_i32, %c0_i32_0 : i32, i32, i32
  }
}

module attributes {stable_mosaic.version = 11 : i64} {
  func.func @_matmul_ln_kernel(%arg0: i32, %arg1: i32, %arg2: memref<16x32xbf16, #tpu.memory_space<vmem>>, %arg3: memref<32x128xbf16, #tpu.memory_space<vmem>>, %arg4: memref<1x128xf32, #tpu.memory_space<vmem>>, %arg5: memref<16x32xbf16, #tpu.memory_space<vmem>>, %arg6: memref<1x32xf32, #tpu.memory_space<vmem>>, %arg7: memref<1x32xf32, #tpu.memory_space<vmem>>, %arg8: memref<16x32xbf16, #tpu.memory_space<vmem>>, %arg9: memref<16x128xf32, #tpu.memory_space<vmem>>) attributes {dimension_semantics = [#tpu.dimension_semantics<parallel>, #tpu.dimension_semantics<arbitrary>], iteration_bounds = array<i64: 1, 1>, scalar_prefetch = 0 : i64, scratch_operands = 1 : i64, tpu.core_type = #tpu.core_type<tc>, window_params = [{transform_indices = @transform_0, window_bounds = array<i64: 16, 32>}, {transform_indices = @transform_1, window_bounds = array<i64: 32, 128>}, {pipeline_mode = #tpu.pipeline_mode<synchronous>, transform_indices = @transform_2, window_bounds = array<i64: 1, 128>}, {transform_indices = @transform_3, window_bounds = array<i64: 16, 32>}, {pipeline_mode = #tpu.pipeline_mode<synchronous>, transform_indices = @transform_4, window_bounds = array<i64: 1, 32>}, {pipeline_mode = #tpu.pipeline_mode<synchronous>, transform_indices = @transform_5, window_bounds = array<i64: 1, 32>}, {transform_indices = @transform_6, window_bounds = array<i64: 16, 32>}]} {
    %c0_i32 = arith.constant 0 : i32
    %0 = arith.cmpi eq, %arg1, %c0_i32 : i32
    %1 = arith.extui %0 : i1 to i32
    %c0_i32_0 = arith.constant 0 : i32
    %2 = arith.cmpi ne, %1, %c0_i32_0 : i32
    scf.if %2 {
      %cst_10 = arith.constant 0.000000e+00 : f32
      %12 = vector.broadcast %cst_10 : f32 to vector<16x128xf32>
      %c0_11 = arith.constant 0 : index
      %c0_12 = arith.constant 0 : index
      %13 = vector.load %arg9[%c0_11, %c0_12] : memref<16x128xf32, #tpu.memory_space<vmem>>, vector<16x128xf32>
      tpu.vector_store %arg9[%c0_11, %c0_12], %12 {strides = array<i32>} : memref<16x128xf32, #tpu.memory_space<vmem>>, vector<16x128xf32>,
    } else {
    }
    %c0 = arith.constant 0 : index
    %c0_1 = arith.constant 0 : index
    %3 = vector.load %arg9[%c0, %c0_1] : memref<16x128xf32, #tpu.memory_space<vmem>>, vector<16x128xf32>
    %c0_2 = arith.constant 0 : index
    %c0_3 = arith.constant 0 : index
    %4 = vector.load %arg2[%c0_2, %c0_3] : memref<16x32xbf16, #tpu.memory_space<vmem>>, vector<16x32xbf16>
    %c0_4 = arith.constant 0 : index
    %c0_5 = arith.constant 0 : index
    %5 = vector.load %arg3[%c0_4, %c0_5] : memref<32x128xbf16, #tpu.memory_space<vmem>>, vector<32x128xbf16>
    %cst = arith.constant dense<0.000000e+00> : vector<16x128xf32>
    %6 = tpu.matmul %4, %5, %cst {dimension_numbers = #tpu.dot_dimension_numbers<[1], [0], [0], [1], [0, 0, 1, 1], [], []>} : vector<16x32xbf16>, vector<32x128xbf16>, vector<16x128xf32> -> vector<16x128xf32>
    %7 = arith.addf %3, %6 : vector<16x128xf32>
    %c0_6 = arith.constant 0 : index
    %c0_7 = arith.constant 0 : index
    %8 = vector.load %arg9[%c0_6, %c0_7] : memref<16x128xf32, #tpu.memory_space<vmem>>, vector<16x128xf32>
    tpu.vector_store %arg9[%c0_6, %c0_7], %7 {strides = array<i32>} : memref<16x128xf32, #tpu.memory_space<vmem>>, vector<16x128xf32>,
    %c0_i32_8 = arith.constant 0 : i32
    %9 = arith.cmpi eq, %arg1, %c0_i32_8 : i32
    %10 = arith.extui %9 : i1 to i32
    %c0_i32_9 = arith.constant 0 : i32
    %11 = arith.cmpi ne, %10, %c0_i32_9 : i32
    scf.if %11 {
      %c0_10 = arith.constant 0 : index
      %c0_11 = arith.constant 0 : index
      %12 = vector.load %arg9[%c0_10, %c0_11] : memref<16x128xf32, #tpu.memory_space<vmem>>, vector<16x128xf32>
      %c0_12 = arith.constant 0 : index
      %c0_13 = arith.constant 0 : index
      %13 = vector.load %arg4[%c0_12, %c0_13] : memref<1x128xf32, #tpu.memory_space<vmem>>, vector<1x128xf32>
      %14 = vector.extract_strided_slice %12 {offsets = [0, 0], sizes = [16, 32], strides = [1, 1]} : vector<16x128xf32> to vector<16x32xf32>
      %15 = vector.extract_strided_slice %13 {offsets = [0, 0], sizes = [1, 32], strides = [1, 1]} : vector<1x128xf32> to vector<1x32xf32>
      %16 = vector.broadcast %15 : vector<1x32xf32> to vector<16x32xf32>
      %17 = arith.addf %14, %16 : vector<16x32xf32>
      %c0_14 = arith.constant 0 : index
      %c0_15 = arith.constant 0 : index
      %18 = vector.load %arg5[%c0_14, %c0_15] : memref<16x32xbf16, #tpu.memory_space<vmem>>, vector<16x32xbf16>
      %19 = arith.extf %18 : vector<16x32xbf16> to vector<16x32xf32>
      %20 = arith.addf %17, %19 : vector<16x32xf32>
      %cst_16 = arith.constant dense<0.000000e+00> : vector<16xf32>
      %21 = vector.multi_reduction <add>, %20, %cst_16 [1] : vector<16x32xf32> to vector<16xf32>
      %22 = vector.shape_cast %21 : vector<16xf32> to vector<16x1xf32>
      %cst_17 = arith.constant 3.200000e+01 : f32
      %23 = vector.broadcast %cst_17 : f32 to vector<16x1xf32>
      %24 = arith.divf %22, %23 : vector<16x1xf32>
      %25 = vector.broadcast %24 : vector<16x1xf32> to vector<16x32xf32>
      %26 = arith.subf %20, %25 : vector<16x32xf32>
      %27 = arith.mulf %26, %26 : vector<16x32xf32>
      %cst_18 = arith.constant dense<0.000000e+00> : vector<16xf32>
      %28 = vector.multi_reduction <add>, %27, %cst_18 [1] : vector<16x32xf32> to vector<16xf32>
      %29 = vector.shape_cast %28 : vector<16xf32> to vector<16x1xf32>
      %cst_19 = arith.constant 3.200000e+01 : f32
      %30 = vector.broadcast %cst_19 : f32 to vector<16x1xf32>
      %31 = arith.divf %29, %30 : vector<16x1xf32>
      %32 = vector.broadcast %24 : vector<16x1xf32> to vector<16x32xf32>
      %33 = arith.subf %20, %32 : vector<16x32xf32>
      %cst_20 = arith.constant 9.99999974E-6 : f32
      %34 = vector.broadcast %cst_20 : f32 to vector<16x1xf32>
      %35 = arith.addf %31, %34 : vector<16x1xf32>
      %36 = math.rsqrt %35 : vector<16x1xf32>
      %37 = vector.broadcast %36 : vector<16x1xf32> to vector<16x32xf32>
      %38 = arith.mulf %33, %37 : vector<16x32xf32>
      %c0_21 = arith.constant 0 : index
      %c0_22 = arith.constant 0 : index
      %39 = vector.load %arg6[%c0_21, %c0_22] : memref<1x32xf32, #tpu.memory_space<vmem>>, vector<1x32xf32>
      %40 = vector.broadcast %39 : vector<1x32xf32> to vector<16x32xf32>
      %41 = arith.mulf %38, %40 : vector<16x32xf32>
      %c0_23 = arith.constant 0 : index
      %c0_24 = arith.constant 0 : index
      %42 = vector.load %arg7[%c0_23, %c0_24] : memref<1x32xf32, #tpu.memory_space<vmem>>, vector<1x32xf32>
      %43 = vector.broadcast %42 : vector<1x32xf32> to vector<16x32xf32>
      %44 = arith.addf %41, %43 : vector<16x32xf32>
      %45 = arith.truncf %44 : vector<16x32xf32> to vector<16x32xbf16>
      %c0_25 = arith.constant 0 : index
      %c0_26 = arith.constant 0 : index
      %46 = vector.load %arg8[%c0_25, %c0_26] : memref<16x32xbf16, #tpu.memory_space<vmem>>, vector<16x32xbf16>
      tpu.vector_store %arg8[%c0_25, %c0_26], %45 {strides = array<i32>} : memref<16x32xbf16, #tpu.memory_space<vmem>>, vector<16x32xbf16>,
    } else {
    }
    return
  }
  func.func @transform_0(%arg0: i32, %arg1: i32) -> (i32, i32) {
    %c0_i32 = arith.constant 0 : i32
    return %arg0, %arg1 : i32, i32
  }
  func.func @transform_1(%arg0: i32, %arg1: i32) -> (i32, i32) {
    %c0_i32 = arith.constant 0 : i32
    %c0_i32_0 = arith.constant 0 : i32
    return %arg1, %c0_i32 : i32, i32
  }
  func.func @transform_2(%arg0: i32, %arg1: i32) -> (i32, i32) {
    %c0_i32 = arith.constant 0 : i32
    %c0_i32_0 = arith.constant 0 : i32
    %c0_i32_1 = arith.constant 0 : i32
    return %c0_i32, %c0_i32_0 : i32, i32
  }
  func.func @transform_3(%arg0: i32, %arg1: i32) -> (i32, i32) {
    %c0_i32 = arith.constant 0 : i32
    %c0_i32_0 = arith.constant 0 : i32
    return %arg0, %c0_i32 : i32, i32
  }
  func.func @transform_4(%arg0: i32, %arg1: i32) -> (i32, i32) {
    %c0_i32 = arith.constant 0 : i32
    %c0_i32_0 = arith.constant 0 : i32
    %c0_i32_1 = arith.constant 0 : i32
    return %c0_i32, %c0_i32_0 : i32, i32
  }
  func.func @transform_5(%arg0: i32, %arg1: i32) -> (i32, i32) {
    %c0_i32 = arith.constant 0 : i32
    %c0_i32_0 = arith.constant 0 : i32
    %c0_i32_1 = arith.constant 0 : i32
    return %c0_i32, %c0_i32_0 : i32, i32
  }
  func.func @transform_6(%arg0: i32, %arg1: i32) -> (i32, i32) {
    %c0_i32 = arith.constant 0 : i32
    %c0_i32_0 = arith.constant 0 : i32
    return %arg0, %c0_i32 : i32, i32
  }
}

module attributes {stable_mosaic.version = 11 : i64} {
  func.func @_attention_kernel(%arg0: i32, %arg1: memref<1x8x32xbf16, #tpu.memory_space<vmem>>, %arg2: memref<1x8x32xbf16, #tpu.memory_space<vmem>>, %arg3: memref<1x8x32xbf16, #tpu.memory_space<vmem>>, %arg4: memref<1x1x8xf32, #tpu.memory_space<vmem>>, %arg5: memref<1x8x32xbf16, #tpu.memory_space<vmem>>) attributes {dimension_semantics = [#tpu.dimension_semantics<parallel>], iteration_bounds = array<i64: 2>, scalar_prefetch = 0 : i64, scratch_operands = 0 : i64, tpu.core_type = #tpu.core_type<tc>, window_params = [{transform_indices = @transform_0, window_bounds = array<i64: 1, 8, 32>}, {transform_indices = @transform_1, window_bounds = array<i64: 1, 8, 32>}, {transform_indices = @transform_2, window_bounds = array<i64: 1, 8, 32>}, {transform_indices = @transform_3, window_bounds = array<i64: 1, 1, 8>}, {transform_indices = @transform_4, window_bounds = array<i64: 1, 8, 32>}]} {
    %c0 = arith.constant 0 : index
    %c0_0 = arith.constant 0 : index
    %c0_1 = arith.constant 0 : index
    %0 = vector.load %arg4[%c0, %c0_0, %c0_1] : memref<1x1x8xf32, #tpu.memory_space<vmem>>, vector<1x1x8xf32>
    %1 = vector.shape_cast %0 : vector<1x1x8xf32> to vector<1x8xf32>
    %c0_2 = arith.constant 0 : index
    %c0_3 = arith.constant 0 : index
    %c0_4 = arith.constant 0 : index
    %2 = vector.load %arg1[%c0_2, %c0_3, %c0_4] : memref<1x8x32xbf16, #tpu.memory_space<vmem>>, vector<1x8x32xbf16>
    %3 = vector.shape_cast %2 : vector<1x8x32xbf16> to vector<8x32xbf16>
    %c0_5 = arith.constant 0 : index
    %c0_6 = arith.constant 0 : index
    %c0_7 = arith.constant 0 : index
    %4 = vector.load %arg2[%c0_5, %c0_6, %c0_7] : memref<1x8x32xbf16, #tpu.memory_space<vmem>>, vector<1x8x32xbf16>
    %5 = vector.shape_cast %4 : vector<1x8x32xbf16> to vector<8x32xbf16>
    %c0_8 = arith.constant 0 : index
    %c0_9 = arith.constant 0 : index
    %c0_10 = arith.constant 0 : index
    %6 = vector.load %arg3[%c0_8, %c0_9, %c0_10] : memref<1x8x32xbf16, #tpu.memory_space<vmem>>, vector<1x8x32xbf16>
    %7 = vector.shape_cast %6 : vector<1x8x32xbf16> to vector<8x32xbf16>
    %8 = vector.extract_strided_slice %3 {offsets = [0, 0], sizes = [8, 8], strides = [1, 1]} : vector<8x32xbf16> to vector<8x8xbf16>
    %9 = vector.extract_strided_slice %5 {offsets = [0, 0], sizes = [8, 8], strides = [1, 1]} : vector<8x32xbf16> to vector<8x8xbf16>
    %10 = vector.extract_strided_slice %7 {offsets = [0, 0], sizes = [8, 8], strides = [1, 1]} : vector<8x32xbf16> to vector<8x8xbf16>
    "tpu.trace_start"() <{level = 10 : i32, message = "qd,kd->qk"}> : () -> ()
    %cst = arith.constant dense<0.000000e+00> : vector<8x8xf32>
    %11 = tpu.matmul %8, %9, %cst {dimension_numbers = #tpu.dot_dimension_numbers<[1], [1], [0], [0], [0, 0, 1, 0], [], []>} : vector<8x8xbf16>, vector<8x8xbf16>, vector<8x8xf32> -> vector<8x8xf32>
    "tpu.trace_stop"() : () -> ()
    %12 = vector.broadcast %1 : vector<1x8xf32> to vector<8x8xf32>
    %13 = arith.addf %11, %12 : vector<8x8xf32>
    %cst_11 = arith.constant dense<0xFF800000> : vector<8xf32>
    %14 = vector.multi_reduction <maximumf>, %13, %cst_11 [1] : vector<8x8xf32> to vector<8xf32>
    %15 = vector.shape_cast %14 : vector<8xf32> to vector<8x1xf32>
    %16 = vector.broadcast %15 : vector<8x1xf32> to vector<8x8xf32>
    %17 = arith.subf %13, %16 : vector<8x8xf32>
    %18 = math.exp %17 : vector<8x8xf32>
    %cst_12 = arith.constant dense<0.000000e+00> : vector<8xf32>
    %19 = vector.multi_reduction <add>, %18, %cst_12 [1] : vector<8x8xf32> to vector<8xf32>
    %20 = vector.shape_cast %19 : vector<8xf32> to vector<8x1xf32>
    %21 = arith.truncf %18 : vector<8x8xf32> to vector<8x8xbf16>
    "tpu.trace_start"() <{level = 10 : i32, message = "qk,kd->qd"}> : () -> ()
    %cst_13 = arith.constant dense<0.000000e+00> : vector<8x8xf32>
    %22 = tpu.matmul %21, %10, %cst_13 {dimension_numbers = #tpu.dot_dimension_numbers<[1], [0], [0], [1], [0, 0, 1, 1], [], []>} : vector<8x8xbf16>, vector<8x8xbf16>, vector<8x8xf32> -> vector<8x8xf32>
    "tpu.trace_stop"() : () -> ()
    %23 = tpu.reciprocal %20 {approx = true} : vector<8x1xf32> -> vector<8x1xf32>
    %24 = vector.broadcast %23 : vector<8x1xf32> to vector<8x8xf32>
    %25 = arith.mulf %22, %24 : vector<8x8xf32>
    %26 = vector.extract_strided_slice %3 {offsets = [0, 8], sizes = [8, 8], strides = [1, 1]} : vector<8x32xbf16> to vector<8x8xbf16>
    %27 = vector.extract_strided_slice %5 {offsets = [0, 8], sizes = [8, 8], strides = [1, 1]} : vector<8x32xbf16> to vector<8x8xbf16>
    %28 = vector.extract_strided_slice %7 {offsets = [0, 8], sizes = [8, 8], strides = [1, 1]} : vector<8x32xbf16> to vector<8x8xbf16>
    "tpu.trace_start"() <{level = 10 : i32, message = "qd,kd->qk"}> : () -> ()
    %cst_14 = arith.constant dense<0.000000e+00> : vector<8x8xf32>
    %29 = tpu.matmul %26, %27, %cst_14 {dimension_numbers = #tpu.dot_dimension_numbers<[1], [1], [0], [0], [0, 0, 1, 0], [], []>} : vector<8x8xbf16>, vector<8x8xbf16>, vector<8x8xf32> -> vector<8x8xf32>
    "tpu.trace_stop"() : () -> ()
    %30 = vector.broadcast %1 : vector<1x8xf32> to vector<8x8xf32>
    %31 = arith.addf %29, %30 : vector<8x8xf32>
    %cst_15 = arith.constant dense<0xFF800000> : vector<8xf32>
    %32 = vector.multi_reduction <maximumf>, %31, %cst_15 [1] : vector<8x8xf32> to vector<8xf32>
    %33 = vector.shape_cast %32 : vector<8xf32> to vector<8x1xf32>
    %34 = vector.broadcast %33 : vector<8x1xf32> to vector<8x8xf32>
    %35 = arith.subf %31, %34 : vector<8x8xf32>
    %36 = math.exp %35 : vector<8x8xf32>
    %cst_16 = arith.constant dense<0.000000e+00> : vector<8xf32>
    %37 = vector.multi_reduction <add>, %36, %cst_16 [1] : vector<8x8xf32> to vector<8xf32>
    %38 = vector.shape_cast %37 : vector<8xf32> to vector<8x1xf32>
    %39 = arith.truncf %36 : vector<8x8xf32> to vector<8x8xbf16>
    "tpu.trace_start"() <{level = 10 : i32, message = "qk,kd->qd"}> : () -> ()
    %cst_17 = arith.constant dense<0.000000e+00> : vector<8x8xf32>
    %40 = tpu.matmul %39, %28, %cst_17 {dimension_numbers = #tpu.dot_dimension_numbers<[1], [0], [0], [1], [0, 0, 1, 1], [], []>} : vector<8x8xbf16>, vector<8x8xbf16>, vector<8x8xf32> -> vector<8x8xf32>
    "tpu.trace_stop"() : () -> ()
    %41 = tpu.reciprocal %38 {approx = true} : vector<8x1xf32> -> vector<8x1xf32>
    %42 = vector.broadcast %41 : vector<8x1xf32> to vector<8x8xf32>
    %43 = arith.mulf %40, %42 : vector<8x8xf32>
    %44 = vector.extract_strided_slice %3 {offsets = [0, 16], sizes = [8, 8], strides = [1, 1]} : vector<8x32xbf16> to vector<8x8xbf16>
    %45 = vector.extract_strided_slice %5 {offsets = [0, 16], sizes = [8, 8], strides = [1, 1]} : vector<8x32xbf16> to vector<8x8xbf16>
    %46 = vector.extract_strided_slice %7 {offsets = [0, 16], sizes = [8, 8], strides = [1, 1]} : vector<8x32xbf16> to vector<8x8xbf16>
    "tpu.trace_start"() <{level = 10 : i32, message = "qd,kd->qk"}> : () -> ()
    %cst_18 = arith.constant dense<0.000000e+00> : vector<8x8xf32>
    %47 = tpu.matmul %44, %45, %cst_18 {dimension_numbers = #tpu.dot_dimension_numbers<[1], [1], [0], [0], [0, 0, 1, 0], [], []>} : vector<8x8xbf16>, vector<8x8xbf16>, vector<8x8xf32> -> vector<8x8xf32>
    "tpu.trace_stop"() : () -> ()
    %48 = vector.broadcast %1 : vector<1x8xf32> to vector<8x8xf32>
    %49 = arith.addf %47, %48 : vector<8x8xf32>
    %cst_19 = arith.constant dense<0xFF800000> : vector<8xf32>
    %50 = vector.multi_reduction <maximumf>, %49, %cst_19 [1] : vector<8x8xf32> to vector<8xf32>
    %51 = vector.shape_cast %50 : vector<8xf32> to vector<8x1xf32>
    %52 = vector.broadcast %51 : vector<8x1xf32> to vector<8x8xf32>
    %53 = arith.subf %49, %52 : vector<8x8xf32>
    %54 = math.exp %53 : vector<8x8xf32>
    %cst_20 = arith.constant dense<0.000000e+00> : vector<8xf32>
    %55 = vector.multi_reduction <add>, %54, %cst_20 [1] : vector<8x8xf32> to vector<8xf32>
    %56 = vector.shape_cast %55 : vector<8xf32> to vector<8x1xf32>
    %57 = arith.truncf %54 : vector<8x8xf32> to vector<8x8xbf16>
    "tpu.trace_start"() <{level = 10 : i32, message = "qk,kd->qd"}> : () -> ()
    %cst_21 = arith.constant dense<0.000000e+00> : vector<8x8xf32>
    %58 = tpu.matmul %57, %46, %cst_21 {dimension_numbers = #tpu.dot_dimension_numbers<[1], [0], [0], [1], [0, 0, 1, 1], [], []>} : vector<8x8xbf16>, vector<8x8xbf16>, vector<8x8xf32> -> vector<8x8xf32>
    "tpu.trace_stop"() : () -> ()
    %59 = tpu.reciprocal %56 {approx = true} : vector<8x1xf32> -> vector<8x1xf32>
    %60 = vector.broadcast %59 : vector<8x1xf32> to vector<8x8xf32>
    %61 = arith.mulf %58, %60 : vector<8x8xf32>
    %62 = vector.extract_strided_slice %3 {offsets = [0, 24], sizes = [8, 8], strides = [1, 1]} : vector<8x32xbf16> to vector<8x8xbf16>
    %63 = vector.extract_strided_slice %5 {offsets = [0, 24], sizes = [8, 8], strides = [1, 1]} : vector<8x32xbf16> to vector<8x8xbf16>
    %64 = vector.extract_strided_slice %7 {offsets = [0, 24], sizes = [8, 8], strides = [1, 1]} : vector<8x32xbf16> to vector<8x8xbf16>
    "tpu.trace_start"() <{level = 10 : i32, message = "qd,kd->qk"}> : () -> ()
    %cst_22 = arith.constant dense<0.000000e+00> : vector<8x8xf32>
    %65 = tpu.matmul %62, %63, %cst_22 {dimension_numbers = #tpu.dot_dimension_numbers<[1], [1], [0], [0], [0, 0, 1, 0], [], []>} : vector<8x8xbf16>, vector<8x8xbf16>, vector<8x8xf32> -> vector<8x8xf32>
    "tpu.trace_stop"() : () -> ()
    %66 = vector.broadcast %1 : vector<1x8xf32> to vector<8x8xf32>
    %67 = arith.addf %65, %66 : vector<8x8xf32>
    %cst_23 = arith.constant dense<0xFF800000> : vector<8xf32>
    %68 = vector.multi_reduction <maximumf>, %67, %cst_23 [1] : vector<8x8xf32> to vector<8xf32>
    %69 = vector.shape_cast %68 : vector<8xf32> to vector<8x1xf32>
    %70 = vector.broadcast %69 : vector<8x1xf32> to vector<8x8xf32>
    %71 = arith.subf %67, %70 : vector<8x8xf32>
    %72 = math.exp %71 : vector<8x8xf32>
    %cst_24 = arith.constant dense<0.000000e+00> : vector<8xf32>
    %73 = vector.multi_reduction <add>, %72, %cst_24 [1] : vector<8x8xf32> to vector<8xf32>
    %74 = vector.shape_cast %73 : vector<8xf32> to vector<8x1xf32>
    %75 = arith.truncf %72 : vector<8x8xf32> to vector<8x8xbf16>
    "tpu.trace_start"() <{level = 10 : i32, message = "qk,kd->qd"}> : () -> ()
    %cst_25 = arith.constant dense<0.000000e+00> : vector<8x8xf32>
    %76 = tpu.matmul %75, %64, %cst_25 {dimension_numbers = #tpu.dot_dimension_numbers<[1], [0], [0], [1], [0, 0, 1, 1], [], []>} : vector<8x8xbf16>, vector<8x8xbf16>, vector<8x8xf32> -> vector<8x8xf32>
    "tpu.trace_stop"() : () -> ()
    %77 = tpu.reciprocal %74 {approx = true} : vector<8x1xf32> -> vector<8x1xf32>
    %78 = vector.broadcast %77 : vector<8x1xf32> to vector<8x8xf32>
    %79 = arith.mulf %76, %78 : vector<8x8xf32>
    %80 = tpu.concatenate %25, %43, %61, %79 in 1 : vector<8x8xf32>, vector<8x8xf32>, vector<8x8xf32>, vector<8x8xf32> -> vector<8x32xf32>
    %81 = arith.truncf %80 : vector<8x32xf32> to vector<8x32xbf16>
    %c0_26 = arith.constant 0 : index
    %c0_27 = arith.constant 0 : index
    %c0_28 = arith.constant 0 : index
    %82 = vector.load %arg5[%c0_26, %c0_27, %c0_28] : memref<1x8x32xbf16, #tpu.memory_space<vmem>>, vector<1x8x32xbf16>
    %83 = vector.shape_cast %82 : vector<1x8x32xbf16> to vector<8x32xbf16>
    %84 = vector.shape_cast %81 : vector<8x32xbf16> to vector<1x8x32xbf16>
    tpu.vector_store %arg5[%c0_26, %c0_27, %c0_28], %84 {strides = array<i32>} : memref<1x8x32xbf16, #tpu.memory_space<vmem>>, vector<1x8x32xbf16>,
    return
  }
  func.func @transform_0(%arg0: i32) -> (i32, i32, i32) {
    %c0_i32 = arith.constant 0 : i32
    %c0_i32_0 = arith.constant 0 : i32
    %c0_i32_1 = arith.constant 0 : i32
    return %arg0, %c0_i32, %c0_i32_0 : i32, i32, i32
  }
  func.func @transform_1(%arg0: i32) -> (i32, i32, i32) {
    %c0_i32 = arith.constant 0 : i32
    %c0_i32_0 = arith.constant 0 : i32
    %c0_i32_1 = arith.constant 0 : i32
    return %arg0, %c0_i32, %c0_i32_0 : i32, i32, i32
  }
  func.func @transform_2(%arg0: i32) -> (i32, i32, i32) {
    %c0_i32 = arith.constant 0 : i32
    %c0_i32_0 = arith.constant 0 : i32
    %c0_i32_1 = arith.constant 0 : i32
    return %arg0, %c0_i32, %c0_i32_0 : i32, i32, i32
  }
  func.func @transform_3(%arg0: i32) -> (i32, i32, i32) {
    %c0_i32 = arith.constant 0 : i32
    %c0_i32_0 = arith.constant 0 : i32
    %c0_i32_1 = arith.constant 0 : i32
    return %arg0, %c0_i32, %c0_i32_0 : i32, i32, i32
  }
  func.func @transform_4(%arg0: i32) -> (i32, i32, i32) {
    %c0_i32 = arith.constant 0 : i32
    %c0_i32_0 = arith.constant 0 : i32
    %c0_i32_1 = arith.constant 0 : i32
    return %arg0, %c0_i32, %c0_i32_0 : i32, i32, i32
  }
}

module attributes {stable_mosaic.version = 11 : i64} {
  func.func @_matmul_kernel(%arg0: i32, %arg1: i32, %arg2: i32, %arg3: memref<16x32xbf16, #tpu.memory_space<vmem>>, %arg4: memref<32x128xbf16, #tpu.memory_space<vmem>>, %arg5: memref<1x128xf32, #tpu.memory_space<vmem>>, %arg6: memref<16x128xbf16, #tpu.memory_space<vmem>>, %arg7: memref<16x128xf32, #tpu.memory_space<vmem>>) attributes {dimension_semantics = [#tpu.dimension_semantics<parallel>, #tpu.dimension_semantics<parallel>, #tpu.dimension_semantics<arbitrary>], iteration_bounds = array<i64: 1, 1, 1>, scalar_prefetch = 0 : i64, scratch_operands = 1 : i64, tpu.core_type = #tpu.core_type<tc>, window_params = [{transform_indices = @transform_0, window_bounds = array<i64: 16, 32>}, {transform_indices = @transform_1, window_bounds = array<i64: 32, 128>}, {transform_indices = @transform_2, window_bounds = array<i64: 1, 128>}, {transform_indices = @transform_3, window_bounds = array<i64: 16, 128>}]} {
    %c0_i32 = arith.constant 0 : i32
    %0 = arith.cmpi eq, %arg2, %c0_i32 : i32
    %1 = arith.extui %0 : i1 to i32
    %c0_i32_0 = arith.constant 0 : i32
    %2 = arith.cmpi ne, %1, %c0_i32_0 : i32
    scf.if %2 {
      %cst_10 = arith.constant 0.000000e+00 : f32
      %12 = vector.broadcast %cst_10 : f32 to vector<16x128xf32>
      %c0_11 = arith.constant 0 : index
      %c0_12 = arith.constant 0 : index
      %13 = vector.load %arg7[%c0_11, %c0_12] : memref<16x128xf32, #tpu.memory_space<vmem>>, vector<16x128xf32>
      tpu.vector_store %arg7[%c0_11, %c0_12], %12 {strides = array<i32>} : memref<16x128xf32, #tpu.memory_space<vmem>>, vector<16x128xf32>,
    } else {
    }
    %c0 = arith.constant 0 : index
    %c0_1 = arith.constant 0 : index
    %3 = vector.load %arg7[%c0, %c0_1] : memref<16x128xf32, #tpu.memory_space<vmem>>, vector<16x128xf32>
    %c0_2 = arith.constant 0 : index
    %c0_3 = arith.constant 0 : index
    %4 = vector.load %arg3[%c0_2, %c0_3] : memref<16x32xbf16, #tpu.memory_space<vmem>>, vector<16x32xbf16>
    %c0_4 = arith.constant 0 : index
    %c0_5 = arith.constant 0 : index
    %5 = vector.load %arg4[%c0_4, %c0_5] : memref<32x128xbf16, #tpu.memory_space<vmem>>, vector<32x128xbf16>
    %cst = arith.constant dense<0.000000e+00> : vector<16x128xf32>
    %6 = tpu.matmul %4, %5, %cst {dimension_numbers = #tpu.dot_dimension_numbers<[1], [0], [0], [1], [0, 0, 1, 1], [], []>} : vector<16x32xbf16>, vector<32x128xbf16>, vector<16x128xf32> -> vector<16x128xf32>
    %7 = arith.addf %3, %6 : vector<16x128xf32>
    %c0_6 = arith.constant 0 : index
    %c0_7 = arith.constant 0 : index
    %8 = vector.load %arg7[%c0_6, %c0_7] : memref<16x128xf32, #tpu.memory_space<vmem>>, vector<16x128xf32>
    tpu.vector_store %arg7[%c0_6, %c0_7], %7 {strides = array<i32>} : memref<16x128xf32, #tpu.memory_space<vmem>>, vector<16x128xf32>,
    %c0_i32_8 = arith.constant 0 : i32
    %9 = arith.cmpi eq, %arg2, %c0_i32_8 : i32
    %10 = arith.extui %9 : i1 to i32
    %c0_i32_9 = arith.constant 0 : i32
    %11 = arith.cmpi ne, %10, %c0_i32_9 : i32
    scf.if %11 {
      %c0_10 = arith.constant 0 : index
      %c0_11 = arith.constant 0 : index
      %12 = vector.load %arg7[%c0_10, %c0_11] : memref<16x128xf32, #tpu.memory_space<vmem>>, vector<16x128xf32>
      %c0_12 = arith.constant 0 : index
      %c0_13 = arith.constant 0 : index
      %13 = vector.load %arg5[%c0_12, %c0_13] : memref<1x128xf32, #tpu.memory_space<vmem>>, vector<1x128xf32>
      %14 = vector.broadcast %13 : vector<1x128xf32> to vector<16x128xf32>
      %15 = arith.addf %12, %14 : vector<16x128xf32>
      %cst_14 = arith.constant 0.000000e+00 : f32
      %16 = vector.broadcast %cst_14 : f32 to vector<16x128xf32>
      %17 = arith.maximumf %15, %16 : vector<16x128xf32>
      %18 = arith.truncf %17 : vector<16x128xf32> to vector<16x128xbf16>
      %c0_15 = arith.constant 0 : index
      %c0_16 = arith.constant 0 : index
      %19 = vector.load %arg6[%c0_15, %c0_16] : memref<16x128xbf16, #tpu.memory_space<vmem>>, vector<16x128xbf16>
      tpu.vector_store %arg6[%c0_15, %c0_16], %18 {strides = array<i32>} : memref<16x128xbf16, #tpu.memory_space<vmem>>, vector<16x128xbf16>,
    } else {
    }
    return
  }
  func.func @transform_0(%arg0: i32, %arg1: i32, %arg2: i32) -> (i32, i32) {
    %c0_i32 = arith.constant 0 : i32
    return %arg0, %arg2 : i32, i32
  }
  func.func @transform_1(%arg0: i32, %arg1: i32, %arg2: i32) -> (i32, i32) {
    %c0_i32 = arith.constant 0 : i32
    return %arg2, %arg1 : i32, i32
  }
  func.func @transform_2(%arg0: i32, %arg1: i32, %arg2: i32) -> (i32, i32) {
    %c0_i32 = arith.constant 0 : i32
    %c0_i32_0 = arith.constant 0 : i32
    return %c0_i32, %arg1 : i32, i32
  }
  func.func @transform_3(%arg0: i32, %arg1: i32, %arg2: i32) -> (i32, i32) {
    %c0_i32 = arith.constant 0 : i32
    return %arg0, %arg1 : i32, i32
  }
}

module attributes {stable_mosaic.version = 11 : i64} {
  func.func @_matmul_ln_kernel(%arg0: i32, %arg1: i32, %arg2: memref<16x64xbf16, #tpu.memory_space<vmem>>, %arg3: memref<64x128xbf16, #tpu.memory_space<vmem>>, %arg4: memref<1x128xf32, #tpu.memory_space<vmem>>, %arg5: memref<16x32xbf16, #tpu.memory_space<vmem>>, %arg6: memref<1x32xf32, #tpu.memory_space<vmem>>, %arg7: memref<1x32xf32, #tpu.memory_space<vmem>>, %arg8: memref<16x32xbf16, #tpu.memory_space<vmem>>, %arg9: memref<16x128xf32, #tpu.memory_space<vmem>>) attributes {dimension_semantics = [#tpu.dimension_semantics<parallel>, #tpu.dimension_semantics<arbitrary>], iteration_bounds = array<i64: 1, 1>, scalar_prefetch = 0 : i64, scratch_operands = 1 : i64, tpu.core_type = #tpu.core_type<tc>, window_params = [{transform_indices = @transform_0, window_bounds = array<i64: 16, 64>}, {transform_indices = @transform_1, window_bounds = array<i64: 64, 128>}, {pipeline_mode = #tpu.pipeline_mode<synchronous>, transform_indices = @transform_2, window_bounds = array<i64: 1, 128>}, {transform_indices = @transform_3, window_bounds = array<i64: 16, 32>}, {pipeline_mode = #tpu.pipeline_mode<synchronous>, transform_indices = @transform_4, window_bounds = array<i64: 1, 32>}, {pipeline_mode = #tpu.pipeline_mode<synchronous>, transform_indices = @transform_5, window_bounds = array<i64: 1, 32>}, {transform_indices = @transform_6, window_bounds = array<i64: 16, 32>}]} {
    %c0_i32 = arith.constant 0 : i32
    %0 = arith.cmpi eq, %arg1, %c0_i32 : i32
    %1 = arith.extui %0 : i1 to i32
    %c0_i32_0 = arith.constant 0 : i32
    %2 = arith.cmpi ne, %1, %c0_i32_0 : i32
    scf.if %2 {
      %cst_10 = arith.constant 0.000000e+00 : f32
      %12 = vector.broadcast %cst_10 : f32 to vector<16x128xf32>
      %c0_11 = arith.constant 0 : index
      %c0_12 = arith.constant 0 : index
      %13 = vector.load %arg9[%c0_11, %c0_12] : memref<16x128xf32, #tpu.memory_space<vmem>>, vector<16x128xf32>
      tpu.vector_store %arg9[%c0_11, %c0_12], %12 {strides = array<i32>} : memref<16x128xf32, #tpu.memory_space<vmem>>, vector<16x128xf32>,
    } else {
    }
    %c0 = arith.constant 0 : index
    %c0_1 = arith.constant 0 : index
    %3 = vector.load %arg9[%c0, %c0_1] : memref<16x128xf32, #tpu.memory_space<vmem>>, vector<16x128xf32>
    %c0_2 = arith.constant 0 : index
    %c0_3 = arith.constant 0 : index
    %4 = vector.load %arg2[%c0_2, %c0_3] : memref<16x64xbf16, #tpu.memory_space<vmem>>, vector<16x64xbf16>
    %c0_4 = arith.constant 0 : index
    %c0_5 = arith.constant 0 : index
    %5 = vector.load %arg3[%c0_4, %c0_5] : memref<64x128xbf16, #tpu.memory_space<vmem>>, vector<64x128xbf16>
    %cst = arith.constant dense<0.000000e+00> : vector<16x128xf32>
    %6 = tpu.matmul %4, %5, %cst {dimension_numbers = #tpu.dot_dimension_numbers<[1], [0], [0], [1], [0, 0, 1, 1], [], []>} : vector<16x64xbf16>, vector<64x128xbf16>, vector<16x128xf32> -> vector<16x128xf32>
    %7 = arith.addf %3, %6 : vector<16x128xf32>
    %c0_6 = arith.constant 0 : index
    %c0_7 = arith.constant 0 : index
    %8 = vector.load %arg9[%c0_6, %c0_7] : memref<16x128xf32, #tpu.memory_space<vmem>>, vector<16x128xf32>
    tpu.vector_store %arg9[%c0_6, %c0_7], %7 {strides = array<i32>} : memref<16x128xf32, #tpu.memory_space<vmem>>, vector<16x128xf32>,
    %c0_i32_8 = arith.constant 0 : i32
    %9 = arith.cmpi eq, %arg1, %c0_i32_8 : i32
    %10 = arith.extui %9 : i1 to i32
    %c0_i32_9 = arith.constant 0 : i32
    %11 = arith.cmpi ne, %10, %c0_i32_9 : i32
    scf.if %11 {
      %c0_10 = arith.constant 0 : index
      %c0_11 = arith.constant 0 : index
      %12 = vector.load %arg9[%c0_10, %c0_11] : memref<16x128xf32, #tpu.memory_space<vmem>>, vector<16x128xf32>
      %c0_12 = arith.constant 0 : index
      %c0_13 = arith.constant 0 : index
      %13 = vector.load %arg4[%c0_12, %c0_13] : memref<1x128xf32, #tpu.memory_space<vmem>>, vector<1x128xf32>
      %14 = vector.extract_strided_slice %12 {offsets = [0, 0], sizes = [16, 32], strides = [1, 1]} : vector<16x128xf32> to vector<16x32xf32>
      %15 = vector.extract_strided_slice %13 {offsets = [0, 0], sizes = [1, 32], strides = [1, 1]} : vector<1x128xf32> to vector<1x32xf32>
      %16 = vector.broadcast %15 : vector<1x32xf32> to vector<16x32xf32>
      %17 = arith.addf %14, %16 : vector<16x32xf32>
      %c0_14 = arith.constant 0 : index
      %c0_15 = arith.constant 0 : index
      %18 = vector.load %arg5[%c0_14, %c0_15] : memref<16x32xbf16, #tpu.memory_space<vmem>>, vector<16x32xbf16>
      %19 = arith.extf %18 : vector<16x32xbf16> to vector<16x32xf32>
      %20 = arith.addf %17, %19 : vector<16x32xf32>
      %cst_16 = arith.constant dense<0.000000e+00> : vector<16xf32>
      %21 = vector.multi_reduction <add>, %20, %cst_16 [1] : vector<16x32xf32> to vector<16xf32>
      %22 = vector.shape_cast %21 : vector<16xf32> to vector<16x1xf32>
      %cst_17 = arith.constant 3.200000e+01 : f32
      %23 = vector.broadcast %cst_17 : f32 to vector<16x1xf32>
      %24 = arith.divf %22, %23 : vector<16x1xf32>
      %25 = vector.broadcast %24 : vector<16x1xf32> to vector<16x32xf32>
      %26 = arith.subf %20, %25 : vector<16x32xf32>
      %27 = arith.mulf %26, %26 : vector<16x32xf32>
      %cst_18 = arith.constant dense<0.000000e+00> : vector<16xf32>
      %28 = vector.multi_reduction <add>, %27, %cst_18 [1] : vector<16x32xf32> to vector<16xf32>
      %29 = vector.shape_cast %28 : vector<16xf32> to vector<16x1xf32>
      %cst_19 = arith.constant 3.200000e+01 : f32
      %30 = vector.broadcast %cst_19 : f32 to vector<16x1xf32>
      %31 = arith.divf %29, %30 : vector<16x1xf32>
      %32 = vector.broadcast %24 : vector<16x1xf32> to vector<16x32xf32>
      %33 = arith.subf %20, %32 : vector<16x32xf32>
      %cst_20 = arith.constant 9.99999974E-6 : f32
      %34 = vector.broadcast %cst_20 : f32 to vector<16x1xf32>
      %35 = arith.addf %31, %34 : vector<16x1xf32>
      %36 = math.rsqrt %35 : vector<16x1xf32>
      %37 = vector.broadcast %36 : vector<16x1xf32> to vector<16x32xf32>
      %38 = arith.mulf %33, %37 : vector<16x32xf32>
      %c0_21 = arith.constant 0 : index
      %c0_22 = arith.constant 0 : index
      %39 = vector.load %arg6[%c0_21, %c0_22] : memref<1x32xf32, #tpu.memory_space<vmem>>, vector<1x32xf32>
      %40 = vector.broadcast %39 : vector<1x32xf32> to vector<16x32xf32>
      %41 = arith.mulf %38, %40 : vector<16x32xf32>
      %c0_23 = arith.constant 0 : index
      %c0_24 = arith.constant 0 : index
      %42 = vector.load %arg7[%c0_23, %c0_24] : memref<1x32xf32, #tpu.memory_space<vmem>>, vector<1x32xf32>
      %43 = vector.broadcast %42 : vector<1x32xf32> to vector<16x32xf32>
      %44 = arith.addf %41, %43 : vector<16x32xf32>
      %45 = arith.truncf %44 : vector<16x32xf32> to vector<16x32xbf16>
      %c0_25 = arith.constant 0 : index
      %c0_26 = arith.constant 0 : index
      %46 = vector.load %arg8[%c0_25, %c0_26] : memref<16x32xbf16, #tpu.memory_space<vmem>>, vector<16x32xbf16>
      tpu.vector_store %arg8[%c0_25, %c0_26], %45 {strides = array<i32>} : memref<16x32xbf16, #tpu.memory_space<vmem>>, vector<16x32xbf16>,
    } else {
    }
    return
  }
  func.func @transform_0(%arg0: i32, %arg1: i32) -> (i32, i32) {
    %c0_i32 = arith.constant 0 : i32
    return %arg0, %arg1 : i32, i32
  }
  func.func @transform_1(%arg0: i32, %arg1: i32) -> (i32, i32) {
    %c0_i32 = arith.constant 0 : i32
    %c0_i32_0 = arith.constant 0 : i32
    return %arg1, %c0_i32 : i32, i32
  }
  func.func @transform_2(%arg0: i32, %arg1: i32) -> (i32, i32) {
    %c0_i32 = arith.constant 0 : i32
    %c0_i32_0 = arith.constant 0 : i32
    %c0_i32_1 = arith.constant 0 : i32
    return %c0_i32, %c0_i32_0 : i32, i32
  }
  func.func @transform_3(%arg0: i32, %arg1: i32) -> (i32, i32) {
    %c0_i32 = arith.constant 0 : i32
    %c0_i32_0 = arith.constant 0 : i32
    return %arg0, %c0_i32 : i32, i32
  }
  func.func @transform_4(%arg0: i32, %arg1: i32) -> (i32, i32) {
    %c0_i32 = arith.constant 0 : i32
    %c0_i32_0 = arith.constant 0 : i32
    %c0_i32_1 = arith.constant 0 : i32
    return %c0_i32, %c0_i32_0 : i32, i32
  }
  func.func @transform_5(%arg0: i32, %arg1: i32) -> (i32, i32) {
    %c0_i32 = arith.constant 0 : i32
    %c0_i32_0 = arith.constant 0 : i32
    %c0_i32_1 = arith.constant 0 : i32
    return %c0_i32, %c0_i32_0 : i32, i32
  }
  func.func @transform_6(%arg0: i32, %arg1: i32) -> (i32, i32) {
    %c0_i32 = arith.constant 0 : i32
    %c0_i32_0 = arith.constant 0 : i32
    return %arg0, %c0_i32 : i32, i32
  }
}

module attributes {stable_mosaic.version = 11 : i64} {
  func.func @_ln_kernel(%arg0: i32, %arg1: memref<16x32xbf16, #tpu.memory_space<vmem>>, %arg2: memref<1x32xf32, #tpu.memory_space<vmem>>, %arg3: memref<1x32xf32, #tpu.memory_space<vmem>>, %arg4: memref<16x32xbf16, #tpu.memory_space<vmem>>) attributes {dimension_semantics = [#tpu.dimension_semantics<parallel>], iteration_bounds = array<i64: 1>, scalar_prefetch = 0 : i64, scratch_operands = 0 : i64, tpu.core_type = #tpu.core_type<tc>, window_params = [{transform_indices = @transform_0, window_bounds = array<i64: 16, 32>}, {pipeline_mode = #tpu.pipeline_mode<synchronous>, transform_indices = @transform_1, window_bounds = array<i64: 1, 32>}, {pipeline_mode = #tpu.pipeline_mode<synchronous>, transform_indices = @transform_2, window_bounds = array<i64: 1, 32>}, {transform_indices = @transform_3, window_bounds = array<i64: 16, 32>}]} {
    %c0 = arith.constant 0 : index
    %c0_0 = arith.constant 0 : index
    %0 = vector.load %arg1[%c0, %c0_0] : memref<16x32xbf16, #tpu.memory_space<vmem>>, vector<16x32xbf16>
    %1 = arith.extf %0 : vector<16x32xbf16> to vector<16x32xf32>
    %cst = arith.constant dense<0.000000e+00> : vector<16xf32>
    %2 = vector.multi_reduction <add>, %1, %cst [1] : vector<16x32xf32> to vector<16xf32>
    %3 = vector.shape_cast %2 : vector<16xf32> to vector<16x1xf32>
    %cst_1 = arith.constant 3.200000e+01 : f32
    %4 = vector.broadcast %cst_1 : f32 to vector<16x1xf32>
    %5 = arith.divf %3, %4 : vector<16x1xf32>
    %6 = vector.broadcast %5 : vector<16x1xf32> to vector<16x32xf32>
    %7 = arith.subf %1, %6 : vector<16x32xf32>
    %8 = arith.mulf %7, %7 : vector<16x32xf32>
    %cst_2 = arith.constant dense<0.000000e+00> : vector<16xf32>
    %9 = vector.multi_reduction <add>, %8, %cst_2 [1] : vector<16x32xf32> to vector<16xf32>
    %10 = vector.shape_cast %9 : vector<16xf32> to vector<16x1xf32>
    %cst_3 = arith.constant 3.200000e+01 : f32
    %11 = vector.broadcast %cst_3 : f32 to vector<16x1xf32>
    %12 = arith.divf %10, %11 : vector<16x1xf32>
    %13 = vector.broadcast %5 : vector<16x1xf32> to vector<16x32xf32>
    %14 = arith.subf %1, %13 : vector<16x32xf32>
    %cst_4 = arith.constant 9.99999974E-6 : f32
    %15 = vector.broadcast %cst_4 : f32 to vector<16x1xf32>
    %16 = arith.addf %12, %15 : vector<16x1xf32>
    %17 = math.rsqrt %16 : vector<16x1xf32>
    %18 = vector.broadcast %17 : vector<16x1xf32> to vector<16x32xf32>
    %19 = arith.mulf %14, %18 : vector<16x32xf32>
    %c0_5 = arith.constant 0 : index
    %c0_6 = arith.constant 0 : index
    %20 = vector.load %arg2[%c0_5, %c0_6] : memref<1x32xf32, #tpu.memory_space<vmem>>, vector<1x32xf32>
    %21 = vector.broadcast %20 : vector<1x32xf32> to vector<16x32xf32>
    %22 = arith.mulf %19, %21 : vector<16x32xf32>
    %c0_7 = arith.constant 0 : index
    %c0_8 = arith.constant 0 : index
    %23 = vector.load %arg3[%c0_7, %c0_8] : memref<1x32xf32, #tpu.memory_space<vmem>>, vector<1x32xf32>
    %24 = vector.broadcast %23 : vector<1x32xf32> to vector<16x32xf32>
    %25 = arith.addf %22, %24 : vector<16x32xf32>
    %26 = arith.truncf %25 : vector<16x32xf32> to vector<16x32xbf16>
    %c0_9 = arith.constant 0 : index
    %c0_10 = arith.constant 0 : index
    %27 = vector.load %arg4[%c0_9, %c0_10] : memref<16x32xbf16, #tpu.memory_space<vmem>>, vector<16x32xbf16>
    tpu.vector_store %arg4[%c0_9, %c0_10], %26 {strides = array<i32>} : memref<16x32xbf16, #tpu.memory_space<vmem>>, vector<16x32xbf16>,
    return
  }
  func.func @transform_0(%arg0: i32) -> (i32, i32) {
    %c0_i32 = arith.constant 0 : i32
    %c0_i32_0 = arith.constant 0 : i32
    return %arg0, %c0_i32 : i32, i32
  }
  func.func @transform_1(%arg0: i32) -> (i32, i32) {
    %c0_i32 = arith.constant 0 : i32
    %c0_i32_0 = arith.constant 0 : i32
    %c0_i32_1 = arith.constant 0 : i32
    return %c0_i32, %c0_i32_0 : i32, i32
  }
  func.func @transform_2(%arg0: i32) -> (i32, i32) {
    %c0_i32 = arith.constant 0 : i32
    %c0_i32_0 = arith.constant 0 : i32
    %c0_i32_1 = arith.constant 0 : i32
    return %c0_i32, %c0_i32_0 : i32, i32
  }
  func.func @transform_3(%arg0: i32) -> (i32, i32) {
    %c0_i32 = arith.constant 0 : i32
    %c0_i32_0 = arith.constant 0 : i32
    return %arg0, %c0_i32 : i32, i32
  }
}

module attributes {stable_mosaic.version = 11 : i64} {
  func.func @_attention_kernel(%arg0: i32, %arg1: memref<1x6x32xbf16, #tpu.memory_space<vmem>>, %arg2: memref<1x8x32xbf16, #tpu.memory_space<vmem>>, %arg3: memref<1x8x32xbf16, #tpu.memory_space<vmem>>, %arg4: memref<1x6x32xbf16, #tpu.memory_space<vmem>>) attributes {dimension_semantics = [#tpu.dimension_semantics<parallel>], iteration_bounds = array<i64: 2>, scalar_prefetch = 0 : i64, scratch_operands = 0 : i64, tpu.core_type = #tpu.core_type<tc>, window_params = [{transform_indices = @transform_0, window_bounds = array<i64: 1, 6, 32>}, {transform_indices = @transform_1, window_bounds = array<i64: 1, 8, 32>}, {transform_indices = @transform_2, window_bounds = array<i64: 1, 8, 32>}, {transform_indices = @transform_3, window_bounds = array<i64: 1, 6, 32>}]} {
    %c0 = arith.constant 0 : index
    %c0_0 = arith.constant 0 : index
    %c0_1 = arith.constant 0 : index
    %0 = vector.load %arg1[%c0, %c0_0, %c0_1] : memref<1x6x32xbf16, #tpu.memory_space<vmem>>, vector<1x6x32xbf16>
    %1 = vector.shape_cast %0 : vector<1x6x32xbf16> to vector<6x32xbf16>
    %c0_2 = arith.constant 0 : index
    %c0_3 = arith.constant 0 : index
    %c0_4 = arith.constant 0 : index
    %2 = vector.load %arg2[%c0_2, %c0_3, %c0_4] : memref<1x8x32xbf16, #tpu.memory_space<vmem>>, vector<1x8x32xbf16>
    %3 = vector.shape_cast %2 : vector<1x8x32xbf16> to vector<8x32xbf16>
    %c0_5 = arith.constant 0 : index
    %c0_6 = arith.constant 0 : index
    %c0_7 = arith.constant 0 : index
    %4 = vector.load %arg3[%c0_5, %c0_6, %c0_7] : memref<1x8x32xbf16, #tpu.memory_space<vmem>>, vector<1x8x32xbf16>
    %5 = vector.shape_cast %4 : vector<1x8x32xbf16> to vector<8x32xbf16>
    %6 = vector.extract_strided_slice %1 {offsets = [0, 0], sizes = [6, 8], strides = [1, 1]} : vector<6x32xbf16> to vector<6x8xbf16>
    %7 = vector.extract_strided_slice %3 {offsets = [0, 0], sizes = [8, 8], strides = [1, 1]} : vector<8x32xbf16> to vector<8x8xbf16>
    %8 = vector.extract_strided_slice %5 {offsets = [0, 0], sizes = [8, 8], strides = [1, 1]} : vector<8x32xbf16> to vector<8x8xbf16>
    "tpu.trace_start"() <{level = 10 : i32, message = "qd,kd->qk"}> : () -> ()
    %cst = arith.constant dense<0.000000e+00> : vector<6x8xf32>
    %9 = tpu.matmul %6, %7, %cst {dimension_numbers = #tpu.dot_dimension_numbers<[1], [1], [0], [0], [0, 0, 1, 0], [], []>} : vector<6x8xbf16>, vector<8x8xbf16>, vector<6x8xf32> -> vector<6x8xf32>
    "tpu.trace_stop"() : () -> ()
    %cst_8 = arith.constant dense<0xFF800000> : vector<6xf32>
    %10 = vector.multi_reduction <maximumf>, %9, %cst_8 [1] : vector<6x8xf32> to vector<6xf32>
    %11 = vector.shape_cast %10 : vector<6xf32> to vector<6x1xf32>
    %12 = vector.broadcast %11 : vector<6x1xf32> to vector<6x8xf32>
    %13 = arith.subf %9, %12 : vector<6x8xf32>
    %14 = math.exp %13 : vector<6x8xf32>
    %cst_9 = arith.constant dense<0.000000e+00> : vector<6xf32>
    %15 = vector.multi_reduction <add>, %14, %cst_9 [1] : vector<6x8xf32> to vector<6xf32>
    %16 = vector.shape_cast %15 : vector<6xf32> to vector<6x1xf32>
    %17 = arith.truncf %14 : vector<6x8xf32> to vector<6x8xbf16>
    "tpu.trace_start"() <{level = 10 : i32, message = "qk,kd->qd"}> : () -> ()
    %cst_10 = arith.constant dense<0.000000e+00> : vector<6x8xf32>
    %18 = tpu.matmul %17, %8, %cst_10 {dimension_numbers = #tpu.dot_dimension_numbers<[1], [0], [0], [1], [0, 0, 1, 1], [], []>} : vector<6x8xbf16>, vector<8x8xbf16>, vector<6x8xf32> -> vector<6x8xf32>
    "tpu.trace_stop"() : () -> ()
    %19 = tpu.reciprocal %16 {approx = true} : vector<6x1xf32> -> vector<6x1xf32>
    %20 = vector.broadcast %19 : vector<6x1xf32> to vector<6x8xf32>
    %21 = arith.mulf %18, %20 : vector<6x8xf32>
    %22 = vector.extract_strided_slice %1 {offsets = [0, 8], sizes = [6, 8], strides = [1, 1]} : vector<6x32xbf16> to vector<6x8xbf16>
    %23 = vector.extract_strided_slice %3 {offsets = [0, 8], sizes = [8, 8], strides = [1, 1]} : vector<8x32xbf16> to vector<8x8xbf16>
    %24 = vector.extract_strided_slice %5 {offsets = [0, 8], sizes = [8, 8], strides = [1, 1]} : vector<8x32xbf16> to vector<8x8xbf16>
    "tpu.trace_start"() <{level = 10 : i32, message = "qd,kd->qk"}> : () -> ()
    %cst_11 = arith.constant dense<0.000000e+00> : vector<6x8xf32>
    %25 = tpu.matmul %22, %23, %cst_11 {dimension_numbers = #tpu.dot_dimension_numbers<[1], [1], [0], [0], [0, 0, 1, 0], [], []>} : vector<6x8xbf16>, vector<8x8xbf16>, vector<6x8xf32> -> vector<6x8xf32>
    "tpu.trace_stop"() : () -> ()
    %cst_12 = arith.constant dense<0xFF800000> : vector<6xf32>
    %26 = vector.multi_reduction <maximumf>, %25, %cst_12 [1] : vector<6x8xf32> to vector<6xf32>
    %27 = vector.shape_cast %26 : vector<6xf32> to vector<6x1xf32>
    %28 = vector.broadcast %27 : vector<6x1xf32> to vector<6x8xf32>
    %29 = arith.subf %25, %28 : vector<6x8xf32>
    %30 = math.exp %29 : vector<6x8xf32>
    %cst_13 = arith.constant dense<0.000000e+00> : vector<6xf32>
    %31 = vector.multi_reduction <add>, %30, %cst_13 [1] : vector<6x8xf32> to vector<6xf32>
    %32 = vector.shape_cast %31 : vector<6xf32> to vector<6x1xf32>
    %33 = arith.truncf %30 : vector<6x8xf32> to vector<6x8xbf16>
    "tpu.trace_start"() <{level = 10 : i32, message = "qk,kd->qd"}> : () -> ()
    %cst_14 = arith.constant dense<0.000000e+00> : vector<6x8xf32>
    %34 = tpu.matmul %33, %24, %cst_14 {dimension_numbers = #tpu.dot_dimension_numbers<[1], [0], [0], [1], [0, 0, 1, 1], [], []>} : vector<6x8xbf16>, vector<8x8xbf16>, vector<6x8xf32> -> vector<6x8xf32>
    "tpu.trace_stop"() : () -> ()
    %35 = tpu.reciprocal %32 {approx = true} : vector<6x1xf32> -> vector<6x1xf32>
    %36 = vector.broadcast %35 : vector<6x1xf32> to vector<6x8xf32>
    %37 = arith.mulf %34, %36 : vector<6x8xf32>
    %38 = vector.extract_strided_slice %1 {offsets = [0, 16], sizes = [6, 8], strides = [1, 1]} : vector<6x32xbf16> to vector<6x8xbf16>
    %39 = vector.extract_strided_slice %3 {offsets = [0, 16], sizes = [8, 8], strides = [1, 1]} : vector<8x32xbf16> to vector<8x8xbf16>
    %40 = vector.extract_strided_slice %5 {offsets = [0, 16], sizes = [8, 8], strides = [1, 1]} : vector<8x32xbf16> to vector<8x8xbf16>
    "tpu.trace_start"() <{level = 10 : i32, message = "qd,kd->qk"}> : () -> ()
    %cst_15 = arith.constant dense<0.000000e+00> : vector<6x8xf32>
    %41 = tpu.matmul %38, %39, %cst_15 {dimension_numbers = #tpu.dot_dimension_numbers<[1], [1], [0], [0], [0, 0, 1, 0], [], []>} : vector<6x8xbf16>, vector<8x8xbf16>, vector<6x8xf32> -> vector<6x8xf32>
    "tpu.trace_stop"() : () -> ()
    %cst_16 = arith.constant dense<0xFF800000> : vector<6xf32>
    %42 = vector.multi_reduction <maximumf>, %41, %cst_16 [1] : vector<6x8xf32> to vector<6xf32>
    %43 = vector.shape_cast %42 : vector<6xf32> to vector<6x1xf32>
    %44 = vector.broadcast %43 : vector<6x1xf32> to vector<6x8xf32>
    %45 = arith.subf %41, %44 : vector<6x8xf32>
    %46 = math.exp %45 : vector<6x8xf32>
    %cst_17 = arith.constant dense<0.000000e+00> : vector<6xf32>
    %47 = vector.multi_reduction <add>, %46, %cst_17 [1] : vector<6x8xf32> to vector<6xf32>
    %48 = vector.shape_cast %47 : vector<6xf32> to vector<6x1xf32>
    %49 = arith.truncf %46 : vector<6x8xf32> to vector<6x8xbf16>
    "tpu.trace_start"() <{level = 10 : i32, message = "qk,kd->qd"}> : () -> ()
    %cst_18 = arith.constant dense<0.000000e+00> : vector<6x8xf32>
    %50 = tpu.matmul %49, %40, %cst_18 {dimension_numbers = #tpu.dot_dimension_numbers<[1], [0], [0], [1], [0, 0, 1, 1], [], []>} : vector<6x8xbf16>, vector<8x8xbf16>, vector<6x8xf32> -> vector<6x8xf32>
    "tpu.trace_stop"() : () -> ()
    %51 = tpu.reciprocal %48 {approx = true} : vector<6x1xf32> -> vector<6x1xf32>
    %52 = vector.broadcast %51 : vector<6x1xf32> to vector<6x8xf32>
    %53 = arith.mulf %50, %52 : vector<6x8xf32>
    %54 = vector.extract_strided_slice %1 {offsets = [0, 24], sizes = [6, 8], strides = [1, 1]} : vector<6x32xbf16> to vector<6x8xbf16>
    %55 = vector.extract_strided_slice %3 {offsets = [0, 24], sizes = [8, 8], strides = [1, 1]} : vector<8x32xbf16> to vector<8x8xbf16>
    %56 = vector.extract_strided_slice %5 {offsets = [0, 24], sizes = [8, 8], strides = [1, 1]} : vector<8x32xbf16> to vector<8x8xbf16>
    "tpu.trace_start"() <{level = 10 : i32, message = "qd,kd->qk"}> : () -> ()
    %cst_19 = arith.constant dense<0.000000e+00> : vector<6x8xf32>
    %57 = tpu.matmul %54, %55, %cst_19 {dimension_numbers = #tpu.dot_dimension_numbers<[1], [1], [0], [0], [0, 0, 1, 0], [], []>} : vector<6x8xbf16>, vector<8x8xbf16>, vector<6x8xf32> -> vector<6x8xf32>
    "tpu.trace_stop"() : () -> ()
    %cst_20 = arith.constant dense<0xFF800000> : vector<6xf32>
    %58 = vector.multi_reduction <maximumf>, %57, %cst_20 [1] : vector<6x8xf32> to vector<6xf32>
    %59 = vector.shape_cast %58 : vector<6xf32> to vector<6x1xf32>
    %60 = vector.broadcast %59 : vector<6x1xf32> to vector<6x8xf32>
    %61 = arith.subf %57, %60 : vector<6x8xf32>
    %62 = math.exp %61 : vector<6x8xf32>
    %cst_21 = arith.constant dense<0.000000e+00> : vector<6xf32>
    %63 = vector.multi_reduction <add>, %62, %cst_21 [1] : vector<6x8xf32> to vector<6xf32>
    %64 = vector.shape_cast %63 : vector<6xf32> to vector<6x1xf32>
    %65 = arith.truncf %62 : vector<6x8xf32> to vector<6x8xbf16>
    "tpu.trace_start"() <{level = 10 : i32, message = "qk,kd->qd"}> : () -> ()
    %cst_22 = arith.constant dense<0.000000e+00> : vector<6x8xf32>
    %66 = tpu.matmul %65, %56, %cst_22 {dimension_numbers = #tpu.dot_dimension_numbers<[1], [0], [0], [1], [0, 0, 1, 1], [], []>} : vector<6x8xbf16>, vector<8x8xbf16>, vector<6x8xf32> -> vector<6x8xf32>
    "tpu.trace_stop"() : () -> ()
    %67 = tpu.reciprocal %64 {approx = true} : vector<6x1xf32> -> vector<6x1xf32>
    %68 = vector.broadcast %67 : vector<6x1xf32> to vector<6x8xf32>
    %69 = arith.mulf %66, %68 : vector<6x8xf32>
    %70 = tpu.concatenate %21, %37, %53, %69 in 1 : vector<6x8xf32>, vector<6x8xf32>, vector<6x8xf32>, vector<6x8xf32> -> vector<6x32xf32>
    %71 = arith.truncf %70 : vector<6x32xf32> to vector<6x32xbf16>
    %c0_23 = arith.constant 0 : index
    %c0_24 = arith.constant 0 : index
    %c0_25 = arith.constant 0 : index
    %72 = vector.load %arg4[%c0_23, %c0_24, %c0_25] : memref<1x6x32xbf16, #tpu.memory_space<vmem>>, vector<1x6x32xbf16>
    %73 = vector.shape_cast %72 : vector<1x6x32xbf16> to vector<6x32xbf16>
    %74 = vector.shape_cast %71 : vector<6x32xbf16> to vector<1x6x32xbf16>
    tpu.vector_store %arg4[%c0_23, %c0_24, %c0_25], %74 {strides = array<i32>} : memref<1x6x32xbf16, #tpu.memory_space<vmem>>, vector<1x6x32xbf16>,
    return
  }
  func.func @transform_0(%arg0: i32) -> (i32, i32, i32) {
    %c0_i32 = arith.constant 0 : i32
    %c0_i32_0 = arith.constant 0 : i32
    %c0_i32_1 = arith.constant 0 : i32
    return %arg0, %c0_i32, %c0_i32_0 : i32, i32, i32
  }
  func.func @transform_1(%arg0: i32) -> (i32, i32, i32) {
    %c0_i32 = arith.constant 0 : i32
    %c0_i32_0 = arith.constant 0 : i32
    %c0_i32_1 = arith.constant 0 : i32
    return %arg0, %c0_i32, %c0_i32_0 : i32, i32, i32
  }
  func.func @transform_2(%arg0: i32) -> (i32, i32, i32) {
    %c0_i32 = arith.constant 0 : i32
    %c0_i32_0 = arith.constant 0 : i32
    %c0_i32_1 = arith.constant 0 : i32
    return %arg0, %c0_i32, %c0_i32_0 : i32, i32, i32
  }
  func.func @transform_3(%arg0: i32) -> (i32, i32, i32) {
    %c0_i32 = arith.constant 0 : i32
    %c0_i32_0 = arith.constant 0 : i32
    %c0_i32_1 = arith.constant 0 : i32
    return %arg0, %c0_i32, %c0_i32_0 : i32, i32, i32
  }
}

module attributes {stable_mosaic.version = 11 : i64} {
  func.func @_matmul_kernel(%arg0: i32, %arg1: i32, %arg2: i32, %arg3: memref<16x32xbf16, #tpu.memory_space<vmem>>, %arg4: memref<32x128xbf16, #tpu.memory_space<vmem>>, %arg5: memref<1x128xf32, #tpu.memory_space<vmem>>, %arg6: memref<16x128xf32, #tpu.memory_space<vmem>>, %arg7: memref<16x128xf32, #tpu.memory_space<vmem>>) attributes {dimension_semantics = [#tpu.dimension_semantics<parallel>, #tpu.dimension_semantics<parallel>, #tpu.dimension_semantics<arbitrary>], iteration_bounds = array<i64: 1, 1, 1>, scalar_prefetch = 0 : i64, scratch_operands = 1 : i64, tpu.core_type = #tpu.core_type<tc>, window_params = [{transform_indices = @transform_0, window_bounds = array<i64: 16, 32>}, {transform_indices = @transform_1, window_bounds = array<i64: 32, 128>}, {transform_indices = @transform_2, window_bounds = array<i64: 1, 128>}, {transform_indices = @transform_3, window_bounds = array<i64: 16, 128>}]} {
    %c0_i32 = arith.constant 0 : i32
    %0 = arith.cmpi eq, %arg2, %c0_i32 : i32
    %1 = arith.extui %0 : i1 to i32
    %c0_i32_0 = arith.constant 0 : i32
    %2 = arith.cmpi ne, %1, %c0_i32_0 : i32
    scf.if %2 {
      %cst_10 = arith.constant 0.000000e+00 : f32
      %12 = vector.broadcast %cst_10 : f32 to vector<16x128xf32>
      %c0_11 = arith.constant 0 : index
      %c0_12 = arith.constant 0 : index
      %13 = vector.load %arg7[%c0_11, %c0_12] : memref<16x128xf32, #tpu.memory_space<vmem>>, vector<16x128xf32>
      tpu.vector_store %arg7[%c0_11, %c0_12], %12 {strides = array<i32>} : memref<16x128xf32, #tpu.memory_space<vmem>>, vector<16x128xf32>,
    } else {
    }
    %c0 = arith.constant 0 : index
    %c0_1 = arith.constant 0 : index
    %3 = vector.load %arg7[%c0, %c0_1] : memref<16x128xf32, #tpu.memory_space<vmem>>, vector<16x128xf32>
    %c0_2 = arith.constant 0 : index
    %c0_3 = arith.constant 0 : index
    %4 = vector.load %arg3[%c0_2, %c0_3] : memref<16x32xbf16, #tpu.memory_space<vmem>>, vector<16x32xbf16>
    %c0_4 = arith.constant 0 : index
    %c0_5 = arith.constant 0 : index
    %5 = vector.load %arg4[%c0_4, %c0_5] : memref<32x128xbf16, #tpu.memory_space<vmem>>, vector<32x128xbf16>
    %cst = arith.constant dense<0.000000e+00> : vector<16x128xf32>
    %6 = tpu.matmul %4, %5, %cst {dimension_numbers = #tpu.dot_dimension_numbers<[1], [0], [0], [1], [0, 0, 1, 1], [], []>} : vector<16x32xbf16>, vector<32x128xbf16>, vector<16x128xf32> -> vector<16x128xf32>
    %7 = arith.addf %3, %6 : vector<16x128xf32>
    %c0_6 = arith.constant 0 : index
    %c0_7 = arith.constant 0 : index
    %8 = vector.load %arg7[%c0_6, %c0_7] : memref<16x128xf32, #tpu.memory_space<vmem>>, vector<16x128xf32>
    tpu.vector_store %arg7[%c0_6, %c0_7], %7 {strides = array<i32>} : memref<16x128xf32, #tpu.memory_space<vmem>>, vector<16x128xf32>,
    %c0_i32_8 = arith.constant 0 : i32
    %9 = arith.cmpi eq, %arg2, %c0_i32_8 : i32
    %10 = arith.extui %9 : i1 to i32
    %c0_i32_9 = arith.constant 0 : i32
    %11 = arith.cmpi ne, %10, %c0_i32_9 : i32
    scf.if %11 {
      %c0_10 = arith.constant 0 : index
      %c0_11 = arith.constant 0 : index
      %12 = vector.load %arg7[%c0_10, %c0_11] : memref<16x128xf32, #tpu.memory_space<vmem>>, vector<16x128xf32>
      %c0_12 = arith.constant 0 : index
      %c0_13 = arith.constant 0 : index
      %13 = vector.load %arg5[%c0_12, %c0_13] : memref<1x128xf32, #tpu.memory_space<vmem>>, vector<1x128xf32>
      %14 = vector.broadcast %13 : vector<1x128xf32> to vector<16x128xf32>
      %15 = arith.addf %12, %14 : vector<16x128xf32>
      %c0_14 = arith.constant 0 : index
      %c0_15 = arith.constant 0 : index
      %16 = vector.load %arg6[%c0_14, %c0_15] : memref<16x128xf32, #tpu.memory_space<vmem>>, vector<16x128xf32>
      tpu.vector_store %arg6[%c0_14, %c0_15], %15 {strides = array<i32>} : memref<16x128xf32, #tpu.memory_space<vmem>>, vector<16x128xf32>,
    } else {
    }
    return
  }
  func.func @transform_0(%arg0: i32, %arg1: i32, %arg2: i32) -> (i32, i32) {
    %c0_i32 = arith.constant 0 : i32
    return %arg0, %arg2 : i32, i32
  }
  func.func @transform_1(%arg0: i32, %arg1: i32, %arg2: i32) -> (i32, i32) {
    %c0_i32 = arith.constant 0 : i32
    return %arg2, %arg1 : i32, i32
  }
  func.func @transform_2(%arg0: i32, %arg1: i32, %arg2: i32) -> (i32, i32) {
    %c0_i32 = arith.constant 0 : i32
    %c0_i32_0 = arith.constant 0 : i32
    return %c0_i32, %arg1 : i32, i32
  }
  func.func @transform_3(%arg0: i32, %arg1: i32, %arg2: i32) -> (i32, i32) {
    %c0_i32 = arith.constant 0 : i32
    return %arg0, %arg1 : i32, i32
  }
}

</mosaic_0001>

<llo_original>
// kernel: _lambda_.42
$region0: #{_lambda_.42}
  #allocation0 [shape = 'u32[]', space=smem, size = 0x4, offset = 0x4, fixed_abs, tag = 'smem constant byte address 0x4 - core index']
  #allocation1 [shape = 'u32[72,128]{1,0:T(1,128)}', space=vmem, size = 0x9000, scoped, tag = 'internal scratch']
  #allocation2 [shape = 'f32[16,128]{1,0:T(8,128)}', space=vmem, size = 0x2000, scoped, tag = 'scratch operand']
  %s0 = inlined_call_operand.vmem [shape: bf16[16,32], index: 0, kind: input, shape index: {}]
  %s1 = inlined_call_operand.vmem [shape: bf16[32,128], index: 1, kind: input, shape index: {}]
  %s2 = inlined_call_operand.vmem [shape: f32[1,128], index: 2, kind: input, shape index: {}]
  %s3 = inlined_call_operand.vmem [shape: bf16[16,128], index: 3, kind: output, shape index: {}]
  %s4 = sld [smem:[#allocation0]]
  $region30: #{_lambda_.42} parent=0
    _
  %s6 = ssub.s32 1, %s4
  %s7 = scalar_select 0, %s6, %s4
  // Predicated region
  $region2: #{_lambda_.42} parent=0 // pred_check
    _
  $region3: #{_lambda_.42} parent=0 // pred_check_branch
    %9 = sbr.rel (0) target = $region5
  $region4: #{_lambda_.42} parent=0 // pred_region
    _
  $region5: #{_lambda_.42} parent=0 // pred_fallthru
    _
  // Predicated region
  $region6: #{_lambda_.42} parent=0 // pred_check
    _
  $region7: #{_lambda_.42} parent=0 // pred_check_branch
    %11 = sbr.rel (0) target = $region9
  $region8: #{_lambda_.42} parent=0 // pred_region
    _
  $region9: #{_lambda_.42} parent=0 // pred_fallthru
    _
  // Predicated region
  $region10: #{_lambda_.42} parent=0 // pred_check
    _
  $region11: #{_lambda_.42} parent=0 // pred_check_branch
    %13 = sbr.rel (0) target = $region13
  $region12: #{_lambda_.42} parent=0 // pred_region
    _
  $region13: #{_lambda_.42} parent=0 // pred_fallthru
    _
  %p15 = scmp.eq.s32.totalorder 0, 0
  // Predicated region
  $region14: #{_lambda_.42} parent=0 // pred_check
    %p16 = pneg %p15
  $region15: #{_lambda_.42} parent=0 // pred_check_branch
    %18 = sbr.rel (%p16) target = $region17
  $region16: #{_lambda_.42} parent=0 // pred_region
    %19 = vst [vmem:[#allocation2] sm:$0xff] 0.0
    %20 = vst [vmem:[#allocation2 + $0x8] sm:$0xff] 0.0
  $region17: #{_lambda_.42} parent=0 // pred_fallthru
    _
  %v21 = vld [vmem:[#allocation2] sm:$0xff]
  %v22 = vld [vmem:[#allocation2 + $0x8] sm:$0xff]
  %v23 = vld [vmem:[%s0] sm:$0xf]
  %v24 = vld [vmem:[%s0 + $0x4] sm:$0xf]
  %v25 = vld [vmem:[%s1] sm:$0xf]
  %v26 = vld [vmem:[%s1 + $0x4] sm:$0xf]
  %v27 = vld [vmem:[%s1 + $0x8] sm:$0xf]
  %v28 = vld [vmem:[%s1 + $0xc] sm:$0xf]
  %v31 = vunpack.c.l.b16 %v23
  %v32 = vunpack.c.l.b16 %v24
  %v33 = vpack.c.b16 %v32, %v31
  %v38 = vunpack.c.l.b16 %v25
  %v39 = vunpack.c.l.b16 %v26
  %v40 = vunpack.c.l.b16 %v27
  %v41 = vunpack.c.l.b16 %v28
  %v42 = vpack.c.b16 %v39, %v38
  %v43 = vpack.c.b16 %v41, %v40
  %vm46 = vcmask 261120
  %v48 = vsel %vm46, %v33, 0
  %50 = vmatpush.bf16.msra.mxu0 0
  %51 = vmatpush.bf16.msra.mxu0 0
  %52 = vmatpush.bf16.msra.mxu0 0
  %53 = vmatpush.bf16.msra.mxu0 0
  %54 = vmatpush.bf16.msra.mxu0 0
  %55 = vmatpush.bf16.msra.mxu0 0
  %56 = vmatpush.bf16.msra.mxu0 %v43
  %57 = vmatpush.bf16.msra.mxu0 %v42
  %58 = vmatmul.bf16.gmra.mxu0 %v48
  %v59 = vpop.f32.mrf.mxu0
  %v60 = vadd.f32 0.0, %v59
  %v61 = vpop.f32.mrf.mxu0
  %v62 = vadd.f32 0.0, %v61
  %63 = vdwg.mxu0
  %v64 = vadd.f32 %v21, %v60
  %v65 = vadd.f32 %v22, %v62
  %66 = vst [vmem:[#allocation2] sm:$0xff] %v64
  %67 = vst [vmem:[#allocation2 + $0x8] sm:$0xff] %v65
  // Predicated region
  $region18: #{_lambda_.42} parent=0 // pred_check
    %p68 = pneg %p15
  $region19: #{_lambda_.42} parent=0 // pred_check_branch
    %70 = sbr.rel (%p68) target = $region21
  $region20: #{_lambda_.42} parent=0 // pred_region
    %v71 = vld [vmem:[#allocation2] sm:$0xff]
    %v72 = vld [vmem:[#allocation2 + $0x8] sm:$0xff]
    %v73 = vld [vmem:[%s2] sm:$0x1]
    %v75 = vperm.slane %v73, 0
    %v77 = vadd.f32 %v71, %v75
    %v78 = vadd.f32 %v72, %v75
    %v79 = vpack.c.bf16 %v77, %v77
    %v80 = vpack.c.bf16 %v78, %v78
    %81 = vst [vmem:[%s3] sm:$0xf] %v79
    %82 = vst [vmem:[%s3 + $0x4] sm:$0xf] %v80
  $region21: #{_lambda_.42} parent=0 // pred_fallthru
    _
  // Predicated region
  $region22: #{_lambda_.42} parent=0 // pred_check
    _
  $region23: #{_lambda_.42} parent=0 // pred_check_branch
    %84 = sbr.rel (0) target = $region25
  $region24: #{_lambda_.42} parent=0 // pred_region
    _
  $region25: #{_lambda_.42} parent=0 // pred_fallthru
    _
  // Predicated region
  $region26: #{_lambda_.42} parent=0 // pred_check
    _
  $region27: #{_lambda_.42} parent=0 // pred_check_branch
    %86 = sbr.rel (0) target = $region29
  $region28: #{_lambda_.42} parent=0 // pred_region
    _
  $region29: #{_lambda_.42} parent=0 // pred_fallthru
    _

// kernel: _lambda_.44
$region0: #{_lambda_.44}
  #allocation0 [shape = 'u32[]', space=smem, size = 0x4, offset = 0x4, fixed_abs, tag = 'smem constant byte address 0x4 - core index']
  #allocation1 [shape = 'u32[72,128]{1,0:T(1,128)}', space=vmem, size = 0x9000, scoped, tag = 'internal scratch']
  #allocation2 [shape = 'f32[16,128]{1,0:T(8,128)}', space=vmem, size = 0x2000, scoped, tag = 'scratch operand']
  %s0 = inlined_call_operand.vmem [shape: bf16[16,32], index: 0, kind: input, shape index: {}]
  %s1 = inlined_call_operand.vmem [shape: bf16[32,128], index: 1, kind: input, shape index: {}]
  %s2 = inlined_call_operand.vmem [shape: f32[1,128], index: 2, kind: input, shape index: {}]
  %s3 = inlined_call_operand.vmem [shape: bf16[16,32], index: 3, kind: input, shape index: {}]
  %s4 = inlined_call_operand.vmem [shape: f32[1,32], index: 4, kind: input, shape index: {}]
  %s5 = inlined_call_operand.vmem [shape: f32[1,32], index: 5, kind: input, shape index: {}]
  %s6 = inlined_call_operand.vmem [shape: bf16[16,32], index: 6, kind: output, shape index: {}]
  %s7 = sld [smem:[#allocation0]]
  $region42: #{_lambda_.44} parent=0
    _
  %s9 = ssub.s32 1, %s7
  %s10 = scalar_select 0, %s9, %s7
  // Predicated region
  $region2: #{_lambda_.44} parent=0 // pred_check
    _
  $region3: #{_lambda_.44} parent=0 // pred_check_branch
    %12 = sbr.rel (0) target = $region5
  $region4: #{_lambda_.44} parent=0 // pred_region
    _
  $region5: #{_lambda_.44} parent=0 // pred_fallthru
    _
  // Predicated region
  $region6: #{_lambda_.44} parent=0 // pred_check
    _
  $region7: #{_lambda_.44} parent=0 // pred_check_branch
    %14 = sbr.rel (0) target = $region9
  $region8: #{_lambda_.44} parent=0 // pred_region
    _
  $region9: #{_lambda_.44} parent=0 // pred_fallthru
    _
  // Predicated region
  $region10: #{_lambda_.44} parent=0 // pred_check
    _
  $region11: #{_lambda_.44} parent=0 // pred_check_branch
    %16 = sbr.rel (0) target = $region13
  $region12: #{_lambda_.44} parent=0 // pred_region
    _
  $region13: #{_lambda_.44} parent=0 // pred_fallthru
    _
  // Predicated region
  $region14: #{_lambda_.44} parent=0 // pred_check
    _
  $region15: #{_lambda_.44} parent=0 // pred_check_branch
    %18 = sbr.rel (0) target = $region17
  $region16: #{_lambda_.44} parent=0 // pred_region
    _
  $region17: #{_lambda_.44} parent=0 // pred_fallthru
    _
  // Predicated region
  $region18: #{_lambda_.44} parent=0 // pred_check
    _
  $region19: #{_lambda_.44} parent=0 // pred_check_branch
    %20 = sbr.rel (0) target = $region21
  $region20: #{_lambda_.44} parent=0 // pred_region
    _
  $region21: #{_lambda_.44} parent=0 // pred_fallthru
    _
  // Predicated region
  $region22: #{_lambda_.44} parent=0 // pred_check
    _
  $region23: #{_lambda_.44} parent=0 // pred_check_branch
    %22 = sbr.rel (0) target = $region25
  $region24: #{_lambda_.44} parent=0 // pred_region
    _
  $region25: #{_lambda_.44} parent=0 // pred_fallthru
    _
  %p24 = scmp.eq.s32.totalorder 0, 0
  // Predicated region
  $region26: #{_lambda_.44} parent=0 // pred_check
    %p25 = pneg %p24
  $region27: #{_lambda_.44} parent=0 // pred_check_branch
    %27 = sbr.rel (%p25) target = $region29
  $region28: #{_lambda_.44} parent=0 // pred_region
    %28 = vst [vmem:[#allocation2] sm:$0xff] 0.0
    %29 = vst [vmem:[#allocation2 + $0x8] sm:$0xff] 0.0
  $region29: #{_lambda_.44} parent=0 // pred_fallthru
    _
  %v30 = vld [vmem:[#allocation2] sm:$0xff]
  %v31 = vld [vmem:[#allocation2 + $0x8] sm:$0xff]
  %v32 = vld [vmem:[%s0] sm:$0xf]
  %v33 = vld [vmem:[%s0 + $0x4] sm:$0xf]
  %v34 = vld [vmem:[%s1] sm:$0xf]
  %v35 = vld [vmem:[%s1 + $0x4] sm:$0xf]
  %v36 = vld [vmem:[%s1 + $0x8] sm:$0xf]
  %v37 = vld [vmem:[%s1 + $0xc] sm:$0xf]
  %v40 = vunpack.c.l.b16 %v32
  %v41 = vunpack.c.l.b16 %v33
  %v42 = vpack.c.b16 %v41, %v40
  %v47 = vunpack.c.l.b16 %v34
  %v48 = vunpack.c.l.b16 %v35
  %v49 = vunpack.c.l.b16 %v36
  %v50 = vunpack.c.l.b16 %v37
  %v51 = vpack.c.b16 %v48, %v47
  %v52 = vpack.c.b16 %v50, %v49
  %vm55 = vcmask 261120
  %v57 = vsel %vm55, %v42, 0
  %59 = vmatpush.bf16.msra.mxu0 0
  %60 = vmatpush.bf16.msra.mxu0 0
  %61 = vmatpush.bf16.msra.mxu0 0
  %62 = vmatpush.bf16.msra.mxu0 0
  %63 = vmatpush.bf16.msra.mxu0 0
  %64 = vmatpush.bf16.msra.mxu0 0
  %65 = vmatpush.bf16.msra.mxu0 %v52
  %66 = vmatpush.bf16.msra.mxu0 %v51
  %67 = vmatmul.bf16.gmra.mxu0 %v57
  %v68 = vpop.f32.mrf.mxu0
  %v69 = vadd.f32 0.0, %v68
  %v70 = vpop.f32.mrf.mxu0
  %v71 = vadd.f32 0.0, %v70
  %72 = vdwg.mxu0
  %v73 = vadd.f32 %v30, %v69
  %v74 = vadd.f32 %v31, %v71
  %75 = vst [vmem:[#allocation2] sm:$0xff] %v73
  %76 = vst [vmem:[#allocation2 + $0x8] sm:$0xff] %v74
  // Predicated region
  $region30: #{_lambda_.44} parent=0 // pred_check
    %p77 = pneg %p24
  $region31: #{_lambda_.44} parent=0 // pred_check_branch
    %79 = sbr.rel (%p77) target = $region33
  $region32: #{_lambda_.44} parent=0 // pred_region
    %v80 = vld [vmem:[#allocation2] sm:$0xff]
    %v81 = vld [vmem:[#allocation2 + $0x8] sm:$0xff]
    %v82 = vld [vmem:[%s2] sm:$0x1]
    %v84 = vperm.slane %v82, 0
    %v86 = vadd.f32 %v80, %v84
    %v87 = vadd.f32 %v81, %v84
    %v88 = vld [vmem:[%s3] sm:$0xf]
    %v89 = vld [vmem:[%s3 + $0x4] sm:$0xf]
    %v90 = vunpack.c.l.bf16 %v88
    %v91 = vunpack.c.l.bf16 %v89
    %v92 = vadd.f32 %v86, %v90
    %v93 = vadd.f32 %v87, %v91
    %v94 = vsel %vm55, %v92, 0.0
    %95 = vadd.xlane.f32.xlu0 %v94
    %v96 = vpop.xlane.xlu0 %95
    %v97 = vsel %vm55, %v93, 0.0
    %98 = vadd.xlane.f32.xlu0 %v97
    %v99 = vpop.xlane.xlu0 %98
    %v100 = vrcp.pop 32.0
    %v101 = vmul.f32 32.0, %v100
    %v102 = vsub.f32 1.0, %v101
    %v103 = vmul.f32 %v100, %v102
    %v104 = vadd.f32 %v100, %v103
    %vm105 = vweird.f32 %v100
    %v106 = vsel %vm105, %v100, %v104
    %v107 = vmul.f32 %v96, %v106
    %v108 = vmul.f32 %v99, %v106
    %v109 = vsub.f32 %v92, %v107
    %v110 = vsub.f32 %v93, %v108
    %v111 = vmul.f32 %v109, %v109
    %v112 = vmul.f32 %v110, %v110
    %v113 = vsel %vm55, %v111, 0.0
    %114 = vadd.xlane.f32.xlu0 %v113
    %v115 = vpop.xlane.xlu0 %114
    %v116 = vsel %vm55, %v112, 0.0
    %117 = vadd.xlane.f32.xlu0 %v116
    %v118 = vpop.xlane.xlu0 %117
    %v119 = vmul.f32 %v115, %v106
    %v120 = vmul.f32 %v118, %v106
    %v121 = vadd.f32 %v119, 1e-05
    %v122 = vadd.f32 %v120, 1e-05
    %v123 = vrsqrt.pop %v121
    %v124 = vmul.f32 %v123, %v121
    %v125 = vmul.f32 %v124, %v123
    %v126 = vmul.f32 0.5, %v125
    %v127 = vsub.f32 1.5, %v126
    %v128 = vmul.f32 %v123, %v127
    %vm129 = vweird.f32 %v121
    %vm130 = vweird.f32 %v123
    %vm131 = vmor %vm129, %vm130
    %v132 = vsel %vm131, %v123, %v128
    %v133 = vrsqrt.pop %v122
    %v134 = vmul.f32 %v133, %v122
    %v135 = vmul.f32 %v134, %v133
    %v136 = vmul.f32 0.5, %v135
    %v137 = vsub.f32 1.5, %v136
    %v138 = vmul.f32 %v133, %v137
    %vm139 = vweird.f32 %v122
    %vm140 = vweird.f32 %v133
    %vm141 = vmor %vm139, %vm140
    %v142 = vsel %vm141, %v133, %v138
    %v143 = vmul.f32 %v109, %v132
    %v144 = vmul.f32 %v110, %v142
    %v145 = vld [vmem:[%s4] sm:$0x1]
    %v147 = vperm.slane %v145, 0
    %v149 = vmul.f32 %v143, %v147
    %v150 = vmul.f32 %v144, %v147
    %v151 = vld [vmem:[%s5] sm:$0x1]
    %v153 = vperm.slane %v151, 0
    %v155 = vadd.f32 %v149, %v153
    %v156 = vadd.f32 %v150, %v153
    %v157 = vpack.c.bf16 %v155, %v155
    %v158 = vpack.c.bf16 %v156, %v156
    %vm159 = vcmask 257024
    %160 = vst.msk [vmem:[%s6] sm:$0xf] %vm159, %v157
    %161 = vst.msk [vmem:[%s6 + $0x4] sm:$0xf] %vm159, %v158
  $region33: #{_lambda_.44} parent=0 // pred_fallthru
    _
  // Predicated region
  $region34: #{_lambda_.44} parent=0 // pred_check
    _
  $region35: #{_lambda_.44} parent=0 // pred_check_branch
    %163 = sbr.rel (0) target = $region37
  $region36: #{_lambda_.44} parent=0 // pred_region
    _
  $region37: #{_lambda_.44} parent=0 // pred_fallthru
    _
  // Predicated region
  $region38: #{_lambda_.44} parent=0 // pred_check
    _
  $region39: #{_lambda_.44} parent=0 // pred_check_branch
    %165 = sbr.rel (0) target = $region41
  $region40: #{_lambda_.44} parent=0 // pred_region
    _
  $region41: #{_lambda_.44} parent=0 // pred_fallthru
    _

// kernel: _lambda_.43
$region0: #{_lambda_.43}
  #allocation0 [shape = 'u32[]', space=smem, size = 0x4, offset = 0x4, fixed_abs, tag = 'smem constant byte address 0x4 - core index']
  #allocation1 [shape = 'u32[72,128]{1,0:T(1,128)}', space=vmem, size = 0x9000, scoped, tag = 'internal scratch']
  %s0 = inlined_call_operand.vmem [shape: bf16[2,6,32], index: 0, kind: input, shape index: {}]
  %s1 = inlined_call_operand.vmem [shape: bf16[2,6,32], index: 1, kind: input, shape index: {}]
  %s2 = inlined_call_operand.vmem [shape: bf16[2,6,32], index: 2, kind: input, shape index: {}]
  %s3 = inlined_call_operand.vmem [shape: bf16[2,6,32], index: 3, kind: output, shape index: {}]
  %s4 = sld [smem:[#allocation0]]
  $region45: #{_lambda_.43} parent=0
    _
  %s6 = ssub.s32 1, %s4
  %s7 = scalar_select 0, %s6, %s4
  loop: start=0, step=1, limit=4
  $region2: #{_lambda_.43} parent=0 // loop_pre_header
    _
  $region3: #{_lambda_.43} parent=0 // loop_header
    %s9 = sphi 0, %s13
    %p10 = scmp.ge.s32.totalorder %s9, 4
    %s19 = sphi 0, %s21
    %s22 = sphi 0, %s19
    %s23 = sphi 0, %s22
    %s39 = sphi 0, %s23
    %s45 = sphi 0, %s47
    %s48 = sphi 0, %s45
    %s49 = sphi 0, %s48
    %s65 = sphi 0, %s49
    %s71 = sphi 0, %s73
    %s74 = sphi 0, %s71
    %s75 = sphi 0, %s74
    %s91 = sphi 0, %s75
    %s97 = sphi 0, %s99
    %s100 = sphi 0, %s97
    %s101 = sphi 0, %s100
    %s117 = sphi 0, %s101
  $region4: #{_lambda_.43} parent=0 // loop_header_branch
    %12 = sbr.rel (%p10) target = $region8
  $region5: #{_lambda_.43} parent=0 // loop_body
    %s14 = ssub.s32 %s9, 1
    %s15 = ssub.s32 %s9, 2
    %s16 = sadd.s32 %s9, 1
    %s17 = ssub.s32 %s9, %s16
    %p18 = scmp.eq.s32.totalorder %s17, 0
    %s20 = sadd.s32 %s19, 1
    %s21 = scalar_select %p18, %s19, %s20
    %p24 = pneg %p18
    %p25 = scmp.eq.s32.totalorder %s9, 1
    %p26 = por %p24, %p25
    %p27 = scmp.ne.s32.totalorder %s19, %s22
    %p28 = scmp.eq.s32.totalorder %s9, 0
    %p29 = por %p27, %p28
    %p30 = scmp.ne.s32.totalorder %s19, %s22
    %p31 = scmp.eq.s32.totalorder %s14, 1
    %p32 = por %p30, %p31
    %p33 = scmp.ne.s32.totalorder %s22, %s23
    %p34 = scmp.eq.s32.totalorder %s14, 0
    %p35 = por %p33, %p34
    %p36 = scmp.ne.s32.totalorder %s22, %s23
    %p37 = scmp.eq.s32.totalorder %s15, 1
    %p38 = por %p36, %p37
    %p40 = scmp.ne.s32.totalorder %s23, %s39
    %p41 = scmp.eq.s32.totalorder %s15, 0
    %p42 = por %p40, %p41
    %s43 = ssub.s32 %s9, %s16
    %p44 = scmp.eq.s32.totalorder %s43, 0
    %s46 = sadd.s32 %s45, 1
    %s47 = scalar_select %p44, %s45, %s46
    %p50 = pneg %p44
    %p51 = scmp.eq.s32.totalorder %s9, 1
    %p52 = por %p50, %p51
    %p53 = scmp.ne.s32.totalorder %s45, %s48
    %p54 = scmp.eq.s32.totalorder %s9, 0
    %p55 = por %p53, %p54
    %p56 = scmp.ne.s32.totalorder %s45, %s48
    %p57 = scmp.eq.s32.totalorder %s14, 1
    %p58 = por %p56, %p57
    %p59 = scmp.ne.s32.totalorder %s48, %s49
    %p60 = scmp.eq.s32.totalorder %s14, 0
    %p61 = por %p59, %p60
    %p62 = scmp.ne.s32.totalorder %s48, %s49
    %p63 = scmp.eq.s32.totalorder %s15, 1
    %p64 = por %p62, %p63
    %p66 = scmp.ne.s32.totalorder %s49, %s65
    %p67 = scmp.eq.s32.totalorder %s15, 0
    %p68 = por %p66, %p67
    %s69 = ssub.s32 %s9, %s16
    %p70 = scmp.eq.s32.totalorder %s69, 0
    %s72 = sadd.s32 %s71, 1
    %s73 = scalar_select %p70, %s71, %s72
    %p76 = pneg %p70
    %p77 = scmp.eq.s32.totalorder %s9, 1
    %p78 = por %p76, %p77
    %p79 = scmp.ne.s32.totalorder %s71, %s74
    %p80 = scmp.eq.s32.totalorder %s9, 0
    %p81 = por %p79, %p80
    %p82 = scmp.ne.s32.totalorder %s71, %s74
    %p83 = scmp.eq.s32.totalorder %s14, 1
    %p84 = por %p82, %p83
    %p85 = scmp.ne.s32.totalorder %s74, %s75
    %p86 = scmp.eq.s32.totalorder %s14, 0
    %p87 = por %p85, %p86
    %p88 = scmp.ne.s32.totalorder %s74, %s75
    %p89 = scmp.eq.s32.totalorder %s15, 1
    %p90 = por %p88, %p89
    %p92 = scmp.ne.s32.totalorder %s75, %s91
    %p93 = scmp.eq.s32.totalorder %s15, 0
    %p94 = por %p92, %p93
    %s95 = ssub.s32 %s9, %s16
    %p96 = scmp.eq.s32.totalorder %s95, 0
    %s98 = sadd.s32 %s97, 1
    %s99 = scalar_select %p96, %s97, %s98
    %p102 = pneg %p96
    %p103 = scmp.eq.s32.totalorder %s9, 1
    %p104 = por %p102, %p103
    %p105 = scmp.ne.s32.totalorder %s97, %s100
    %p106 = scmp.eq.s32.totalorder %s9, 0
    %p107 = por %p105, %p106
    %p108 = scmp.ne.s32.totalorder %s97, %s100
    %p109 = scmp.eq.s32.totalorder %s14, 1
    %p110 = por %p108, %p109
    %p111 = scmp.ne.s32.totalorder %s100, %s101
    %p112 = scmp.eq.s32.totalorder %s14, 0
    %p113 = por %p111, %p112
    %p114 = scmp.ne.s32.totalorder %s100, %s101
    %p115 = scmp.eq.s32.totalorder %s15, 1
    %p116 = por %p114, %p115
    %p118 = scmp.ne.s32.totalorder %s101, %s117
    %p119 = scmp.eq.s32.totalorder %s15, 0
    %p120 = por %p118, %p119
    %p121 = scmp.le.s32.totalorder 1, %s9
    %p122 = scmp.lt.s32.totalorder %s9, 3
    %p123 = pnand %p121, %p122
    %p124 = pneg %p123
    // Predicated region
    $region9: #{_lambda_.43} parent=5 // pred_check
      _
    $region10: #{_lambda_.43} parent=5 // pred_check_branch
      %126 = sbr.rel (%p123) target = $region12
    $region11: #{_lambda_.43} parent=5 // pred_region
      %s127 = ssub.s32 %s9, 1
    $region12: #{_lambda_.43} parent=5 // pred_fallthru
      _
    %p128 = scmp.lt.s32.totalorder %s9, 2
    // Predicated region
    $region13: #{_lambda_.43} parent=5 // pred_check
      %p129 = pneg %p128
    $region14: #{_lambda_.43} parent=5 // pred_check_branch
      %131 = sbr.rel (%p129) target = $region16
    $region15: #{_lambda_.43} parent=5 // pred_region
      // Predicated region
      $region17: #{_lambda_.43} parent=15 // pred_check
        %p132 = pneg %p29
      $region18: #{_lambda_.43} parent=15 // pred_check_branch
        %134 = sbr.rel (%p132) target = $region20
      $region19: #{_lambda_.43} parent=15 // pred_region
        %p135 = scmp.lt.s32.totalorder %s9, 1
        %s136 = scalar_select %p135, %s9, 1
        %s137 = smul.addr %s136, 4
        %s138 = scalar_lea.vmem %s0, %s137
      $region20: #{_lambda_.43} parent=15 // pred_fallthru
        _
      // Predicated region
      $region21: #{_lambda_.43} parent=15 // pred_check
        %p139 = pneg %p55
      $region22: #{_lambda_.43} parent=15 // pred_check_branch
        %141 = sbr.rel (%p139) target = $region24
      $region23: #{_lambda_.43} parent=15 // pred_region
        %p142 = scmp.lt.s32.totalorder %s9, 1
        %s143 = scalar_select %p142, %s9, 1
        %s144 = smul.addr %s143, 4
        %s145 = scalar_lea.vmem %s1, %s144
      $region24: #{_lambda_.43} parent=15 // pred_fallthru
        _
      // Predicated region
      $region25: #{_lambda_.43} parent=15 // pred_check
        %p146 = pneg %p81
      $region26: #{_lambda_.43} parent=15 // pred_check_branch
        %148 = sbr.rel (%p146) target = $region28
      $region27: #{_lambda_.43} parent=15 // pred_region
        %p149 = scmp.lt.s32.totalorder %s9, 1
        %s150 = scalar_select %p149, %s9, 1
        %s151 = smul.addr %s150, 4
        %s152 = scalar_lea.vmem %s2, %s151
      $region28: #{_lambda_.43} parent=15 // pred_fallthru
        _
    $region16: #{_lambda_.43} parent=5 // pred_fallthru
      _
    %p153 = scmp.le.s32.totalorder 1, %s9
    %p154 = scmp.lt.s32.totalorder %s9, 3
    %p155 = pnand %p153, %p154
    %p156 = pneg %p155
    // Predicated region
    $region29: #{_lambda_.43} parent=5 // pred_check
      _
    $region30: #{_lambda_.43} parent=5 // pred_check_branch
      %158 = sbr.rel (%p155) target = $region32
    $region31: #{_lambda_.43} parent=5 // pred_region
      %s159 = ssub.s32 %s9, 1
      %p160 = scmp.lt.s32.totalorder %s14, 1
      %s161 = scalar_select %p160, %s14, 1
      %s162 = smul.addr %s161, 4
      %s163 = scalar_lea.vmem %s0, %s162
      %p164 = pneg %p35
      %p165 = pneg %p32
      %p166 = scmp.lt.s32.totalorder %s14, 1
      %s167 = scalar_select %p166, %s14, 1
      %s168 = smul.addr %s167, 4
      %s169 = scalar_lea.vmem %s1, %s168
      %p170 = pneg %p61
      %p171 = pneg %p58
      %p172 = scmp.lt.s32.totalorder %s14, 1
      %s173 = scalar_select %p172, %s14, 1
      %s174 = smul.addr %s173, 4
      %s175 = scalar_lea.vmem %s2, %s174
      %p176 = pneg %p87
      %p177 = pneg %p84
      %p178 = pneg %p113
      %p179 = pneg %p110
      %p180 = scmp.lt.s32.totalorder %s14, 1
      %s181 = scalar_select %p180, %s14, 1
      %s182 = smul.addr %s181, 4
      %s183 = scalar_lea.vmem %s3, %s182
      %p184 = scmp.lt.s32.totalorder %s14, 1
      %s185 = scalar_select %p184, %s14, 1
      %s186 = smul.addr %s185, 4
      %s187 = scalar_lea.vmem %s0, %s186
      %p188 = scmp.lt.s32.totalorder %s14, 1
      %s189 = scalar_select %p188, %s14, 1
      %s190 = smul.addr %s189, 4
      %s191 = scalar_lea.vmem %s1, %s190
      %p192 = scmp.lt.s32.totalorder %s14, 1
      %s193 = scalar_select %p192, %s14, 1
      %s194 = smul.addr %s193, 4
      %s195 = scalar_lea.vmem %s2, %s194
      %p196 = scmp.lt.s32.totalorder %s14, 1
      %s197 = scalar_select %p196, %s14, 1
      %s198 = smul.addr %s197, 4
      %s199 = scalar_lea.vmem %s3, %s198
      %v201 = vld [vmem:[%s187] sm:$0x7]
      %v202 = vld [vmem:[%s191] sm:$0x7]
      %v203 = vld [vmem:[%s195] sm:$0x7]
      %v204 = vlaneseq
      %v205 = vshrl.u32 %v204, 7
      %v206 = vlaneseq
      %v207 = vand.u32 %v206, 127
      %vm208 = vcmp.gt.s32.totalorder %v207, %v205
      %v209 = vsel %vm208, -1e+09, 0.0
      %vm210 = vcmask 64512
      %v212 = vsel %vm210, %v201, 0
      %v215 = vsel %vm210, %v202, 0
      %217 = vmatpush.bf16.xpose.msra.mxu0 0
      %218 = vmatpush.bf16.xpose.msra.mxu0 0
      %219 = vmatpush.bf16.xpose.msra.mxu0 0
      %220 = vmatpush.bf16.xpose.msra.mxu0 0
      %221 = vmatpush.bf16.xpose.msra.mxu0 0
      %222 = vmatpush.bf16.xpose.msra.mxu0 0
      %223 = vmatpush.bf16.xpose.msra.mxu0 0
      %224 = vmatpush.bf16.xpose.msra.mxu0 %v215
      %225 = vmatmul.bf16.gmra.mxu0 %v212
      %v226 = vpop.f32.mrf.mxu0
      %v227 = vadd.f32 %v209, %v226
      %v228 = vpop.f32.mrf.mxu0
      %229 = vdwg.mxu0
      %vm230 = vcmask 46080
      %v231 = vsel %vm230, %v227, -inf
      %232 = vmax.xlane.f32.xlu0 %v231
      %v233 = vpop.xlane.xlu0 %232
      %v234 = vsub.f32 %v227, %v233
      %v235 = vmul.f32 %v234, 1.442695
      %v236 = vpow.pop %v235
      %v237 = vsel %vm230, %v236, 0.0
      %238 = vadd.xlane.f32.xlu0 %v237
      %v239 = vpop.xlane.xlu0 %238
      %v240 = vpack.c.bf16 %v236, %v236
      %vm241 = vcmask 48128
      %v243 = vsel %vm241, %v240, 0
      %vm245 = vcmask 1042432
      %v247 = vsel %vm245, %v203, 0
      %249 = vmatpush.bf16.msra.mxu0 0
      %250 = vmatpush.bf16.msra.mxu0 0
      %251 = vmatpush.bf16.msra.mxu0 0
      %252 = vmatpush.bf16.msra.mxu0 0
      %253 = vmatpush.bf16.msra.mxu0 0
      %254 = vmatpush.bf16.msra.mxu0 0
      %255 = vmatpush.bf16.msra.mxu0 0
      %256 = vmatpush.bf16.msra.mxu0 %v247
      %257 = vmatmul.bf16.gmra.mxu0 %v243
      %v258 = vpop.f32.mrf.mxu0
      %v259 = vadd.f32 0.0, %v258
      %v260 = vpop.f32.mrf.mxu0
      %261 = vdwg.mxu0
      %v262 = vrcp.pop %v239
      %v263 = vmul.f32 %v259, %v262
      %v265 = vunpack.c.l.b16 %v201
      %v266 = vpack.c.b16 %v265, %v265
      %267 = vrot.lane.b32.xlu0 %v266, 120
      %v268 = vpop.permute.xlu0 %267
      %v270 = vunpack.c.l.b16 %v202
      %v271 = vpack.c.b16 %v270, %v270
      %272 = vrot.lane.b32.xlu0 %v271, 120
      %v273 = vpop.permute.xlu0 %272
      %v275 = vsel %vm210, %v268, 0
      %v278 = vsel %vm210, %v273, 0
      %280 = vmatpush.bf16.xpose.msra.mxu0 0
      %281 = vmatpush.bf16.xpose.msra.mxu0 0
      %282 = vmatpush.bf16.xpose.msra.mxu0 0
      %283 = vmatpush.bf16.xpose.msra.mxu0 0
      %284 = vmatpush.bf16.xpose.msra.mxu0 0
      %285 = vmatpush.bf16.xpose.msra.mxu0 0
      %286 = vmatpush.bf16.xpose.msra.mxu0 0
      %287 = vmatpush.bf16.xpose.msra.mxu0 %v278
      %288 = vmatmul.bf16.gmra.mxu0 %v275
      %v289 = vpop.f32.mrf.mxu0
      %v290 = vadd.f32 %v209, %v289
      %v291 = vpop.f32.mrf.mxu0
      %292 = vdwg.mxu0
      %v293 = vsel %vm230, %v290, -inf
      %294 = vmax.xlane.f32.xlu0 %v293
      %v295 = vpop.xlane.xlu0 %294
      %v296 = vsub.f32 %v290, %v295
      %v297 = vmul.f32 %v296, 1.442695
      %v298 = vpow.pop %v297
      %v299 = vsel %vm230, %v298, 0.0
      %300 = vadd.xlane.f32.xlu0 %v299
      %v301 = vpop.xlane.xlu0 %300
      %v302 = vpack.c.bf16 %v298, %v298
      %v304 = vunpack.c.l.b16 %v203
      %v305 = vpack.c.b16 %v304, %v304
      %306 = vrot.lane.b32.xlu0 %v305, 120
      %v307 = vpop.permute.xlu0 %306
      %v309 = vsel %vm241, %v302, 0
      %v312 = vsel %vm245, %v307, 0
      %314 = vmatpush.bf16.msra.mxu0 0
      %315 = vmatpush.bf16.msra.mxu0 0
      %316 = vmatpush.bf16.msra.mxu0 0
      %317 = vmatpush.bf16.msra.mxu0 0
      %318 = vmatpush.bf16.msra.mxu0 0
      %319 = vmatpush.bf16.msra.mxu0 0
      %320 = vmatpush.bf16.msra.mxu0 0
      %321 = vmatpush.bf16.msra.mxu0 %v312
      %322 = vmatmul.bf16.gmra.mxu0 %v309
      %v323 = vpop.f32.mrf.mxu0
      %v324 = vadd.f32 0.0, %v323
      %v325 = vpop.f32.mrf.mxu0
      %326 = vdwg.mxu0
      %v327 = vrcp.pop %v301
      %v328 = vmul.f32 %v324, %v327
      %329 = vrot.lane.b32.xlu0 %v266, 112
      %v330 = vpop.permute.xlu0 %329
      %331 = vrot.lane.b32.xlu0 %v271, 112
      %v332 = vpop.permute.xlu0 %331
      %v334 = vsel %vm210, %v330, 0
      %v337 = vsel %vm210, %v332, 0
      %339 = vmatpush.bf16.xpose.msra.mxu0 0
      %340 = vmatpush.bf16.xpose.msra.mxu0 0
      %341 = vmatpush.bf16.xpose.msra.mxu0 0
      %342 = vmatpush.bf16.xpose.msra.mxu0 0
      %343 = vmatpush.bf16.xpose.msra.mxu0 0
      %344 = vmatpush.bf16.xpose.msra.mxu0 0
      %345 = vmatpush.bf16.xpose.msra.mxu0 0
      %346 = vmatpush.bf16.xpose.msra.mxu0 %v337
      %347 = vmatmul.bf16.gmra.mxu0 %v334
      %v348 = vpop.f32.mrf.mxu0
      %v349 = vadd.f32 %v209, %v348
      %v350 = vpop.f32.mrf.mxu0
      %351 = vdwg.mxu0
      %v352 = vsel %vm230, %v349, -inf
      %353 = vmax.xlane.f32.xlu0 %v352
      %v354 = vpop.xlane.xlu0 %353
      %v355 = vsub.f32 %v349, %v354
      %v356 = vmul.f32 %v355, 1.442695
      %v357 = vpow.pop %v356
      %v358 = vsel %vm230, %v357, 0.0
      %359 = vadd.xlane.f32.xlu0 %v358
      %v360 = vpop.xlane.xlu0 %359
      %v361 = vpack.c.bf16 %v357, %v357
      %362 = vrot.lane.b32.xlu0 %v305, 112
      %v363 = vpop.permute.xlu0 %362
      %v365 = vsel %vm241, %v361, 0
      %v368 = vsel %vm245, %v363, 0
      %370 = vmatpush.bf16.msra.mxu0 0
      %371 = vmatpush.bf16.msra.mxu0 0
      %372 = vmatpush.bf16.msra.mxu0 0
      %373 = vmatpush.bf16.msra.mxu0 0
      %374 = vmatpush.bf16.msra.mxu0 0
      %375 = vmatpush.bf16.msra.mxu0 0
      %376 = vmatpush.bf16.msra.mxu0 0
      %377 = vmatpush.bf16.msra.mxu0 %v368
      %378 = vmatmul.bf16.gmra.mxu0 %v365
      %v379 = vpop.f32.mrf.mxu0
      %v380 = vadd.f32 0.0, %v379
      %v381 = vpop.f32.mrf.mxu0
      %382 = vdwg.mxu0
      %v383 = vrcp.pop %v360
      %v384 = vmul.f32 %v380, %v383
      %385 = vrot.lane.b32.xlu0 %v266, 104
      %v386 = vpop.permute.xlu0 %385
      %387 = vrot.lane.b32.xlu0 %v271, 104
      %v388 = vpop.permute.xlu0 %387
      %v390 = vsel %vm210, %v386, 0
      %v393 = vsel %vm210, %v388, 0
      %395 = vmatpush.bf16.xpose.msra.mxu0 0
      %396 = vmatpush.bf16.xpose.msra.mxu0 0
      %397 = vmatpush.bf16.xpose.msra.mxu0 0
      %398 = vmatpush.bf16.xpose.msra.mxu0 0
      %399 = vmatpush.bf16.xpose.msra.mxu0 0
      %400 = vmatpush.bf16.xpose.msra.mxu0 0
      %401 = vmatpush.bf16.xpose.msra.mxu0 0
      %402 = vmatpush.bf16.xpose.msra.mxu0 %v393
      %403 = vmatmul.bf16.gmra.mxu0 %v390
      %v404 = vpop.f32.mrf.mxu0
      %v405 = vadd.f32 %v209, %v404
      %v406 = vpop.f32.mrf.mxu0
      %407 = vdwg.mxu0
      %v408 = vsel %vm230, %v405, -inf
      %409 = vmax.xlane.f32.xlu0 %v408
      %v410 = vpop.xlane.xlu0 %409
      %v411 = vsub.f32 %v405, %v410
      %v412 = vmul.f32 %v411, 1.442695
      %v413 = vpow.pop %v412
      %v414 = vsel %vm230, %v413, 0.0
      %415 = vadd.xlane.f32.xlu0 %v414
      %v416 = vpop.xlane.xlu0 %415
      %v417 = vpack.c.bf16 %v413, %v413
      %418 = vrot.lane.b32.xlu0 %v305, 104
      %v419 = vpop.permute.xlu0 %418
      %v421 = vsel %vm241, %v417, 0
      %v424 = vsel %vm245, %v419, 0
      %426 = vmatpush.bf16.msra.mxu0 0
      %427 = vmatpush.bf16.msra.mxu0 0
      %428 = vmatpush.bf16.msra.mxu0 0
      %429 = vmatpush.bf16.msra.mxu0 0
      %430 = vmatpush.bf16.msra.mxu0 0
      %431 = vmatpush.bf16.msra.mxu0 0
      %432 = vmatpush.bf16.msra.mxu0 0
      %433 = vmatpush.bf16.msra.mxu0 %v424
      %434 = vmatmul.bf16.gmra.mxu0 %v421
      %v435 = vpop.f32.mrf.mxu0
      %v436 = vadd.f32 0.0, %v435
      %v437 = vpop.f32.mrf.mxu0
      %438 = vdwg.mxu0
      %v439 = vrcp.pop %v416
      %v440 = vmul.f32 %v436, %v439
      %442 = vrot.lane.b32.xlu0 %v328, 8
      %v443 = vpop.permute.xlu0 %442
      %446 = vrot.lane.b32.xlu0 %v384, 16
      %v447 = vpop.permute.xlu0 %446
      %450 = vrot.lane.b32.xlu0 %v440, 24
      %v451 = vpop.permute.xlu0 %450
      %v453 = vsel %vm210, %v263, %v443
      %vm454 = vcmask 130048
      %v455 = vsel %vm454, %v453, %v447
      %vm456 = vcmask 195584
      %v457 = vsel %vm456, %v455, %v451
      %v458 = vpack.c.bf16 %v457, %v457
      %vm459 = vcmask 256000
      %460 = vst.msk [vmem:[%s199] sm:$0x7] %vm459, %v458
      %p461 = scmp.lt.s32.totalorder %s14, 1
      %s462 = scalar_select %p461, %s14, 1
      %s463 = smul.addr %s462, 4
      %s464 = scalar_lea.vmem %s3, %s463
      // Predicated region
      $region33: #{_lambda_.43} parent=31 // pred_check
        %p465 = pneg %p110
      $region34: #{_lambda_.43} parent=31 // pred_check_branch
        %467 = sbr.rel (%p465) target = $region36
      $region35: #{_lambda_.43} parent=31 // pred_region
        _
      $region36: #{_lambda_.43} parent=31 // pred_fallthru
        _
    $region32: #{_lambda_.43} parent=5 // pred_fallthru
      _
    %p468 = scmp.le.s32.totalorder 2, %s9
    // Predicated region
    $region37: #{_lambda_.43} parent=5 // pred_check
      %p469 = pneg %p468
    $region38: #{_lambda_.43} parent=5 // pred_check_branch
      %471 = sbr.rel (%p469) target = $region40
    $region39: #{_lambda_.43} parent=5 // pred_region
      %s472 = ssub.s32 %s9, 2
      // Predicated region
      $region41: #{_lambda_.43} parent=39 // pred_check
        %p473 = pneg %p116
      $region42: #{_lambda_.43} parent=39 // pred_check_branch
        %475 = sbr.rel (%p473) target = $region44
      $region43: #{_lambda_.43} parent=39 // pred_region
        %p476 = scmp.lt.s32.totalorder %s15, 1
        %s477 = scalar_select %p476, %s15, 1
        %s478 = smul.addr %s477, 4
        %s479 = scalar_lea.vmem %s3, %s478
      $region44: #{_lambda_.43} parent=39 // pred_fallthru
        _
    $region40: #{_lambda_.43} parent=5 // pred_fallthru
      _
  $region6: #{_lambda_.43} parent=0 // loop_footer
    %s13 = sadd.s32 1, %s9
  $region7: #{_lambda_.43} parent=0 // loop_footer_branch
    %8 = sbr.rel target = $region3
  $region8: #{_lambda_.43} parent=0 // loop_exit
    _

// kernel: _lambda_.34
$region0: #{_lambda_.34}
  #allocation0 [shape = 'u32[]', space=smem, size = 0x4, offset = 0x4, fixed_abs, tag = 'smem constant byte address 0x4 - core index']
  #allocation1 [shape = 'u32[72,128]{1,0:T(1,128)}', space=vmem, size = 0x9000, scoped, tag = 'internal scratch']
  #allocation2 [shape = 'f32[16,128]{1,0:T(8,128)}', space=vmem, size = 0x2000, scoped, tag = 'scratch operand']
  %s0 = inlined_call_operand.vmem [shape: bf16[16,32], index: 0, kind: input, shape index: {}]
  %s1 = inlined_call_operand.vmem [shape: bf16[32,128], index: 1, kind: input, shape index: {}]
  %s2 = inlined_call_operand.vmem [shape: f32[1,128], index: 2, kind: input, shape index: {}]
  %s3 = inlined_call_operand.vmem [shape: bf16[16,128], index: 3, kind: output, shape index: {}]
  %s4 = sld [smem:[#allocation0]]
  $region30: #{_lambda_.34} parent=0
    _
  %s6 = ssub.s32 1, %s4
  %s7 = scalar_select 0, %s6, %s4
  // Predicated region
  $region2: #{_lambda_.34} parent=0 // pred_check
    _
  $region3: #{_lambda_.34} parent=0 // pred_check_branch
    %9 = sbr.rel (0) target = $region5
  $region4: #{_lambda_.34} parent=0 // pred_region
    _
  $region5: #{_lambda_.34} parent=0 // pred_fallthru
    _
  // Predicated region
  $region6: #{_lambda_.34} parent=0 // pred_check
    _
  $region7: #{_lambda_.34} parent=0 // pred_check_branch
    %11 = sbr.rel (0) target = $region9
  $region8: #{_lambda_.34} parent=0 // pred_region
    _
  $region9: #{_lambda_.34} parent=0 // pred_fallthru
    _
  // Predicated region
  $region10: #{_lambda_.34} parent=0 // pred_check
    _
  $region11: #{_lambda_.34} parent=0 // pred_check_branch
    %13 = sbr.rel (0) target = $region13
  $region12: #{_lambda_.34} parent=0 // pred_region
    _
  $region13: #{_lambda_.34} parent=0 // pred_fallthru
    _
  %p15 = scmp.eq.s32.totalorder 0, 0
  // Predicated region
  $region14: #{_lambda_.34} parent=0 // pred_check
    %p16 = pneg %p15
  $region15: #{_lambda_.34} parent=0 // pred_check_branch
    %18 = sbr.rel (%p16) target = $region17
  $region16: #{_lambda_.34} parent=0 // pred_region
    %19 = vst [vmem:[#allocation2] sm:$0xff] 0.0
    %20 = vst [vmem:[#allocation2 + $0x8] sm:$0xff] 0.0
  $region17: #{_lambda_.34} parent=0 // pred_fallthru
    _
  %v21 = vld [vmem:[#allocation2] sm:$0xff]
  %v22 = vld [vmem:[#allocation2 + $0x8] sm:$0xff]
  %v23 = vld [vmem:[%s0] sm:$0xf]
  %v24 = vld [vmem:[%s0 + $0x4] sm:$0xf]
  %v25 = vld [vmem:[%s1] sm:$0xf]
  %v26 = vld [vmem:[%s1 + $0x4] sm:$0xf]
  %v27 = vld [vmem:[%s1 + $0x8] sm:$0xf]
  %v28 = vld [vmem:[%s1 + $0xc] sm:$0xf]
  %v31 = vunpack.c.l.b16 %v23
  %v32 = vunpack.c.l.b16 %v24
  %v33 = vpack.c.b16 %v32, %v31
  %v38 = vunpack.c.l.b16 %v25
  %v39 = vunpack.c.l.b16 %v26
  %v40 = vunpack.c.l.b16 %v27
  %v41 = vunpack.c.l.b16 %v28
  %v42 = vpack.c.b16 %v39, %v38
  %v43 = vpack.c.b16 %v41, %v40
  %vm46 = vcmask 261120
  %v48 = vsel %vm46, %v33, 0
  %50 = vmatpush.bf16.msra.mxu0 0
  %51 = vmatpush.bf16.msra.mxu0 0
  %52 = vmatpush.bf16.msra.mxu0 0
  %53 = vmatpush.bf16.msra.mxu0 0
  %54 = vmatpush.bf16.msra.mxu0 0
  %55 = vmatpush.bf16.msra.mxu0 0
  %56 = vmatpush.bf16.msra.mxu0 %v43
  %57 = vmatpush.bf16.msra.mxu0 %v42
  %58 = vmatmul.bf16.gmra.mxu0 %v48
  %v59 = vpop.f32.mrf.mxu0
  %v60 = vadd.f32 0.0, %v59
  %v61 = vpop.f32.mrf.mxu0
  %v62 = vadd.f32 0.0, %v61
  %63 = vdwg.mxu0
  %v64 = vadd.f32 %v21, %v60
  %v65 = vadd.f32 %v22, %v62
  %66 = vst [vmem:[#allocation2] sm:$0xff] %v64
  %67 = vst [vmem:[#allocation2 + $0x8] sm:$0xff] %v65
  // Predicated region
  $region18: #{_lambda_.34} parent=0 // pred_check
    %p68 = pneg %p15
  $region19: #{_lambda_.34} parent=0 // pred_check_branch
    %70 = sbr.rel (%p68) target = $region21
  $region20: #{_lambda_.34} parent=0 // pred_region
    %v71 = vld [vmem:[#allocation2] sm:$0xff]
    %v72 = vld [vmem:[#allocation2 + $0x8] sm:$0xff]
    %v73 = vld [vmem:[%s2] sm:$0x1]
    %v75 = vperm.slane %v73, 0
    %v77 = vadd.f32 %v71, %v75
    %v78 = vadd.f32 %v72, %v75
    %v79 = vmax.f32 %v77, 0.0
    %v80 = vmax.f32 %v78, 0.0
    %v81 = vpack.c.bf16 %v79, %v79
    %v82 = vpack.c.bf16 %v80, %v80
    %83 = vst [vmem:[%s3] sm:$0xf] %v81
    %84 = vst [vmem:[%s3 + $0x4] sm:$0xf] %v82
  $region21: #{_lambda_.34} parent=0 // pred_fallthru
    _
  // Predicated region
  $region22: #{_lambda_.34} parent=0 // pred_check
    _
  $region23: #{_lambda_.34} parent=0 // pred_check_branch
    %86 = sbr.rel (0) target = $region25
  $region24: #{_lambda_.34} parent=0 // pred_region
    _
  $region25: #{_lambda_.34} parent=0 // pred_fallthru
    _
  // Predicated region
  $region26: #{_lambda_.34} parent=0 // pred_check
    _
  $region27: #{_lambda_.34} parent=0 // pred_check_branch
    %88 = sbr.rel (0) target = $region29
  $region28: #{_lambda_.34} parent=0 // pred_region
    _
  $region29: #{_lambda_.34} parent=0 // pred_fallthru
    _

// kernel: _lambda_.32
$region0: #{_lambda_.32}
  #allocation0 [shape = 'u32[]', space=smem, size = 0x4, offset = 0x4, fixed_abs, tag = 'smem constant byte address 0x4 - core index']
  #allocation1 [shape = 'u32[72,128]{1,0:T(1,128)}', space=vmem, size = 0x9000, scoped, tag = 'internal scratch']
  %s0 = inlined_call_operand.vmem [shape: bf16[2,8,32], index: 0, kind: input, shape index: {}]
  %s1 = inlined_call_operand.vmem [shape: bf16[2,8,32], index: 1, kind: input, shape index: {}]
  %s2 = inlined_call_operand.vmem [shape: bf16[2,8,32], index: 2, kind: input, shape index: {}]
  %s3 = inlined_call_operand.vmem [shape: f32[2,1,8], index: 3, kind: input, shape index: {}]
  %s4 = inlined_call_operand.vmem [shape: bf16[2,8,32], index: 4, kind: output, shape index: {}]
  %s5 = sld [smem:[#allocation0]]
  $region49: #{_lambda_.32} parent=0
    _
  %s7 = ssub.s32 1, %s5
  %s8 = scalar_select 0, %s7, %s5
  loop: start=0, step=1, limit=4
  $region2: #{_lambda_.32} parent=0 // loop_pre_header
    _
  $region3: #{_lambda_.32} parent=0 // loop_header
    %s10 = sphi 0, %s14
    %p11 = scmp.ge.s32.totalorder %s10, 4
    %s20 = sphi 0, %s22
    %s23 = sphi 0, %s20
    %s24 = sphi 0, %s23
    %s40 = sphi 0, %s24
    %s46 = sphi 0, %s48
    %s49 = sphi 0, %s46
    %s50 = sphi 0, %s49
    %s66 = sphi 0, %s50
    %s72 = sphi 0, %s74
    %s75 = sphi 0, %s72
    %s76 = sphi 0, %s75
    %s92 = sphi 0, %s76
    %s98 = sphi 0, %s100
    %s101 = sphi 0, %s98
    %s102 = sphi 0, %s101
    %s118 = sphi 0, %s102
    %s124 = sphi 0, %s126
    %s127 = sphi 0, %s124
    %s128 = sphi 0, %s127
    %s144 = sphi 0, %s128
  $region4: #{_lambda_.32} parent=0 // loop_header_branch
    %13 = sbr.rel (%p11) target = $region8
  $region5: #{_lambda_.32} parent=0 // loop_body
    %s15 = ssub.s32 %s10, 1
    %s16 = ssub.s32 %s10, 2
    %s17 = sadd.s32 %s10, 1
    %s18 = ssub.s32 %s10, %s17
    %p19 = scmp.eq.s32.totalorder %s18, 0
    %s21 = sadd.s32 %s20, 1
    %s22 = scalar_select %p19, %s20, %s21
    %p25 = pneg %p19
    %p26 = scmp.eq.s32.totalorder %s10, 1
    %p27 = por %p25, %p26
    %p28 = scmp.ne.s32.totalorder %s20, %s23
    %p29 = scmp.eq.s32.totalorder %s10, 0
    %p30 = por %p28, %p29
    %p31 = scmp.ne.s32.totalorder %s20, %s23
    %p32 = scmp.eq.s32.totalorder %s15, 1
    %p33 = por %p31, %p32
    %p34 = scmp.ne.s32.totalorder %s23, %s24
    %p35 = scmp.eq.s32.totalorder %s15, 0
    %p36 = por %p34, %p35
    %p37 = scmp.ne.s32.totalorder %s23, %s24
    %p38 = scmp.eq.s32.totalorder %s16, 1
    %p39 = por %p37, %p38
    %p41 = scmp.ne.s32.totalorder %s24, %s40
    %p42 = scmp.eq.s32.totalorder %s16, 0
    %p43 = por %p41, %p42
    %s44 = ssub.s32 %s10, %s17
    %p45 = scmp.eq.s32.totalorder %s44, 0
    %s47 = sadd.s32 %s46, 1
    %s48 = scalar_select %p45, %s46, %s47
    %p51 = pneg %p45
    %p52 = scmp.eq.s32.totalorder %s10, 1
    %p53 = por %p51, %p52
    %p54 = scmp.ne.s32.totalorder %s46, %s49
    %p55 = scmp.eq.s32.totalorder %s10, 0
    %p56 = por %p54, %p55
    %p57 = scmp.ne.s32.totalorder %s46, %s49
    %p58 = scmp.eq.s32.totalorder %s15, 1
    %p59 = por %p57, %p58
    %p60 = scmp.ne.s32.totalorder %s49, %s50
    %p61 = scmp.eq.s32.totalorder %s15, 0
    %p62 = por %p60, %p61
    %p63 = scmp.ne.s32.totalorder %s49, %s50
    %p64 = scmp.eq.s32.totalorder %s16, 1
    %p65 = por %p63, %p64
    %p67 = scmp.ne.s32.totalorder %s50, %s66
    %p68 = scmp.eq.s32.totalorder %s16, 0
    %p69 = por %p67, %p68
    %s70 = ssub.s32 %s10, %s17
    %p71 = scmp.eq.s32.totalorder %s70, 0
    %s73 = sadd.s32 %s72, 1
    %s74 = scalar_select %p71, %s72, %s73
    %p77 = pneg %p71
    %p78 = scmp.eq.s32.totalorder %s10, 1
    %p79 = por %p77, %p78
    %p80 = scmp.ne.s32.totalorder %s72, %s75
    %p81 = scmp.eq.s32.totalorder %s10, 0
    %p82 = por %p80, %p81
    %p83 = scmp.ne.s32.totalorder %s72, %s75
    %p84 = scmp.eq.s32.totalorder %s15, 1
    %p85 = por %p83, %p84
    %p86 = scmp.ne.s32.totalorder %s75, %s76
    %p87 = scmp.eq.s32.totalorder %s15, 0
    %p88 = por %p86, %p87
    %p89 = scmp.ne.s32.totalorder %s75, %s76
    %p90 = scmp.eq.s32.totalorder %s16, 1
    %p91 = por %p89, %p90
    %p93 = scmp.ne.s32.totalorder %s76, %s92
    %p94 = scmp.eq.s32.totalorder %s16, 0
    %p95 = por %p93, %p94
    %s96 = ssub.s32 %s10, %s17
    %p97 = scmp.eq.s32.totalorder %s96, 0
    %s99 = sadd.s32 %s98, 1
    %s100 = scalar_select %p97, %s98, %s99
    %p103 = pneg %p97
    %p104 = scmp.eq.s32.totalorder %s10, 1
    %p105 = por %p103, %p104
    %p106 = scmp.ne.s32.totalorder %s98, %s101
    %p107 = scmp.eq.s32.totalorder %s10, 0
    %p108 = por %p106, %p107
    %p109 = scmp.ne.s32.totalorder %s98, %s101
    %p110 = scmp.eq.s32.totalorder %s15, 1
    %p111 = por %p109, %p110
    %p112 = scmp.ne.s32.totalorder %s101, %s102
    %p113 = scmp.eq.s32.totalorder %s15, 0
    %p114 = por %p112, %p113
    %p115 = scmp.ne.s32.totalorder %s101, %s102
    %p116 = scmp.eq.s32.totalorder %s16, 1
    %p117 = por %p115, %p116
    %p119 = scmp.ne.s32.totalorder %s102, %s118
    %p120 = scmp.eq.s32.totalorder %s16, 0
    %p121 = por %p119, %p120
    %s122 = ssub.s32 %s10, %s17
    %p123 = scmp.eq.s32.totalorder %s122, 0
    %s125 = sadd.s32 %s124, 1
    %s126 = scalar_select %p123, %s124, %s125
    %p129 = pneg %p123
    %p130 = scmp.eq.s32.totalorder %s10, 1
    %p131 = por %p129, %p130
    %p132 = scmp.ne.s32.totalorder %s124, %s127
    %p133 = scmp.eq.s32.totalorder %s10, 0
    %p134 = por %p132, %p133
    %p135 = scmp.ne.s32.totalorder %s124, %s127
    %p136 = scmp.eq.s32.totalorder %s15, 1
    %p137 = por %p135, %p136
    %p138 = scmp.ne.s32.totalorder %s127, %s128
    %p139 = scmp.eq.s32.totalorder %s15, 0
    %p140 = por %p138, %p139
    %p141 = scmp.ne.s32.totalorder %s127, %s128
    %p142 = scmp.eq.s32.totalorder %s16, 1
    %p143 = por %p141, %p142
    %p145 = scmp.ne.s32.totalorder %s128, %s144
    %p146 = scmp.eq.s32.totalorder %s16, 0
    %p147 = por %p145, %p146
    %p148 = scmp.le.s32.totalorder 1, %s10
    %p149 = scmp.lt.s32.totalorder %s10, 3
    %p150 = pnand %p148, %p149
    %p151 = pneg %p150
    // Predicated region
    $region9: #{_lambda_.32} parent=5 // pred_check
      _
    $region10: #{_lambda_.32} parent=5 // pred_check_branch
      %153 = sbr.rel (%p150) target = $region12
    $region11: #{_lambda_.32} parent=5 // pred_region
      %s154 = ssub.s32 %s10, 1
    $region12: #{_lambda_.32} parent=5 // pred_fallthru
      _
    %p155 = scmp.lt.s32.totalorder %s10, 2
    // Predicated region
    $region13: #{_lambda_.32} parent=5 // pred_check
      %p156 = pneg %p155
    $region14: #{_lambda_.32} parent=5 // pred_check_branch
      %158 = sbr.rel (%p156) target = $region16
    $region15: #{_lambda_.32} parent=5 // pred_region
      // Predicated region
      $region17: #{_lambda_.32} parent=15 // pred_check
        %p159 = pneg %p30
      $region18: #{_lambda_.32} parent=15 // pred_check_branch
        %161 = sbr.rel (%p159) target = $region20
      $region19: #{_lambda_.32} parent=15 // pred_region
        %p162 = scmp.lt.s32.totalorder %s10, 1
        %s163 = scalar_select %p162, %s10, 1
        %s164 = smul.addr %s163, 4
        %s165 = scalar_lea.vmem %s0, %s164
      $region20: #{_lambda_.32} parent=15 // pred_fallthru
        _
      // Predicated region
      $region21: #{_lambda_.32} parent=15 // pred_check
        %p166 = pneg %p56
      $region22: #{_lambda_.32} parent=15 // pred_check_branch
        %168 = sbr.rel (%p166) target = $region24
      $region23: #{_lambda_.32} parent=15 // pred_region
        %p169 = scmp.lt.s32.totalorder %s10, 1
        %s170 = scalar_select %p169, %s10, 1
        %s171 = smul.addr %s170, 4
        %s172 = scalar_lea.vmem %s1, %s171
      $region24: #{_lambda_.32} parent=15 // pred_fallthru
        _
      // Predicated region
      $region25: #{_lambda_.32} parent=15 // pred_check
        %p173 = pneg %p82
      $region26: #{_lambda_.32} parent=15 // pred_check_branch
        %175 = sbr.rel (%p173) target = $region28
      $region27: #{_lambda_.32} parent=15 // pred_region
        %p176 = scmp.lt.s32.totalorder %s10, 1
        %s177 = scalar_select %p176, %s10, 1
        %s178 = smul.addr %s177, 4
        %s179 = scalar_lea.vmem %s2, %s178
      $region28: #{_lambda_.32} parent=15 // pred_fallthru
        _
      // Predicated region
      $region29: #{_lambda_.32} parent=15 // pred_check
        %p180 = pneg %p108
      $region30: #{_lambda_.32} parent=15 // pred_check_branch
        %182 = sbr.rel (%p180) target = $region32
      $region31: #{_lambda_.32} parent=15 // pred_region
        %p183 = scmp.lt.s32.totalorder %s10, 1
        %s184 = scalar_select %p183, %s10, 1
        %s185 = scalar_lea.vmem %s3, %s184
      $region32: #{_lambda_.32} parent=15 // pred_fallthru
        _
    $region16: #{_lambda_.32} parent=5 // pred_fallthru
      _
    %p186 = scmp.le.s32.totalorder 1, %s10
    %p187 = scmp.lt.s32.totalorder %s10, 3
    %p188 = pnand %p186, %p187
    %p189 = pneg %p188
    // Predicated region
    $region33: #{_lambda_.32} parent=5 // pred_check
      _
    $region34: #{_lambda_.32} parent=5 // pred_check_branch
      %191 = sbr.rel (%p188) target = $region36
    $region35: #{_lambda_.32} parent=5 // pred_region
      %s192 = ssub.s32 %s10, 1
      %p193 = scmp.lt.s32.totalorder %s15, 1
      %s194 = scalar_select %p193, %s15, 1
      %s195 = smul.addr %s194, 4
      %s196 = scalar_lea.vmem %s0, %s195
      %p197 = pneg %p36
      %p198 = pneg %p33
      %p199 = scmp.lt.s32.totalorder %s15, 1
      %s200 = scalar_select %p199, %s15, 1
      %s201 = smul.addr %s200, 4
      %s202 = scalar_lea.vmem %s1, %s201
      %p203 = pneg %p62
      %p204 = pneg %p59
      %p205 = scmp.lt.s32.totalorder %s15, 1
      %s206 = scalar_select %p205, %s15, 1
      %s207 = smul.addr %s206, 4
      %s208 = scalar_lea.vmem %s2, %s207
      %p209 = pneg %p88
      %p210 = pneg %p85
      %p211 = scmp.lt.s32.totalorder %s15, 1
      %s212 = scalar_select %p211, %s15, 1
      %s213 = scalar_lea.vmem %s3, %s212
      %p214 = pneg %p114
      %p215 = pneg %p111
      %p216 = pneg %p140
      %p217 = pneg %p137
      %p218 = scmp.lt.s32.totalorder %s15, 1
      %s219 = scalar_select %p218, %s15, 1
      %s220 = smul.addr %s219, 4
      %s221 = scalar_lea.vmem %s4, %s220
      %p222 = scmp.lt.s32.totalorder %s15, 1
      %s223 = scalar_select %p222, %s15, 1
      %s224 = smul.addr %s223, 4
      %s225 = scalar_lea.vmem %s0, %s224
      %p226 = scmp.lt.s32.totalorder %s15, 1
      %s227 = scalar_select %p226, %s15, 1
      %s228 = smul.addr %s227, 4
      %s229 = scalar_lea.vmem %s1, %s228
      %p230 = scmp.lt.s32.totalorder %s15, 1
      %s231 = scalar_select %p230, %s15, 1
      %s232 = smul.addr %s231, 4
      %s233 = scalar_lea.vmem %s2, %s232
      %p234 = scmp.lt.s32.totalorder %s15, 1
      %s235 = scalar_select %p234, %s15, 1
      %s236 = scalar_lea.vmem %s3, %s235
      %p237 = scmp.lt.s32.totalorder %s15, 1
      %s238 = scalar_select %p237, %s15, 1
      %s239 = smul.addr %s238, 4
      %s240 = scalar_lea.vmem %s4, %s239
      %v242 = vld [vmem:[%s236] sm:$0x1]
      %v243 = vld [vmem:[%s225] sm:$0xf]
      %v244 = vld [vmem:[%s229] sm:$0xf]
      %v245 = vld [vmem:[%s233] sm:$0xf]
      %v247 = vperm.slane %v242, 0
      %vm249 = vcmask 64512
      %v251 = vsel %vm249, %v243, 0
      %v254 = vsel %vm249, %v244, 0
      %256 = vmatpush.bf16.xpose.msra.mxu0 0
      %257 = vmatpush.bf16.xpose.msra.mxu0 0
      %258 = vmatpush.bf16.xpose.msra.mxu0 0
      %259 = vmatpush.bf16.xpose.msra.mxu0 0
      %260 = vmatpush.bf16.xpose.msra.mxu0 0
      %261 = vmatpush.bf16.xpose.msra.mxu0 0
      %262 = vmatpush.bf16.xpose.msra.mxu0 0
      %263 = vmatpush.bf16.xpose.msra.mxu0 %v254
      %264 = vmatmul.bf16.gmra.mxu0 %v251
      %v265 = vpop.f32.mrf.mxu0
      %v266 = vadd.f32 %v247, %v265
      %v267 = vpop.f32.mrf.mxu0
      %268 = vdwg.mxu0
      %v269 = vsel %vm249, %v266, -inf
      %270 = vmax.xlane.f32.xlu0 %v269
      %v271 = vpop.xlane.xlu0 %270
      %v272 = vsub.f32 %v266, %v271
      %v273 = vmul.f32 %v272, 1.442695
      %v274 = vpow.pop %v273
      %v275 = vsel %vm249, %v274, 0.0
      %276 = vadd.xlane.f32.xlu0 %v275
      %v277 = vpop.xlane.xlu0 %276
      %v278 = vpack.c.bf16 %v274, %v274
      %v280 = vsel %vm249, %v278, 0
      %vm282 = vcmask 1043456
      %v284 = vsel %vm282, %v245, 0
      %286 = vmatpush.bf16.msra.mxu0 0
      %287 = vmatpush.bf16.msra.mxu0 0
      %288 = vmatpush.bf16.msra.mxu0 0
      %289 = vmatpush.bf16.msra.mxu0 0
      %290 = vmatpush.bf16.msra.mxu0 0
      %291 = vmatpush.bf16.msra.mxu0 0
      %292 = vmatpush.bf16.msra.mxu0 0
      %293 = vmatpush.bf16.msra.mxu0 %v284
      %294 = vmatmul.bf16.gmra.mxu0 %v280
      %v295 = vpop.f32.mrf.mxu0
      %v296 = vadd.f32 0.0, %v295
      %v297 = vpop.f32.mrf.mxu0
      %298 = vdwg.mxu0
      %v299 = vrcp.pop %v277
      %v300 = vmul.f32 %v296, %v299
      %v302 = vunpack.c.l.b16 %v243
      %v303 = vpack.c.b16 %v302, %v302
      %304 = vrot.lane.b32.xlu0 %v303, 120
      %v305 = vpop.permute.xlu0 %304
      %v307 = vunpack.c.l.b16 %v244
      %v308 = vpack.c.b16 %v307, %v307
      %309 = vrot.lane.b32.xlu0 %v308, 120
      %v310 = vpop.permute.xlu0 %309
      %v312 = vsel %vm249, %v305, 0
      %v315 = vsel %vm249, %v310, 0
      %317 = vmatpush.bf16.xpose.msra.mxu0 0
      %318 = vmatpush.bf16.xpose.msra.mxu0 0
      %319 = vmatpush.bf16.xpose.msra.mxu0 0
      %320 = vmatpush.bf16.xpose.msra.mxu0 0
      %321 = vmatpush.bf16.xpose.msra.mxu0 0
      %322 = vmatpush.bf16.xpose.msra.mxu0 0
      %323 = vmatpush.bf16.xpose.msra.mxu0 0
      %324 = vmatpush.bf16.xpose.msra.mxu0 %v315
      %325 = vmatmul.bf16.gmra.mxu0 %v312
      %v326 = vpop.f32.mrf.mxu0
      %v327 = vadd.f32 %v247, %v326
      %v328 = vpop.f32.mrf.mxu0
      %329 = vdwg.mxu0
      %v330 = vsel %vm249, %v327, -inf
      %331 = vmax.xlane.f32.xlu0 %v330
      %v332 = vpop.xlane.xlu0 %331
      %v333 = vsub.f32 %v327, %v332
      %v334 = vmul.f32 %v333, 1.442695
      %v335 = vpow.pop %v334
      %v336 = vsel %vm249, %v335, 0.0
      %337 = vadd.xlane.f32.xlu0 %v336
      %v338 = vpop.xlane.xlu0 %337
      %v339 = vpack.c.bf16 %v335, %v335
      %v341 = vunpack.c.l.b16 %v245
      %v342 = vpack.c.b16 %v341, %v341
      %343 = vrot.lane.b32.xlu0 %v342, 120
      %v344 = vpop.permute.xlu0 %343
      %v346 = vsel %vm249, %v339, 0
      %v349 = vsel %vm282, %v344, 0
      %351 = vmatpush.bf16.msra.mxu0 0
      %352 = vmatpush.bf16.msra.mxu0 0
      %353 = vmatpush.bf16.msra.mxu0 0
      %354 = vmatpush.bf16.msra.mxu0 0
      %355 = vmatpush.bf16.msra.mxu0 0
      %356 = vmatpush.bf16.msra.mxu0 0
      %357 = vmatpush.bf16.msra.mxu0 0
      %358 = vmatpush.bf16.msra.mxu0 %v349
      %359 = vmatmul.bf16.gmra.mxu0 %v346
      %v360 = vpop.f32.mrf.mxu0
      %v361 = vadd.f32 0.0, %v360
      %v362 = vpop.f32.mrf.mxu0
      %363 = vdwg.mxu0
      %v364 = vrcp.pop %v338
      %v365 = vmul.f32 %v361, %v364
      %366 = vrot.lane.b32.xlu0 %v303, 112
      %v367 = vpop.permute.xlu0 %366
      %368 = vrot.lane.b32.xlu0 %v308, 112
      %v369 = vpop.permute.xlu0 %368
      %v371 = vsel %vm249, %v367, 0
      %v374 = vsel %vm249, %v369, 0
      %376 = vmatpush.bf16.xpose.msra.mxu0 0
      %377 = vmatpush.bf16.xpose.msra.mxu0 0
      %378 = vmatpush.bf16.xpose.msra.mxu0 0
      %379 = vmatpush.bf16.xpose.msra.mxu0 0
      %380 = vmatpush.bf16.xpose.msra.mxu0 0
      %381 = vmatpush.bf16.xpose.msra.mxu0 0
      %382 = vmatpush.bf16.xpose.msra.mxu0 0
      %383 = vmatpush.bf16.xpose.msra.mxu0 %v374
      %384 = vmatmul.bf16.gmra.mxu0 %v371
      %v385 = vpop.f32.mrf.mxu0
      %v386 = vadd.f32 %v247, %v385
      %v387 = vpop.f32.mrf.mxu0
      %388 = vdwg.mxu0
      %v389 = vsel %vm249, %v386, -inf
      %390 = vmax.xlane.f32.xlu0 %v389
      %v391 = vpop.xlane.xlu0 %390
      %v392 = vsub.f32 %v386, %v391
      %v393 = vmul.f32 %v392, 1.442695
      %v394 = vpow.pop %v393
      %v395 = vsel %vm249, %v394, 0.0
      %396 = vadd.xlane.f32.xlu0 %v395
      %v397 = vpop.xlane.xlu0 %396
      %v398 = vpack.c.bf16 %v394, %v394
      %399 = vrot.lane.b32.xlu0 %v342, 112
      %v400 = vpop.permute.xlu0 %399
      %v402 = vsel %vm249, %v398, 0
      %v405 = vsel %vm282, %v400, 0
      %407 = vmatpush.bf16.msra.mxu0 0
      %408 = vmatpush.bf16.msra.mxu0 0
      %409 = vmatpush.bf16.msra.mxu0 0
      %410 = vmatpush.bf16.msra.mxu0 0
      %411 = vmatpush.bf16.msra.mxu0 0
      %412 = vmatpush.bf16.msra.mxu0 0
      %413 = vmatpush.bf16.msra.mxu0 0
      %414 = vmatpush.bf16.msra.mxu0 %v405
      %415 = vmatmul.bf16.gmra.mxu0 %v402
      %v416 = vpop.f32.mrf.mxu0
      %v417 = vadd.f32 0.0, %v416
      %v418 = vpop.f32.mrf.mxu0
      %419 = vdwg.mxu0
      %v420 = vrcp.pop %v397
      %v421 = vmul.f32 %v417, %v420
      %422 = vrot.lane.b32.xlu0 %v303, 104
      %v423 = vpop.permute.xlu0 %422
      %424 = vrot.lane.b32.xlu0 %v308, 104
      %v425 = vpop.permute.xlu0 %424
      %v427 = vsel %vm249, %v423, 0
      %v430 = vsel %vm249, %v425, 0
      %432 = vmatpush.bf16.xpose.msra.mxu0 0
      %433 = vmatpush.bf16.xpose.msra.mxu0 0
      %434 = vmatpush.bf16.xpose.msra.mxu0 0
      %435 = vmatpush.bf16.xpose.msra.mxu0 0
      %436 = vmatpush.bf16.xpose.msra.mxu0 0
      %437 = vmatpush.bf16.xpose.msra.mxu0 0
      %438 = vmatpush.bf16.xpose.msra.mxu0 0
      %439 = vmatpush.bf16.xpose.msra.mxu0 %v430
      %440 = vmatmul.bf16.gmra.mxu0 %v427
      %v441 = vpop.f32.mrf.mxu0
      %v442 = vadd.f32 %v247, %v441
      %v443 = vpop.f32.mrf.mxu0
      %444 = vdwg.mxu0
      %v445 = vsel %vm249, %v442, -inf
      %446 = vmax.xlane.f32.xlu0 %v445
      %v447 = vpop.xlane.xlu0 %446
      %v448 = vsub.f32 %v442, %v447
      %v449 = vmul.f32 %v448, 1.442695
      %v450 = vpow.pop %v449
      %v451 = vsel %vm249, %v450, 0.0
      %452 = vadd.xlane.f32.xlu0 %v451
      %v453 = vpop.xlane.xlu0 %452
      %v454 = vpack.c.bf16 %v450, %v450
      %455 = vrot.lane.b32.xlu0 %v342, 104
      %v456 = vpop.permute.xlu0 %455
      %v458 = vsel %vm249, %v454, 0
      %v461 = vsel %vm282, %v456, 0
      %463 = vmatpush.bf16.msra.mxu0 0
      %464 = vmatpush.bf16.msra.mxu0 0
      %465 = vmatpush.bf16.msra.mxu0 0
      %466 = vmatpush.bf16.msra.mxu0 0
      %467 = vmatpush.bf16.msra.mxu0 0
      %468 = vmatpush.bf16.msra.mxu0 0
      %469 = vmatpush.bf16.msra.mxu0 0
      %470 = vmatpush.bf16.msra.mxu0 %v461
      %471 = vmatmul.bf16.gmra.mxu0 %v458
      %v472 = vpop.f32.mrf.mxu0
      %v473 = vadd.f32 0.0, %v472
      %v474 = vpop.f32.mrf.mxu0
      %475 = vdwg.mxu0
      %v476 = vrcp.pop %v453
      %v477 = vmul.f32 %v473, %v476
      %479 = vrot.lane.b32.xlu0 %v365, 8
      %v480 = vpop.permute.xlu0 %479
      %483 = vrot.lane.b32.xlu0 %v421, 16
      %v484 = vpop.permute.xlu0 %483
      %487 = vrot.lane.b32.xlu0 %v477, 24
      %v488 = vpop.permute.xlu0 %487
      %v490 = vsel %vm249, %v300, %v480
      %vm491 = vcmask 130048
      %v492 = vsel %vm491, %v490, %v484
      %vm493 = vcmask 195584
      %v494 = vsel %vm493, %v492, %v488
      %v495 = vpack.c.bf16 %v494, %v494
      %vm496 = vcmask 257024
      %497 = vst.msk [vmem:[%s240] sm:$0xf] %vm496, %v495
      %p498 = scmp.lt.s32.totalorder %s15, 1
      %s499 = scalar_select %p498, %s15, 1
      %s500 = smul.addr %s499, 4
      %s501 = scalar_lea.vmem %s4, %s500
      // Predicated region
      $region37: #{_lambda_.32} parent=35 // pred_check
        %p502 = pneg %p137
      $region38: #{_lambda_.32} parent=35 // pred_check_branch
        %504 = sbr.rel (%p502) target = $region40
      $region39: #{_lambda_.32} parent=35 // pred_region
        _
      $region40: #{_lambda_.32} parent=35 // pred_fallthru
        _
    $region36: #{_lambda_.32} parent=5 // pred_fallthru
      _
    %p505 = scmp.le.s32.totalorder 2, %s10
    // Predicated region
    $region41: #{_lambda_.32} parent=5 // pred_check
      %p506 = pneg %p505
    $region42: #{_lambda_.32} parent=5 // pred_check_branch
      %508 = sbr.rel (%p506) target = $region44
    $region43: #{_lambda_.32} parent=5 // pred_region
      %s509 = ssub.s32 %s10, 2
      // Predicated region
      $region45: #{_lambda_.32} parent=43 // pred_check
        %p510 = pneg %p143
      $region46: #{_lambda_.32} parent=43 // pred_check_branch
        %512 = sbr.rel (%p510) target = $region48
      $region47: #{_lambda_.32} parent=43 // pred_region
        %p513 = scmp.lt.s32.totalorder %s16, 1
        %s514 = scalar_select %p513, %s16, 1
        %s515 = smul.addr %s514, 4
        %s516 = scalar_lea.vmem %s4, %s515
      $region48: #{_lambda_.32} parent=43 // pred_fallthru
        _
    $region44: #{_lambda_.32} parent=5 // pred_fallthru
      _
  $region6: #{_lambda_.32} parent=0 // loop_footer
    %s14 = sadd.s32 1, %s10
  $region7: #{_lambda_.32} parent=0 // loop_footer_branch
    %9 = sbr.rel target = $region3
  $region8: #{_lambda_.32} parent=0 // loop_exit
    _

// kernel: _lambda_.41
$region0: #{_lambda_.41}
  #allocation0 [shape = 'u32[]', space=smem, size = 0x4, offset = 0x4, fixed_abs, tag = 'smem constant byte address 0x4 - core index']
  #allocation1 [shape = 'u32[72,128]{1,0:T(1,128)}', space=vmem, size = 0x9000, scoped, tag = 'internal scratch']
  %s0 = inlined_call_operand.vmem [shape: bf16[16,32], index: 0, kind: input, shape index: {}]
  %s1 = inlined_call_operand.vmem [shape: f32[1,32], index: 1, kind: input, shape index: {}]
  %s2 = inlined_call_operand.vmem [shape: f32[1,32], index: 2, kind: input, shape index: {}]
  %s3 = inlined_call_operand.vmem [shape: bf16[16,32], index: 3, kind: output, shape index: {}]
  %s4 = sld [smem:[#allocation0]]
  $region22: #{_lambda_.41} parent=0
    _
  %s6 = ssub.s32 1, %s4
  %s7 = scalar_select 0, %s6, %s4
  // Predicated region
  $region2: #{_lambda_.41} parent=0 // pred_check
    _
  $region3: #{_lambda_.41} parent=0 // pred_check_branch
    %9 = sbr.rel (0) target = $region5
  $region4: #{_lambda_.41} parent=0 // pred_region
    _
  $region5: #{_lambda_.41} parent=0 // pred_fallthru
    _
  // Predicated region
  $region6: #{_lambda_.41} parent=0 // pred_check
    _
  $region7: #{_lambda_.41} parent=0 // pred_check_branch
    %11 = sbr.rel (0) target = $region9
  $region8: #{_lambda_.41} parent=0 // pred_region
    _
  $region9: #{_lambda_.41} parent=0 // pred_fallthru
    _
  // Predicated region
  $region10: #{_lambda_.41} parent=0 // pred_check
    _
  $region11: #{_lambda_.41} parent=0 // pred_check_branch
    %13 = sbr.rel (0) target = $region13
  $region12: #{_lambda_.41} parent=0 // pred_region
    _
  $region13: #{_lambda_.41} parent=0 // pred_fallthru
    _
  %v14 = vld [vmem:[%s0] sm:$0xf]
  %v15 = vld [vmem:[%s0 + $0x4] sm:$0xf]
  %v16 = vunpack.c.l.bf16 %v14
  %v17 = vunpack.c.l.bf16 %v15
  %vm18 = vcmask 261120
  %v19 = vsel %vm18, %v16, 0.0
  %20 = vadd.xlane.f32.xlu0 %v19
  %v21 = vpop.xlane.xlu0 %20
  %v22 = vsel %vm18, %v17, 0.0
  %23 = vadd.xlane.f32.xlu0 %v22
  %v24 = vpop.xlane.xlu0 %23
  %v25 = vrcp.pop 32.0
  %v26 = vmul.f32 32.0, %v25
  %v27 = vsub.f32 1.0, %v26
  %v28 = vmul.f32 %v25, %v27
  %v29 = vadd.f32 %v25, %v28
  %vm30 = vweird.f32 %v25
  %v31 = vsel %vm30, %v25, %v29
  %v32 = vmul.f32 %v21, %v31
  %v33 = vmul.f32 %v24, %v31
  %v34 = vsub.f32 %v16, %v32
  %v35 = vsub.f32 %v17, %v33
  %v36 = vmul.f32 %v34, %v34
  %v37 = vmul.f32 %v35, %v35
  %v38 = vsel %vm18, %v36, 0.0
  %39 = vadd.xlane.f32.xlu0 %v38
  %v40 = vpop.xlane.xlu0 %39
  %v41 = vsel %vm18, %v37, 0.0
  %42 = vadd.xlane.f32.xlu0 %v41
  %v43 = vpop.xlane.xlu0 %42
  %v44 = vmul.f32 %v40, %v31
  %v45 = vmul.f32 %v43, %v31
  %v46 = vadd.f32 %v44, 1e-05
  %v47 = vadd.f32 %v45, 1e-05
  %v48 = vrsqrt.pop %v46
  %v49 = vmul.f32 %v48, %v46
  %v50 = vmul.f32 %v49, %v48
  %v51 = vmul.f32 0.5, %v50
  %v52 = vsub.f32 1.5, %v51
  %v53 = vmul.f32 %v48, %v52
  %vm54 = vweird.f32 %v46
  %vm55 = vweird.f32 %v48
  %vm56 = vmor %vm54, %vm55
  %v57 = vsel %vm56, %v48, %v53
  %v58 = vrsqrt.pop %v47
  %v59 = vmul.f32 %v58, %v47
  %v60 = vmul.f32 %v59, %v58
  %v61 = vmul.f32 0.5, %v60
  %v62 = vsub.f32 1.5, %v61
  %v63 = vmul.f32 %v58, %v62
  %vm64 = vweird.f32 %v47
  %vm65 = vweird.f32 %v58
  %vm66 = vmor %vm64, %vm65
  %v67 = vsel %vm66, %v58, %v63
  %v68 = vmul.f32 %v34, %v57
  %v69 = vmul.f32 %v35, %v67
  %v70 = vld [vmem:[%s1] sm:$0x1]
  %v72 = vperm.slane %v70, 0
  %v74 = vmul.f32 %v68, %v72
  %v75 = vmul.f32 %v69, %v72
  %v76 = vld [vmem:[%s2] sm:$0x1]
  %v78 = vperm.slane %v76, 0
  %v80 = vadd.f32 %v74, %v78
  %v81 = vadd.f32 %v75, %v78
  %v82 = vpack.c.bf16 %v80, %v80
  %v83 = vpack.c.bf16 %v81, %v81
  %vm84 = vcmask 257024
  %85 = vst.msk [vmem:[%s3] sm:$0xf] %vm84, %v82
  %86 = vst.msk [vmem:[%s3 + $0x4] sm:$0xf] %vm84, %v83
  // Predicated region
  $region14: #{_lambda_.41} parent=0 // pred_check
    _
  $region15: #{_lambda_.41} parent=0 // pred_check_branch
    %88 = sbr.rel (0) target = $region17
  $region16: #{_lambda_.41} parent=0 // pred_region
    _
  $region17: #{_lambda_.41} parent=0 // pred_fallthru
    _
  // Predicated region
  $region18: #{_lambda_.41} parent=0 // pred_check
    _
  $region19: #{_lambda_.41} parent=0 // pred_check_branch
    %90 = sbr.rel (0) target = $region21
  $region20: #{_lambda_.41} parent=0 // pred_region
    _
  $region21: #{_lambda_.41} parent=0 // pred_fallthru
    _

// kernel: _lambda_.35
$region0: #{_lambda_.35}
  #allocation0 [shape = 'u32[]', space=smem, size = 0x4, offset = 0x4, fixed_abs, tag = 'smem constant byte address 0x4 - core index']
  #allocation1 [shape = 'u32[72,128]{1,0:T(1,128)}', space=vmem, size = 0x9000, scoped, tag = 'internal scratch']
  #allocation2 [shape = 'f32[16,128]{1,0:T(8,128)}', space=vmem, size = 0x2000, scoped, tag = 'scratch operand']
  %s0 = inlined_call_operand.vmem [shape: bf16[16,64], index: 0, kind: input, shape index: {}]
  %s1 = inlined_call_operand.vmem [shape: bf16[64,128], index: 1, kind: input, shape index: {}]
  %s2 = inlined_call_operand.vmem [shape: f32[1,128], index: 2, kind: input, shape index: {}]
  %s3 = inlined_call_operand.vmem [shape: bf16[16,32], index: 3, kind: input, shape index: {}]
  %s4 = inlined_call_operand.vmem [shape: f32[1,32], index: 4, kind: input, shape index: {}]
  %s5 = inlined_call_operand.vmem [shape: f32[1,32], index: 5, kind: input, shape index: {}]
  %s6 = inlined_call_operand.vmem [shape: bf16[16,32], index: 6, kind: output, shape index: {}]
  %s7 = sld [smem:[#allocation0]]
  $region42: #{_lambda_.35} parent=0
    _
  %s9 = ssub.s32 1, %s7
  %s10 = scalar_select 0, %s9, %s7
  // Predicated region
  $region2: #{_lambda_.35} parent=0 // pred_check
    _
  $region3: #{_lambda_.35} parent=0 // pred_check_branch
    %12 = sbr.rel (0) target = $region5
  $region4: #{_lambda_.35} parent=0 // pred_region
    _
  $region5: #{_lambda_.35} parent=0 // pred_fallthru
    _
  // Predicated region
  $region6: #{_lambda_.35} parent=0 // pred_check
    _
  $region7: #{_lambda_.35} parent=0 // pred_check_branch
    %14 = sbr.rel (0) target = $region9
  $region8: #{_lambda_.35} parent=0 // pred_region
    _
  $region9: #{_lambda_.35} parent=0 // pred_fallthru
    _
  // Predicated region
  $region10: #{_lambda_.35} parent=0 // pred_check
    _
  $region11: #{_lambda_.35} parent=0 // pred_check_branch
    %16 = sbr.rel (0) target = $region13
  $region12: #{_lambda_.35} parent=0 // pred_region
    _
  $region13: #{_lambda_.35} parent=0 // pred_fallthru
    _
  // Predicated region
  $region14: #{_lambda_.35} parent=0 // pred_check
    _
  $region15: #{_lambda_.35} parent=0 // pred_check_branch
    %18 = sbr.rel (0) target = $region17
  $region16: #{_lambda_.35} parent=0 // pred_region
    _
  $region17: #{_lambda_.35} parent=0 // pred_fallthru
    _
  // Predicated region
  $region18: #{_lambda_.35} parent=0 // pred_check
    _
  $region19: #{_lambda_.35} parent=0 // pred_check_branch
    %20 = sbr.rel (0) target = $region21
  $region20: #{_lambda_.35} parent=0 // pred_region
    _
  $region21: #{_lambda_.35} parent=0 // pred_fallthru
    _
  // Predicated region
  $region22: #{_lambda_.35} parent=0 // pred_check
    _
  $region23: #{_lambda_.35} parent=0 // pred_check_branch
    %22 = sbr.rel (0) target = $region25
  $region24: #{_lambda_.35} parent=0 // pred_region
    _
  $region25: #{_lambda_.35} parent=0 // pred_fallthru
    _
  %p24 = scmp.eq.s32.totalorder 0, 0
  // Predicated region
  $region26: #{_lambda_.35} parent=0 // pred_check
    %p25 = pneg %p24
  $region27: #{_lambda_.35} parent=0 // pred_check_branch
    %27 = sbr.rel (%p25) target = $region29
  $region28: #{_lambda_.35} parent=0 // pred_region
    %28 = vst [vmem:[#allocation2] sm:$0xff] 0.0
    %29 = vst [vmem:[#allocation2 + $0x8] sm:$0xff] 0.0
  $region29: #{_lambda_.35} parent=0 // pred_fallthru
    _
  %v30 = vld [vmem:[#allocation2] sm:$0xff]
  %v31 = vld [vmem:[#allocation2 + $0x8] sm:$0xff]
  %v32 = vld [vmem:[%s0] sm:$0xf]
  %v33 = vld [vmem:[%s0 + $0x4] sm:$0xf]
  %v34 = vld [vmem:[%s1] sm:$0xf]
  %v35 = vld [vmem:[%s1 + $0x4] sm:$0xf]
  %v36 = vld [vmem:[%s1 + $0x8] sm:$0xf]
  %v37 = vld [vmem:[%s1 + $0xc] sm:$0xf]
  %v38 = vld [vmem:[%s1 + $0x10] sm:$0xf]
  %v39 = vld [vmem:[%s1 + $0x14] sm:$0xf]
  %v40 = vld [vmem:[%s1 + $0x18] sm:$0xf]
  %v41 = vld [vmem:[%s1 + $0x1c] sm:$0xf]
  %v44 = vunpack.c.l.b16 %v32
  %v45 = vunpack.c.l.b16 %v33
  %v46 = vpack.c.b16 %v45, %v44
  %v55 = vunpack.c.l.b16 %v34
  %v56 = vunpack.c.l.b16 %v35
  %v57 = vunpack.c.l.b16 %v36
  %v58 = vunpack.c.l.b16 %v37
  %v59 = vunpack.c.l.b16 %v38
  %v60 = vunpack.c.l.b16 %v39
  %v61 = vunpack.c.l.b16 %v40
  %v62 = vunpack.c.l.b16 %v41
  %v63 = vpack.c.b16 %v56, %v55
  %v64 = vpack.c.b16 %v58, %v57
  %v65 = vpack.c.b16 %v60, %v59
  %v66 = vpack.c.b16 %v62, %v61
  %vm71 = vcmask 523264
  %v73 = vsel %vm71, %v46, 0
  %75 = vmatpush.bf16.msra.mxu0 0
  %76 = vmatpush.bf16.msra.mxu0 0
  %77 = vmatpush.bf16.msra.mxu0 0
  %78 = vmatpush.bf16.msra.mxu0 0
  %79 = vmatpush.bf16.msra.mxu0 %v66
  %80 = vmatpush.bf16.msra.mxu0 %v65
  %81 = vmatpush.bf16.msra.mxu0 %v64
  %82 = vmatpush.bf16.msra.mxu0 %v63
  %83 = vmatmul.bf16.gmra.mxu0 %v73
  %v84 = vpop.f32.mrf.mxu0
  %v85 = vadd.f32 0.0, %v84
  %v86 = vpop.f32.mrf.mxu0
  %v87 = vadd.f32 0.0, %v86
  %88 = vdwg.mxu0
  %v89 = vadd.f32 %v30, %v85
  %v90 = vadd.f32 %v31, %v87
  %91 = vst [vmem:[#allocation2] sm:$0xff] %v89
  %92 = vst [vmem:[#allocation2 + $0x8] sm:$0xff] %v90
  // Predicated region
  $region30: #{_lambda_.35} parent=0 // pred_check
    %p93 = pneg %p24
  $region31: #{_lambda_.35} parent=0 // pred_check_branch
    %95 = sbr.rel (%p93) target = $region33
  $region32: #{_lambda_.35} parent=0 // pred_region
    %v96 = vld [vmem:[#allocation2] sm:$0xff]
    %v97 = vld [vmem:[#allocation2 + $0x8] sm:$0xff]
    %v98 = vld [vmem:[%s2] sm:$0x1]
    %v100 = vperm.slane %v98, 0
    %v102 = vadd.f32 %v96, %v100
    %v103 = vadd.f32 %v97, %v100
    %v104 = vld [vmem:[%s3] sm:$0xf]
    %v105 = vld [vmem:[%s3 + $0x4] sm:$0xf]
    %v106 = vunpack.c.l.bf16 %v104
    %v107 = vunpack.c.l.bf16 %v105
    %v108 = vadd.f32 %v102, %v106
    %v109 = vadd.f32 %v103, %v107
    %vm110 = vcmask 261120
    %v111 = vsel %vm110, %v108, 0.0
    %112 = vadd.xlane.f32.xlu0 %v111
    %v113 = vpop.xlane.xlu0 %112
    %v114 = vsel %vm110, %v109, 0.0
    %115 = vadd.xlane.f32.xlu0 %v114
    %v116 = vpop.xlane.xlu0 %115
    %v117 = vrcp.pop 32.0
    %v118 = vmul.f32 32.0, %v117
    %v119 = vsub.f32 1.0, %v118
    %v120 = vmul.f32 %v117, %v119
    %v121 = vadd.f32 %v117, %v120
    %vm122 = vweird.f32 %v117
    %v123 = vsel %vm122, %v117, %v121
    %v124 = vmul.f32 %v113, %v123
    %v125 = vmul.f32 %v116, %v123
    %v126 = vsub.f32 %v108, %v124
    %v127 = vsub.f32 %v109, %v125
    %v128 = vmul.f32 %v126, %v126
    %v129 = vmul.f32 %v127, %v127
    %v130 = vsel %vm110, %v128, 0.0
    %131 = vadd.xlane.f32.xlu0 %v130
    %v132 = vpop.xlane.xlu0 %131
    %v133 = vsel %vm110, %v129, 0.0
    %134 = vadd.xlane.f32.xlu0 %v133
    %v135 = vpop.xlane.xlu0 %134
    %v136 = vmul.f32 %v132, %v123
    %v137 = vmul.f32 %v135, %v123
    %v138 = vadd.f32 %v136, 1e-05
    %v139 = vadd.f32 %v137, 1e-05
    %v140 = vrsqrt.pop %v138
    %v141 = vmul.f32 %v140, %v138
    %v142 = vmul.f32 %v141, %v140
    %v143 = vmul.f32 0.5, %v142
    %v144 = vsub.f32 1.5, %v143
    %v145 = vmul.f32 %v140, %v144
    %vm146 = vweird.f32 %v138
    %vm147 = vweird.f32 %v140
    %vm148 = vmor %vm146, %vm147
    %v149 = vsel %vm148, %v140, %v145
    %v150 = vrsqrt.pop %v139
    %v151 = vmul.f32 %v150, %v139
    %v152 = vmul.f32 %v151, %v150
    %v153 = vmul.f32 0.5, %v152
    %v154 = vsub.f32 1.5, %v153
    %v155 = vmul.f32 %v150, %v154
    %vm156 = vweird.f32 %v139
    %vm157 = vweird.f32 %v150
    %vm158 = vmor %vm156, %vm157
    %v159 = vsel %vm158, %v150, %v155
    %v160 = vmul.f32 %v126, %v149
    %v161 = vmul.f32 %v127, %v159
    %v162 = vld [vmem:[%s4] sm:$0x1]
    %v164 = vperm.slane %v162, 0
    %v166 = vmul.f32 %v160, %v164
    %v167 = vmul.f32 %v161, %v164
    %v168 = vld [vmem:[%s5] sm:$0x1]
    %v170 = vperm.slane %v168, 0
    %v172 = vadd.f32 %v166, %v170
    %v173 = vadd.f32 %v167, %v170
    %v174 = vpack.c.bf16 %v172, %v172
    %v175 = vpack.c.bf16 %v173, %v173
    %vm176 = vcmask 257024
    %177 = vst.msk [vmem:[%s6] sm:$0xf] %vm176, %v174
    %178 = vst.msk [vmem:[%s6 + $0x4] sm:$0xf] %vm176, %v175
  $region33: #{_lambda_.35} parent=0 // pred_fallthru
    _
  // Predicated region
  $region34: #{_lambda_.35} parent=0 // pred_check
    _
  $region35: #{_lambda_.35} parent=0 // pred_check_branch
    %180 = sbr.rel (0) target = $region37
  $region36: #{_lambda_.35} parent=0 // pred_region
    _
  $region37: #{_lambda_.35} parent=0 // pred_fallthru
    _
  // Predicated region
  $region38: #{_lambda_.35} parent=0 // pred_check
    _
  $region39: #{_lambda_.35} parent=0 // pred_check_branch
    %182 = sbr.rel (0) target = $region41
  $region40: #{_lambda_.35} parent=0 // pred_region
    _
  $region41: #{_lambda_.35} parent=0 // pred_fallthru
    _

// kernel: _lambda_.61
$region0: #{_lambda_.61}
  #allocation0 [shape = 'u32[]', space=smem, size = 0x4, offset = 0x4, fixed_abs, tag = 'smem constant byte address 0x4 - core index']
  #allocation1 [shape = 'u32[72,128]{1,0:T(1,128)}', space=vmem, size = 0x9000, scoped, tag = 'internal scratch']
  #allocation2 [shape = 'f32[16,128]{1,0:T(8,128)}', space=vmem, size = 0x2000, scoped, tag = 'scratch operand']
  %s0 = inlined_call_operand.vmem [shape: bf16[16,32], index: 0, kind: input, shape index: {}]
  %s1 = inlined_call_operand.vmem [shape: bf16[32,128], index: 1, kind: input, shape index: {}]
  %s2 = inlined_call_operand.vmem [shape: f32[1,128], index: 2, kind: input, shape index: {}]
  %s3 = inlined_call_operand.vmem [shape: f32[16,128], index: 3, kind: output, shape index: {}]
  %s4 = sld [smem:[#allocation0]]
  $region30: #{_lambda_.61} parent=0
    _
  %s6 = ssub.s32 1, %s4
  %s7 = scalar_select 0, %s6, %s4
  // Predicated region
  $region2: #{_lambda_.61} parent=0 // pred_check
    _
  $region3: #{_lambda_.61} parent=0 // pred_check_branch
    %9 = sbr.rel (0) target = $region5
  $region4: #{_lambda_.61} parent=0 // pred_region
    _
  $region5: #{_lambda_.61} parent=0 // pred_fallthru
    _
  // Predicated region
  $region6: #{_lambda_.61} parent=0 // pred_check
    _
  $region7: #{_lambda_.61} parent=0 // pred_check_branch
    %11 = sbr.rel (0) target = $region9
  $region8: #{_lambda_.61} parent=0 // pred_region
    _
  $region9: #{_lambda_.61} parent=0 // pred_fallthru
    _
  // Predicated region
  $region10: #{_lambda_.61} parent=0 // pred_check
    _
  $region11: #{_lambda_.61} parent=0 // pred_check_branch
    %13 = sbr.rel (0) target = $region13
  $region12: #{_lambda_.61} parent=0 // pred_region
    _
  $region13: #{_lambda_.61} parent=0 // pred_fallthru
    _
  %p15 = scmp.eq.s32.totalorder 0, 0
  // Predicated region
  $region14: #{_lambda_.61} parent=0 // pred_check
    %p16 = pneg %p15
  $region15: #{_lambda_.61} parent=0 // pred_check_branch
    %18 = sbr.rel (%p16) target = $region17
  $region16: #{_lambda_.61} parent=0 // pred_region
    %19 = vst [vmem:[#allocation2] sm:$0xff] 0.0
    %20 = vst [vmem:[#allocation2 + $0x8] sm:$0xff] 0.0
  $region17: #{_lambda_.61} parent=0 // pred_fallthru
    _
  %v21 = vld [vmem:[#allocation2] sm:$0xff]
  %v22 = vld [vmem:[#allocation2 + $0x8] sm:$0xff]
  %v23 = vld [vmem:[%s0] sm:$0xf]
  %v24 = vld [vmem:[%s0 + $0x4] sm:$0xf]
  %v25 = vld [vmem:[%s1] sm:$0xf]
  %v26 = vld [vmem:[%s1 + $0x4] sm:$0xf]
  %v27 = vld [vmem:[%s1 + $0x8] sm:$0xf]
  %v28 = vld [vmem:[%s1 + $0xc] sm:$0xf]
  %v31 = vunpack.c.l.b16 %v23
  %v32 = vunpack.c.l.b16 %v24
  %v33 = vpack.c.b16 %v32, %v31
  %v38 = vunpack.c.l.b16 %v25
  %v39 = vunpack.c.l.b16 %v26
  %v40 = vunpack.c.l.b16 %v27
  %v41 = vunpack.c.l.b16 %v28
  %v42 = vpack.c.b16 %v39, %v38
  %v43 = vpack.c.b16 %v41, %v40
  %vm46 = vcmask 261120
  %v48 = vsel %vm46, %v33, 0
  %50 = vmatpush.bf16.msra.mxu0 0
  %51 = vmatpush.bf16.msra.mxu0 0
  %52 = vmatpush.bf16.msra.mxu0 0
  %53 = vmatpush.bf16.msra.mxu0 0
  %54 = vmatpush.bf16.msra.mxu0 0
  %55 = vmatpush.bf16.msra.mxu0 0
  %56 = vmatpush.bf16.msra.mxu0 %v43
  %57 = vmatpush.bf16.msra.mxu0 %v42
  %58 = vmatmul.bf16.gmra.mxu0 %v48
  %v59 = vpop.f32.mrf.mxu0
  %v60 = vadd.f32 0.0, %v59
  %v61 = vpop.f32.mrf.mxu0
  %v62 = vadd.f32 0.0, %v61
  %63 = vdwg.mxu0
  %v64 = vadd.f32 %v21, %v60
  %v65 = vadd.f32 %v22, %v62
  %66 = vst [vmem:[#allocation2] sm:$0xff] %v64
  %67 = vst [vmem:[#allocation2 + $0x8] sm:$0xff] %v65
  // Predicated region
  $region18: #{_lambda_.61} parent=0 // pred_check
    %p68 = pneg %p15
  $region19: #{_lambda_.61} parent=0 // pred_check_branch
    %70 = sbr.rel (%p68) target = $region21
  $region20: #{_lambda_.61} parent=0 // pred_region
    %v71 = vld [vmem:[#allocation2] sm:$0xff]
    %v72 = vld [vmem:[#allocation2 + $0x8] sm:$0xff]
    %v73 = vld [vmem:[%s2] sm:$0x1]
    %v75 = vperm.slane %v73, 0
    %v77 = vadd.f32 %v71, %v75
    %v78 = vadd.f32 %v72, %v75
    %79 = vst [vmem:[%s3] sm:$0xff] %v77
    %80 = vst [vmem:[%s3 + $0x8] sm:$0xff] %v78
  $region21: #{_lambda_.61} parent=0 // pred_fallthru
    _
  // Predicated region
  $region22: #{_lambda_.61} parent=0 // pred_check
    _
  $region23: #{_lambda_.61} parent=0 // pred_check_branch
    %82 = sbr.rel (0) target = $region25
  $region24: #{_lambda_.61} parent=0 // pred_region
    _
  $region25: #{_lambda_.61} parent=0 // pred_fallthru
    _
  // Predicated region
  $region26: #{_lambda_.61} parent=0 // pred_check
    _
  $region27: #{_lambda_.61} parent=0 // pred_check_branch
    %84 = sbr.rel (0) target = $region29
  $region28: #{_lambda_.61} parent=0 // pred_region
    _
  $region29: #{_lambda_.61} parent=0 // pred_fallthru
    _

// kernel: _lambda_.47
$region0: #{_lambda_.47}
  #allocation0 [shape = 'u32[]', space=smem, size = 0x4, offset = 0x4, fixed_abs, tag = 'smem constant byte address 0x4 - core index']
  #allocation1 [shape = 'u32[72,128]{1,0:T(1,128)}', space=vmem, size = 0x9000, scoped, tag = 'internal scratch']
  %s0 = inlined_call_operand.vmem [shape: bf16[2,6,32], index: 0, kind: input, shape index: {}]
  %s1 = inlined_call_operand.vmem [shape: bf16[2,8,32], index: 1, kind: input, shape index: {}]
  %s2 = inlined_call_operand.vmem [shape: bf16[2,8,32], index: 2, kind: input, shape index: {}]
  %s3 = inlined_call_operand.vmem [shape: bf16[2,6,32], index: 3, kind: output, shape index: {}]
  %s4 = sld [smem:[#allocation0]]
  $region45: #{_lambda_.47} parent=0
    _
  %s6 = ssub.s32 1, %s4
  %s7 = scalar_select 0, %s6, %s4
  loop: start=0, step=1, limit=4
  $region2: #{_lambda_.47} parent=0 // loop_pre_header
    _
  $region3: #{_lambda_.47} parent=0 // loop_header
    %s9 = sphi 0, %s13
    %p10 = scmp.ge.s32.totalorder %s9, 4
    %s19 = sphi 0, %s21
    %s22 = sphi 0, %s19
    %s23 = sphi 0, %s22
    %s39 = sphi 0, %s23
    %s45 = sphi 0, %s47
    %s48 = sphi 0, %s45
    %s49 = sphi 0, %s48
    %s65 = sphi 0, %s49
    %s71 = sphi 0, %s73
    %s74 = sphi 0, %s71
    %s75 = sphi 0, %s74
    %s91 = sphi 0, %s75
    %s97 = sphi 0, %s99
    %s100 = sphi 0, %s97
    %s101 = sphi 0, %s100
    %s117 = sphi 0, %s101
  $region4: #{_lambda_.47} parent=0 // loop_header_branch
    %12 = sbr.rel (%p10) target = $region8
  $region5: #{_lambda_.47} parent=0 // loop_body
    %s14 = ssub.s32 %s9, 1
    %s15 = ssub.s32 %s9, 2
    %s16 = sadd.s32 %s9, 1
    %s17 = ssub.s32 %s9, %s16
    %p18 = scmp.eq.s32.totalorder %s17, 0
    %s20 = sadd.s32 %s19, 1
    %s21 = scalar_select %p18, %s19, %s20
    %p24 = pneg %p18
    %p25 = scmp.eq.s32.totalorder %s9, 1
    %p26 = por %p24, %p25
    %p27 = scmp.ne.s32.totalorder %s19, %s22
    %p28 = scmp.eq.s32.totalorder %s9, 0
    %p29 = por %p27, %p28
    %p30 = scmp.ne.s32.totalorder %s19, %s22
    %p31 = scmp.eq.s32.totalorder %s14, 1
    %p32 = por %p30, %p31
    %p33 = scmp.ne.s32.totalorder %s22, %s23
    %p34 = scmp.eq.s32.totalorder %s14, 0
    %p35 = por %p33, %p34
    %p36 = scmp.ne.s32.totalorder %s22, %s23
    %p37 = scmp.eq.s32.totalorder %s15, 1
    %p38 = por %p36, %p37
    %p40 = scmp.ne.s32.totalorder %s23, %s39
    %p41 = scmp.eq.s32.totalorder %s15, 0
    %p42 = por %p40, %p41
    %s43 = ssub.s32 %s9, %s16
    %p44 = scmp.eq.s32.totalorder %s43, 0
    %s46 = sadd.s32 %s45, 1
    %s47 = scalar_select %p44, %s45, %s46
    %p50 = pneg %p44
    %p51 = scmp.eq.s32.totalorder %s9, 1
    %p52 = por %p50, %p51
    %p53 = scmp.ne.s32.totalorder %s45, %s48
    %p54 = scmp.eq.s32.totalorder %s9, 0
    %p55 = por %p53, %p54
    %p56 = scmp.ne.s32.totalorder %s45, %s48
    %p57 = scmp.eq.s32.totalorder %s14, 1
    %p58 = por %p56, %p57
    %p59 = scmp.ne.s32.totalorder %s48, %s49
    %p60 = scmp.eq.s32.totalorder %s14, 0
    %p61 = por %p59, %p60
    %p62 = scmp.ne.s32.totalorder %s48, %s49
    %p63 = scmp.eq.s32.totalorder %s15, 1
    %p64 = por %p62, %p63
    %p66 = scmp.ne.s32.totalorder %s49, %s65
    %p67 = scmp.eq.s32.totalorder %s15, 0
    %p68 = por %p66, %p67
    %s69 = ssub.s32 %s9, %s16
    %p70 = scmp.eq.s32.totalorder %s69, 0
    %s72 = sadd.s32 %s71, 1
    %s73 = scalar_select %p70, %s71, %s72
    %p76 = pneg %p70
    %p77 = scmp.eq.s32.totalorder %s9, 1
    %p78 = por %p76, %p77
    %p79 = scmp.ne.s32.totalorder %s71, %s74
    %p80 = scmp.eq.s32.totalorder %s9, 0
    %p81 = por %p79, %p80
    %p82 = scmp.ne.s32.totalorder %s71, %s74
    %p83 = scmp.eq.s32.totalorder %s14, 1
    %p84 = por %p82, %p83
    %p85 = scmp.ne.s32.totalorder %s74, %s75
    %p86 = scmp.eq.s32.totalorder %s14, 0
    %p87 = por %p85, %p86
    %p88 = scmp.ne.s32.totalorder %s74, %s75
    %p89 = scmp.eq.s32.totalorder %s15, 1
    %p90 = por %p88, %p89
    %p92 = scmp.ne.s32.totalorder %s75, %s91
    %p93 = scmp.eq.s32.totalorder %s15, 0
    %p94 = por %p92, %p93
    %s95 = ssub.s32 %s9, %s16
    %p96 = scmp.eq.s32.totalorder %s95, 0
    %s98 = sadd.s32 %s97, 1
    %s99 = scalar_select %p96, %s97, %s98
    %p102 = pneg %p96
    %p103 = scmp.eq.s32.totalorder %s9, 1
    %p104 = por %p102, %p103
    %p105 = scmp.ne.s32.totalorder %s97, %s100
    %p106 = scmp.eq.s32.totalorder %s9, 0
    %p107 = por %p105, %p106
    %p108 = scmp.ne.s32.totalorder %s97, %s100
    %p109 = scmp.eq.s32.totalorder %s14, 1
    %p110 = por %p108, %p109
    %p111 = scmp.ne.s32.totalorder %s100, %s101
    %p112 = scmp.eq.s32.totalorder %s14, 0
    %p113 = por %p111, %p112
    %p114 = scmp.ne.s32.totalorder %s100, %s101
    %p115 = scmp.eq.s32.totalorder %s15, 1
    %p116 = por %p114, %p115
    %p118 = scmp.ne.s32.totalorder %s101, %s117
    %p119 = scmp.eq.s32.totalorder %s15, 0
    %p120 = por %p118, %p119
    %p121 = scmp.le.s32.totalorder 1, %s9
    %p122 = scmp.lt.s32.totalorder %s9, 3
    %p123 = pnand %p121, %p122
    %p124 = pneg %p123
    // Predicated region
    $region9: #{_lambda_.47} parent=5 // pred_check
      _
    $region10: #{_lambda_.47} parent=5 // pred_check_branch
      %126 = sbr.rel (%p123) target = $region12
    $region11: #{_lambda_.47} parent=5 // pred_region
      %s127 = ssub.s32 %s9, 1
    $region12: #{_lambda_.47} parent=5 // pred_fallthru
      _
    %p128 = scmp.lt.s32.totalorder %s9, 2
    // Predicated region
    $region13: #{_lambda_.47} parent=5 // pred_check
      %p129 = pneg %p128
    $region14: #{_lambda_.47} parent=5 // pred_check_branch
      %131 = sbr.rel (%p129) target = $region16
    $region15: #{_lambda_.47} parent=5 // pred_region
      // Predicated region
      $region17: #{_lambda_.47} parent=15 // pred_check
        %p132 = pneg %p29
      $region18: #{_lambda_.47} parent=15 // pred_check_branch
        %134 = sbr.rel (%p132) target = $region20
      $region19: #{_lambda_.47} parent=15 // pred_region
        %p135 = scmp.lt.s32.totalorder %s9, 1
        %s136 = scalar_select %p135, %s9, 1
        %s137 = smul.addr %s136, 4
        %s138 = scalar_lea.vmem %s0, %s137
      $region20: #{_lambda_.47} parent=15 // pred_fallthru
        _
      // Predicated region
      $region21: #{_lambda_.47} parent=15 // pred_check
        %p139 = pneg %p55
      $region22: #{_lambda_.47} parent=15 // pred_check_branch
        %141 = sbr.rel (%p139) target = $region24
      $region23: #{_lambda_.47} parent=15 // pred_region
        %p142 = scmp.lt.s32.totalorder %s9, 1
        %s143 = scalar_select %p142, %s9, 1
        %s144 = smul.addr %s143, 4
        %s145 = scalar_lea.vmem %s1, %s144
      $region24: #{_lambda_.47} parent=15 // pred_fallthru
        _
      // Predicated region
      $region25: #{_lambda_.47} parent=15 // pred_check
        %p146 = pneg %p81
      $region26: #{_lambda_.47} parent=15 // pred_check_branch
        %148 = sbr.rel (%p146) target = $region28
      $region27: #{_lambda_.47} parent=15 // pred_region
        %p149 = scmp.lt.s32.totalorder %s9, 1
        %s150 = scalar_select %p149, %s9, 1
        %s151 = smul.addr %s150, 4
        %s152 = scalar_lea.vmem %s2, %s151
      $region28: #{_lambda_.47} parent=15 // pred_fallthru
        _
    $region16: #{_lambda_.47} parent=5 // pred_fallthru
      _
    %p153 = scmp.le.s32.totalorder 1, %s9
    %p154 = scmp.lt.s32.totalorder %s9, 3
    %p155 = pnand %p153, %p154
    %p156 = pneg %p155
    // Predicated region
    $region29: #{_lambda_.47} parent=5 // pred_check
      _
    $region30: #{_lambda_.47} parent=5 // pred_check_branch
      %158 = sbr.rel (%p155) target = $region32
    $region31: #{_lambda_.47} parent=5 // pred_region
      %s159 = ssub.s32 %s9, 1
      %p160 = scmp.lt.s32.totalorder %s14, 1
      %s161 = scalar_select %p160, %s14, 1
      %s162 = smul.addr %s161, 4
      %s163 = scalar_lea.vmem %s0, %s162
      %p164 = pneg %p35
      %p165 = pneg %p32
      %p166 = scmp.lt.s32.totalorder %s14, 1
      %s167 = scalar_select %p166, %s14, 1
      %s168 = smul.addr %s167, 4
      %s169 = scalar_lea.vmem %s1, %s168
      %p170 = pneg %p61
      %p171 = pneg %p58
      %p172 = scmp.lt.s32.totalorder %s14, 1
      %s173 = scalar_select %p172, %s14, 1
      %s174 = smul.addr %s173, 4
      %s175 = scalar_lea.vmem %s2, %s174
      %p176 = pneg %p87
      %p177 = pneg %p84
      %p178 = pneg %p113
      %p179 = pneg %p110
      %p180 = scmp.lt.s32.totalorder %s14, 1
      %s181 = scalar_select %p180, %s14, 1
      %s182 = smul.addr %s181, 4
      %s183 = scalar_lea.vmem %s3, %s182
      %p184 = scmp.lt.s32.totalorder %s14, 1
      %s185 = scalar_select %p184, %s14, 1
      %s186 = smul.addr %s185, 4
      %s187 = scalar_lea.vmem %s0, %s186
      %p188 = scmp.lt.s32.totalorder %s14, 1
      %s189 = scalar_select %p188, %s14, 1
      %s190 = smul.addr %s189, 4
      %s191 = scalar_lea.vmem %s1, %s190
      %p192 = scmp.lt.s32.totalorder %s14, 1
      %s193 = scalar_select %p192, %s14, 1
      %s194 = smul.addr %s193, 4
      %s195 = scalar_lea.vmem %s2, %s194
      %p196 = scmp.lt.s32.totalorder %s14, 1
      %s197 = scalar_select %p196, %s14, 1
      %s198 = smul.addr %s197, 4
      %s199 = scalar_lea.vmem %s3, %s198
      %v201 = vld [vmem:[%s187] sm:$0x7]
      %v202 = vld [vmem:[%s191] sm:$0xf]
      %v203 = vld [vmem:[%s195] sm:$0xf]
      %vm204 = vcmask 64512
      %v206 = vsel %vm204, %v201, 0
      %v209 = vsel %vm204, %v202, 0
      %211 = vmatpush.bf16.xpose.msra.mxu0 0
      %212 = vmatpush.bf16.xpose.msra.mxu0 0
      %213 = vmatpush.bf16.xpose.msra.mxu0 0
      %214 = vmatpush.bf16.xpose.msra.mxu0 0
      %215 = vmatpush.bf16.xpose.msra.mxu0 0
      %216 = vmatpush.bf16.xpose.msra.mxu0 0
      %217 = vmatpush.bf16.xpose.msra.mxu0 0
      %218 = vmatpush.bf16.xpose.msra.mxu0 %v209
      %219 = vmatmul.bf16.gmra.mxu0 %v206
      %v220 = vpop.f32.mrf.mxu0
      %v221 = vadd.f32 0.0, %v220
      %v222 = vpop.f32.mrf.mxu0
      %223 = vdwg.mxu0
      %vm224 = vcmask 62464
      %v225 = vsel %vm224, %v221, -inf
      %226 = vmax.xlane.f32.xlu0 %v225
      %v227 = vpop.xlane.xlu0 %226
      %v228 = vsub.f32 %v221, %v227
      %v229 = vmul.f32 %v228, 1.442695
      %v230 = vpow.pop %v229
      %v231 = vsel %vm224, %v230, 0.0
      %232 = vadd.xlane.f32.xlu0 %v231
      %v233 = vpop.xlane.xlu0 %232
      %v234 = vpack.c.bf16 %v230, %v230
      %v236 = vsel %vm204, %v234, 0
      %vm238 = vcmask 1043456
      %v240 = vsel %vm238, %v203, 0
      %242 = vmatpush.bf16.msra.mxu0 0
      %243 = vmatpush.bf16.msra.mxu0 0
      %244 = vmatpush.bf16.msra.mxu0 0
      %245 = vmatpush.bf16.msra.mxu0 0
      %246 = vmatpush.bf16.msra.mxu0 0
      %247 = vmatpush.bf16.msra.mxu0 0
      %248 = vmatpush.bf16.msra.mxu0 0
      %249 = vmatpush.bf16.msra.mxu0 %v240
      %250 = vmatmul.bf16.gmra.mxu0 %v236
      %v251 = vpop.f32.mrf.mxu0
      %v252 = vadd.f32 0.0, %v251
      %v253 = vpop.f32.mrf.mxu0
      %254 = vdwg.mxu0
      %v255 = vrcp.pop %v233
      %v256 = vmul.f32 %v252, %v255
      %v258 = vunpack.c.l.b16 %v201
      %v259 = vpack.c.b16 %v258, %v258
      %260 = vrot.lane.b32.xlu0 %v259, 120
      %v261 = vpop.permute.xlu0 %260
      %v263 = vunpack.c.l.b16 %v202
      %v264 = vpack.c.b16 %v263, %v263
      %265 = vrot.lane.b32.xlu0 %v264, 120
      %v266 = vpop.permute.xlu0 %265
      %v268 = vsel %vm204, %v261, 0
      %v271 = vsel %vm204, %v266, 0
      %273 = vmatpush.bf16.xpose.msra.mxu0 0
      %274 = vmatpush.bf16.xpose.msra.mxu0 0
      %275 = vmatpush.bf16.xpose.msra.mxu0 0
      %276 = vmatpush.bf16.xpose.msra.mxu0 0
      %277 = vmatpush.bf16.xpose.msra.mxu0 0
      %278 = vmatpush.bf16.xpose.msra.mxu0 0
      %279 = vmatpush.bf16.xpose.msra.mxu0 0
      %280 = vmatpush.bf16.xpose.msra.mxu0 %v271
      %281 = vmatmul.bf16.gmra.mxu0 %v268
      %v282 = vpop.f32.mrf.mxu0
      %v283 = vadd.f32 0.0, %v282
      %v284 = vpop.f32.mrf.mxu0
      %285 = vdwg.mxu0
      %v286 = vsel %vm224, %v283, -inf
      %287 = vmax.xlane.f32.xlu0 %v286
      %v288 = vpop.xlane.xlu0 %287
      %v289 = vsub.f32 %v283, %v288
      %v290 = vmul.f32 %v289, 1.442695
      %v291 = vpow.pop %v290
      %v292 = vsel %vm224, %v291, 0.0
      %293 = vadd.xlane.f32.xlu0 %v292
      %v294 = vpop.xlane.xlu0 %293
      %v295 = vpack.c.bf16 %v291, %v291
      %v297 = vunpack.c.l.b16 %v203
      %v298 = vpack.c.b16 %v297, %v297
      %299 = vrot.lane.b32.xlu0 %v298, 120
      %v300 = vpop.permute.xlu0 %299
      %v302 = vsel %vm204, %v295, 0
      %v305 = vsel %vm238, %v300, 0
      %307 = vmatpush.bf16.msra.mxu0 0
      %308 = vmatpush.bf16.msra.mxu0 0
      %309 = vmatpush.bf16.msra.mxu0 0
      %310 = vmatpush.bf16.msra.mxu0 0
      %311 = vmatpush.bf16.msra.mxu0 0
      %312 = vmatpush.bf16.msra.mxu0 0
      %313 = vmatpush.bf16.msra.mxu0 0
      %314 = vmatpush.bf16.msra.mxu0 %v305
      %315 = vmatmul.bf16.gmra.mxu0 %v302
      %v316 = vpop.f32.mrf.mxu0
      %v317 = vadd.f32 0.0, %v316
      %v318 = vpop.f32.mrf.mxu0
      %319 = vdwg.mxu0
      %v320 = vrcp.pop %v294
      %v321 = vmul.f32 %v317, %v320
      %322 = vrot.lane.b32.xlu0 %v259, 112
      %v323 = vpop.permute.xlu0 %322
      %324 = vrot.lane.b32.xlu0 %v264, 112
      %v325 = vpop.permute.xlu0 %324
      %v327 = vsel %vm204, %v323, 0
      %v330 = vsel %vm204, %v325, 0
      %332 = vmatpush.bf16.xpose.msra.mxu0 0
      %333 = vmatpush.bf16.xpose.msra.mxu0 0
      %334 = vmatpush.bf16.xpose.msra.mxu0 0
      %335 = vmatpush.bf16.xpose.msra.mxu0 0
      %336 = vmatpush.bf16.xpose.msra.mxu0 0
      %337 = vmatpush.bf16.xpose.msra.mxu0 0
      %338 = vmatpush.bf16.xpose.msra.mxu0 0
      %339 = vmatpush.bf16.xpose.msra.mxu0 %v330
      %340 = vmatmul.bf16.gmra.mxu0 %v327
      %v341 = vpop.f32.mrf.mxu0
      %v342 = vadd.f32 0.0, %v341
      %v343 = vpop.f32.mrf.mxu0
      %344 = vdwg.mxu0
      %v345 = vsel %vm224, %v342, -inf
      %346 = vmax.xlane.f32.xlu0 %v345
      %v347 = vpop.xlane.xlu0 %346
      %v348 = vsub.f32 %v342, %v347
      %v349 = vmul.f32 %v348, 1.442695
      %v350 = vpow.pop %v349
      %v351 = vsel %vm224, %v350, 0.0
      %352 = vadd.xlane.f32.xlu0 %v351
      %v353 = vpop.xlane.xlu0 %352
      %v354 = vpack.c.bf16 %v350, %v350
      %355 = vrot.lane.b32.xlu0 %v298, 112
      %v356 = vpop.permute.xlu0 %355
      %v358 = vsel %vm204, %v354, 0
      %v361 = vsel %vm238, %v356, 0
      %363 = vmatpush.bf16.msra.mxu0 0
      %364 = vmatpush.bf16.msra.mxu0 0
      %365 = vmatpush.bf16.msra.mxu0 0
      %366 = vmatpush.bf16.msra.mxu0 0
      %367 = vmatpush.bf16.msra.mxu0 0
      %368 = vmatpush.bf16.msra.mxu0 0
      %369 = vmatpush.bf16.msra.mxu0 0
      %370 = vmatpush.bf16.msra.mxu0 %v361
      %371 = vmatmul.bf16.gmra.mxu0 %v358
      %v372 = vpop.f32.mrf.mxu0
      %v373 = vadd.f32 0.0, %v372
      %v374 = vpop.f32.mrf.mxu0
      %375 = vdwg.mxu0
      %v376 = vrcp.pop %v353
      %v377 = vmul.f32 %v373, %v376
      %378 = vrot.lane.b32.xlu0 %v259, 104
      %v379 = vpop.permute.xlu0 %378
      %380 = vrot.lane.b32.xlu0 %v264, 104
      %v381 = vpop.permute.xlu0 %380
      %v383 = vsel %vm204, %v379, 0
      %v386 = vsel %vm204, %v381, 0
      %388 = vmatpush.bf16.xpose.msra.mxu0 0
      %389 = vmatpush.bf16.xpose.msra.mxu0 0
      %390 = vmatpush.bf16.xpose.msra.mxu0 0
      %391 = vmatpush.bf16.xpose.msra.mxu0 0
      %392 = vmatpush.bf16.xpose.msra.mxu0 0
      %393 = vmatpush.bf16.xpose.msra.mxu0 0
      %394 = vmatpush.bf16.xpose.msra.mxu0 0
      %395 = vmatpush.bf16.xpose.msra.mxu0 %v386
      %396 = vmatmul.bf16.gmra.mxu0 %v383
      %v397 = vpop.f32.mrf.mxu0
      %v398 = vadd.f32 0.0, %v397
      %v399 = vpop.f32.mrf.mxu0
      %400 = vdwg.mxu0
      %v401 = vsel %vm224, %v398, -inf
      %402 = vmax.xlane.f32.xlu0 %v401
      %v403 = vpop.xlane.xlu0 %402
      %v404 = vsub.f32 %v398, %v403
      %v405 = vmul.f32 %v404, 1.442695
      %v406 = vpow.pop %v405
      %v407 = vsel %vm224, %v406, 0.0
      %408 = vadd.xlane.f32.xlu0 %v407
      %v409 = vpop.xlane.xlu0 %408
      %v410 = vpack.c.bf16 %v406, %v406
      %411 = vrot.lane.b32.xlu0 %v298, 104
      %v412 = vpop.permute.xlu0 %411
      %v414 = vsel %vm204, %v410, 0
      %v417 = vsel %vm238, %v412, 0
      %419 = vmatpush.bf16.msra.mxu0 0
      %420 = vmatpush.bf16.msra.mxu0 0
      %421 = vmatpush.bf16.msra.mxu0 0
      %422 = vmatpush.bf16.msra.mxu0 0
      %423 = vmatpush.bf16.msra.mxu0 0
      %424 = vmatpush.bf16.msra.mxu0 0
      %425 = vmatpush.bf16.msra.mxu0 0
      %426 = vmatpush.bf16.msra.mxu0 %v417
      %427 = vmatmul.bf16.gmra.mxu0 %v414
      %v428 = vpop.f32.mrf.mxu0
      %v429 = vadd.f32 0.0, %v428
      %v430 = vpop.f32.mrf.mxu0
      %431 = vdwg.mxu0
      %v432 = vrcp.pop %v409
      %v433 = vmul.f32 %v429, %v432
      %435 = vrot.lane.b32.xlu0 %v321, 8
      %v436 = vpop.permute.xlu0 %435
      %439 = vrot.lane.b32.xlu0 %v377, 16
      %v440 = vpop.permute.xlu0 %439
      %443 = vrot.lane.b32.xlu0 %v433, 24
      %v444 = vpop.permute.xlu0 %443
      %v446 = vsel %vm204, %v256, %v436
      %vm447 = vcmask 130048
      %v448 = vsel %vm447, %v446, %v440
      %vm449 = vcmask 195584
      %v450 = vsel %vm449, %v448, %v444
      %v451 = vpack.c.bf16 %v450, %v450
      %vm452 = vcmask 256000
      %453 = vst.msk [vmem:[%s199] sm:$0x7] %vm452, %v451
      %p454 = scmp.lt.s32.totalorder %s14, 1
      %s455 = scalar_select %p454, %s14, 1
      %s456 = smul.addr %s455, 4
      %s457 = scalar_lea.vmem %s3, %s456
      // Predicated region
      $region33: #{_lambda_.47} parent=31 // pred_check
        %p458 = pneg %p110
      $region34: #{_lambda_.47} parent=31 // pred_check_branch
        %460 = sbr.rel (%p458) target = $region36
      $region35: #{_lambda_.47} parent=31 // pred_region
        _
      $region36: #{_lambda_.47} parent=31 // pred_fallthru
        _
    $region32: #{_lambda_.47} parent=5 // pred_fallthru
      _
    %p461 = scmp.le.s32.totalorder 2, %s9
    // Predicated region
    $region37: #{_lambda_.47} parent=5 // pred_check
      %p462 = pneg %p461
    $region38: #{_lambda_.47} parent=5 // pred_check_branch
      %464 = sbr.rel (%p462) target = $region40
    $region39: #{_lambda_.47} parent=5 // pred_region
      %s465 = ssub.s32 %s9, 2
      // Predicated region
      $region41: #{_lambda_.47} parent=39 // pred_check
        %p466 = pneg %p116
      $region42: #{_lambda_.47} parent=39 // pred_check_branch
        %468 = sbr.rel (%p466) target = $region44
      $region43: #{_lambda_.47} parent=39 // pred_region
        %p469 = scmp.lt.s32.totalorder %s15, 1
        %s470 = scalar_select %p469, %s15, 1
        %s471 = smul.addr %s470, 4
        %s472 = scalar_lea.vmem %s3, %s471
      $region44: #{_lambda_.47} parent=39 // pred_fallthru
        _
    $region40: #{_lambda_.47} parent=5 // pred_fallthru
      _
  $region6: #{_lambda_.47} parent=0 // loop_footer
    %s13 = sadd.s32 1, %s9
  $region7: #{_lambda_.47} parent=0 // loop_footer_branch
    %8 = sbr.rel target = $region3
  $region8: #{_lambda_.47} parent=0 // loop_exit
    _

</llo_original>
